<compile_context>
chip_gen: v7x
topology: tpu7x:2x2x1
jax: 0.10.0
libtpu: 0.0.40
codegen_flags: <defaults>
</compile_context>

<pallas_src>
import functools

import jax
import jax.numpy as jnp
import numpy as np
from jax.experimental import pallas as pl
from jax.experimental.pallas import tpu as pltpu

_COMPUTE_DTYPE = jnp.bfloat16
_VMEM_LIMIT = 48 * 1024 * 1024   # fits v7x's 64 MiB physical VMEM; fine on v5e/v6e
_BATCH_ALIGN = 16                # bf16 sublane tile -> unmasked per-step stores
_TARGET_ROWS = 256               # ~rows (t_tile * Bp) per grid step


def _round_up(x, m):
    return (x + m - 1) // m * m


# ---------------------------------------------------------------------------
# Pallas kernels
# ---------------------------------------------------------------------------
def _blstm_kernel(*refs, n_parts, batch, t_tile, gh):
    """One time-tile of a fused (fwd + bwd) LSTM layer.

    Ref layout (P = n_parts input-feature blocks per direction):
      x refs     [2*P] : [rows, D_p]    bf16  (direction-major: fwd parts, then bwd parts)
      mask       [1]   : [rows, 1]      f32   1.0 where t < length[b]
      w_ih refs  [2*P] : [D_p, 4*GH]    bf16  gate-padded (i|f|g|o, each GH lanes)
      w_hh refs  [2]   : [GH, 4*GH]     bf16  (fwd, bwd)
      bias refs  [2]   : [batch, 4*GH]  f32   (speaker term already folded in)
      out        [1]   : [rows, 2*GH]   bf16  fwd -> cols [0,GH), bwd -> cols [GH,2GH)
      scratch          : per-direction h/c carry [batch, GH] f32 (persist across tiles)
                         and staged input projection gx [rows, 4*GH] f32.
    rows = t_tile * batch; row = t*batch + b (local time within each direction's stream).
    """
    P = n_parts
    x_refs = refs[:2 * P]
    mask_ref = refs[2 * P]
    w_refs = refs[2 * P + 1:4 * P + 1]
    whh_refs = refs[4 * P + 1:4 * P + 3]
    b_refs = refs[4 * P + 3:4 * P + 5]
    out_ref = refs[4 * P + 5]
    base = 4 * P + 6
    h_scs = [refs[base + 0], refs[base + 1]]
    c_scs = [refs[base + 2], refs[base + 3]]
    gx_scs = [refs[base + 4], refs[base + 5]]

    @pl.when(pl.program_id(0) == 0)
    def _():
        for ref in (*h_scs, *c_scs):
            ref[...] = jnp.zeros_like(ref)

    # Batched (whole-tile) input projection per direction: big-M MXU matmuls off the
    # serial path, staged into VMEM scratch so per-step reads are bounded loads,
    # not implicit spills of a huge live value.
    for d in range(2):
        acc = jnp.dot(x_refs[d * P][...], w_refs[d * P][...],
                      preferred_element_type=jnp.float32)
        for p in range(1, P):
            acc = acc + jnp.dot(x_refs[d * P + p][...], w_refs[d * P + p][...],
                                preferred_element_type=jnp.float32)
        gx_scs[d][...] = acc

    # Loop-invariant operands hoisted out of the recurrence.
    whh = (whh_refs[0][...], whh_refs[1][...])
    bias = (b_refs[0][...], b_refs[1][...])
    mask = mask_ref[...]

    h = [h_scs[0][...], h_scs[1][...]]
    c = [c_scs[0][...], c_scs[1][...]]

    # Static, fully unrolled recurrence (t_tile is small); the fwd/bwd chains are data
    # independent so their per-step W_hh matmuls overlap in the MXU pipeline.
    # TODO(synk): hold W_hh resident via pltpu.matmul_push_rhs/acc_lhs/pop instead of
    # re-streaming it every step; switch to lax.fori_loop(..., unroll=k) for large t_tile.
    for t in range(t_tile):
        r = t * batch                      # static, multiple of 16
        m = mask[r:r + batch]
        for d in range(2):
            gates = (gx_scs[d][r:r + batch, :] + bias[d]
                     + jnp.dot(h[d].astype(whh[d].dtype), whh[d],
                               preferred_element_type=jnp.float32))
            i = jax.nn.sigmoid(gates[:, 0 * gh:1 * gh])
            f = jax.nn.sigmoid(gates[:, 1 * gh:2 * gh])
            g = jnp.tanh(gates[:, 2 * gh:3 * gh])
            o = jax.nn.sigmoid(gates[:, 3 * gh:4 * gh])
            c[d] = f * c[d] + i * g
            h[d] = o * jnp.tanh(c[d])
            # Tile-aligned, unmasked per-step store (r % 16 == 0, gh % 128 == 0).
            out_ref[r:r + batch, d * gh:(d + 1) * gh] = (h[d] * m).astype(out_ref.dtype)

    for d in range(2):
        h_scs[d][...] = h[d]
        c_scs[d][...] = c[d]


def _mel_kernel(xa_ref, xb_ref, wa_ref, wb_ref, b_ref, out_ref):
    acc = jnp.dot(xa_ref[...], wa_ref[...], preferred_element_type=jnp.float32)
    acc = acc + jnp.dot(xb_ref[...], wb_ref[...], preferred_element_type=jnp.float32)
    out_ref[...] = acc + b_ref[...]


# ---------------------------------------------------------------------------
# pallas_call wrappers
# ---------------------------------------------------------------------------
def _run_blstm_layer(x_parts, mask_flat, w_parts, w_hh, bias, *, batch, t_tile, gh):
    """x_parts[d][p] = (array [rows_total, >=cols], col_block, cols).

    Returns [rows_total, 2*gh] bf16 (fwd hidden in cols [0,gh), bwd in [gh,2gh)).
    """
    rows_total = x_parts[0][0][0].shape[0]
    rows = t_tile * batch
    n_tiles = rows_total // rows
    P = len(x_parts[0])

    x_arrays, x_specs = [], []
    for d in range(2):
        for arr, col_block, cols in x_parts[d]:
            x_arrays.append(arr)
            x_specs.append(pl.BlockSpec((rows, cols), lambda t, cb=col_block: (t, cb)))

    w_arrays, w_specs = [], []
    for d in range(2):
        for arr in w_parts[d]:
            w_arrays.append(arr)
            # Loop-invariant weights, full-array block.
            # TODO(synk): at production H mark these pipeline_mode=pl.Buffered(1) (or
            # tile K) so double-buffered weights don't blow v7x's 64 MiB VMEM.
            w_specs.append(pl.BlockSpec(arr.shape, lambda t: (0, 0)))

    fixed_arrays = [w_hh[0], w_hh[1], bias[0], bias[1]]
    fixed_specs = [pl.BlockSpec(a.shape, lambda t: (0, 0)) for a in fixed_arrays]

    kernel = functools.partial(_blstm_kernel, n_parts=P, batch=batch,
                               t_tile=t_tile, gh=gh)
    return pl.pallas_call(
        kernel,
        out_shape=jax.ShapeDtypeStruct((rows_total, 2 * gh), _COMPUTE_DTYPE),
        grid=(n_tiles,),
        in_specs=(x_specs
                  + [pl.BlockSpec((rows, 1), lambda t: (t, 0))]
                  + w_specs + fixed_specs),
        out_specs=pl.BlockSpec((rows, 2 * gh), lambda t: (t, 0)),
        scratch_shapes=[
            pltpu.VMEM((batch, gh), jnp.float32),        # h carry (fwd)
            pltpu.VMEM((batch, gh), jnp.float32),        # h carry (bwd)
            pltpu.VMEM((batch, gh), jnp.float32),        # c carry (fwd)
            pltpu.VMEM((batch, gh), jnp.float32),        # c carry (bwd)
            pltpu.VMEM((rows, 4 * gh), jnp.float32),     # staged gx (fwd)
            pltpu.VMEM((rows, 4 * gh), jnp.float32),     # staged gx (bwd)
        ],
        compiler_params=pltpu.CompilerParams(
            dimension_semantics=("arbitrary",),          # sequential time carry
            vmem_limit_bytes=_VMEM_LIMIT),
    )(*x_arrays, mask_flat, *w_arrays, *fixed_arrays)


def _run_mel_linear(y2, ry2, wa, wb, b, *, gh, r_tile):
    rows_total = y2.shape[0]
    melp = wa.shape[-1]
    return pl.pallas_call(
        _mel_kernel,
        out_shape=jax.ShapeDtypeStruct((rows_total, melp), jnp.float32),
        grid=(rows_total // r_tile,),
        in_specs=[pl.BlockSpec((r_tile, gh), lambda i: (i, 0)),   # h2_fwd (orig time)
                  pl.BlockSpec((r_tile, gh), lambda i: (i, 1)),   # h2_bwd (orig time)
                  pl.BlockSpec(wa.shape, lambda i: (0, 0)),
                  pl.BlockSpec(wb.shape, lambda i: (0, 0)),
                  pl.BlockSpec(b.shape, lambda i: (0, 0))],
        out_specs=pl.BlockSpec((r_tile, melp), lambda i: (i, 0)),
        compiler_params=pltpu.CompilerParams(
            dimension_semantics=("parallel",),
            vmem_limit_bytes=_VMEM_LIMIT),
    )(y2, ry2, wa, wb, b)


# ---------------------------------------------------------------------------
# Glue (plain JAX): valid-region reversal, tiling choices
# ---------------------------------------------------------------------------
def _reverse_valid_tm(x_tbd, lengths):
    """Time-major reversal of each sequence's valid region, zeros elsewhere."""
    T = x_tbd.shape[0]
    t_idx = jnp.arange(T)[:, None]                       # [T, 1]
    valid = t_idx < lengths[None, :]                     # [T, B]
    src = jnp.where(valid, lengths[None, :] - 1 - t_idx, 0)
    gathered = jnp.take_along_axis(
        x_tbd, jnp.broadcast_to(src[:, :, None], x_tbd.shape), axis=0)
    return jnp.where(valid[:, :, None], gathered, jnp.zeros_like(gathered))


def _pick_row_tile(rows_total, base, cap=1024):
    """Largest multiple of `base` that divides rows_total and is <= cap (mel tile)."""
    best = base
    k = 2
    while base * k <= cap:
        if rows_total % (base * k) == 0:
            best = base * k
        k += 1
    return best


# ---------------------------------------------------------------------------
# Forward pass
# ---------------------------------------------------------------------------
def nar_taco_decoder_forward(kparams, upsampling_output, masked_durations,
                             speaker_embeddings, *, target_rows=_TARGET_ROWS):
    cdt = _COMPUTE_DTYPE
    B, T, enc = upsampling_output.shape
    H, GH = kparams["H"], kparams["GH"]
    ENC_P, MEL, MELP = kparams["ENC_P"], kparams["MEL"], kparams["MELP"]
    lengths = jnp.sum(masked_durations, axis=1).astype(jnp.int32)        # [B]
    # TODO(synk): pad_packed_sequence trims T to max(lengths); assume max(lengths) == T.

    Bp = _round_up(B, _BATCH_ALIGN)
    t_tile = max(1, min(T, target_rows // Bp))
    T_pad = _round_up(T, t_tile)
    rows_total = T_pad * Bp

    lengths_p = jnp.pad(lengths, (0, Bp - B))
    mask_flat = ((jnp.arange(T_pad)[:, None] < lengths_p[None, :])
                 .astype(jnp.float32).reshape(rows_total, 1))            # [T_pad*Bp, 1]

    # Time-major, batch/feature-padded encoder stream; backward stream = reversed valid.
    x_f = jnp.transpose(upsampling_output, (1, 0, 2)).astype(cdt)        # [T, B, ENC]
    x_f = jnp.pad(x_f, ((0, T_pad - T), (0, Bp - B), (0, ENC_P - enc)))
    x_b = _reverse_valid_tm(x_f, lengths_p)
    x_f = x_f.reshape(rows_total, ENC_P)
    x_b = x_b.reshape(rows_total, ENC_P)

    spk = jnp.pad(speaker_embeddings, ((0, Bp - B), (0, 0))).astype(cdt)  # [Bp, SPK]

    # ---- BLSTM layer 1 (speaker embedding folded into a per-batch gate bias) ----
    l1 = kparams["layers"][0]
    bias1 = tuple(
        jnp.dot(spk, l1[d]["w_spk"], preferred_element_type=jnp.float32)
        + l1[d]["b"][None, :]
        for d in ("fwd", "bwd"))
    y1 = _run_blstm_layer(
        x_parts=[[(x_f, 0, ENC_P)], [(x_b, 0, ENC_P)]],
        mask_flat=mask_flat,
        w_parts=[[l1["fwd"]["w_enc"]], [l1["bwd"]["w_enc"]]],
        w_hh=(l1["fwd"]["w_hh"], l1["bwd"]["w_hh"]),
        bias=bias1, batch=Bp, t_tile=t_tile, gh=GH)       # [rows_total, 2*GH] bf16

    # Single XLA gather between layers; the layer-2 kernel assembles its forward /
    # reversed input streams directly from (y1, ry1) column blocks via BlockSpecs.
    ry1 = _reverse_valid_tm(y1.reshape(T_pad, Bp, 2 * GH),
                            lengths_p).reshape(rows_total, 2 * GH)

    # ---- BLSTM layer 2 (K-split input projection, no concat/stack materialized) ----
    l2 = kparams["layers"][1]
    bias2 = tuple(jnp.tile(l2[d]["b"][None, :], (Bp, 1)) for d in ("fwd", "bwd"))
    y2 = _run_blstm_layer(
        x_parts=[[(y1, 0, GH), (ry1, 1, GH)],      # fwd: h1_f(t)     | h1_b(t)
                 [(ry1, 0, GH), (y1, 1, GH)]],     # bwd: h1_f(rev t) | h1_b(rev t)
        mask_flat=mask_flat,
        w_parts=[[l2["fwd"]["w_a"], l2["fwd"]["w_b"]],
                 [l2["bwd"]["w_a"], l2["bwd"]["w_b"]]],
        w_hh=(l2["fwd"]["w_hh"], l2["bwd"]["w_hh"]),
        bias=bias2, batch=Bp, t_tile=t_tile, gh=GH)

    ry2 = _reverse_valid_tm(y2.reshape(T_pad, Bp, 2 * GH),
                            lengths_p).reshape(rows_total, 2 * GH)

    # ---- mel projection (K-split over fwd/bwd halves, lane-dense MELP output) ----
    mel = _run_mel_linear(y2, ry2, kparams["mel_wa"], kparams["mel_wb"],
                          kparams["mel_b"], gh=GH,
                          r_tile=_pick_row_tile(rows_total, t_tile * Bp))
    # TODO(synk): fold this slice + (T,B)->(B,T) transpose into the mel out_spec layout.
    mel = mel.reshape(T_pad, Bp, MELP)[:T, :B, :MEL]
    return jnp.transpose(mel, (1, 0, 2))                                  # [B, T, MEL]


# ---------------------------------------------------------------------------
# Parameters: torch-layout init + conversion to the kernel layout
# ---------------------------------------------------------------------------
def init_torch_params(key, input_size, lstm_size, mel_target_size):
    H = lstm_size
    k = 1.0 / np.sqrt(H)
    keys = iter(jax.random.split(key, 2 * 2 * 4 + 2))

    def uni(shape, scale):
        return jax.random.uniform(next(keys), shape, jnp.float32, -scale, scale)

    params = {"lstm": []}
    in_sizes = [input_size, 2 * H]
    for l in range(2):
        layer = {}
        for d in ("fwd", "bwd"):
            layer[d] = {"w_ih": uni((4 * H, in_sizes[l]), k),
                        "w_hh": uni((4 * H, H), k),
                        "b_ih": uni((4 * H,), k),
                        "b_hh": uni((4 * H,), k)}
        params["lstm"].append(layer)
    km = 1.0 / np.sqrt(2 * H)
    params["mel"] = {"w": uni((mel_target_size, 2 * H), km),
                     "b": uni((mel_target_size,), km)}
    return params


def prepare_kernel_params(tp, enc_size, spk_size, lstm_size, mel_size):
    H = lstm_size
    GH = _round_up(H, 128)
    ENC_P = _round_up(enc_size, 128)
    MELP = _round_up(mel_size, 128)
    cdt = _COMPUTE_DTYPE

    def gate_pad(a):  # [..., 4H] -> [..., 4GH] (each gate block padded to GH lanes)
        lead = a.shape[:-1]
        a4 = a.reshape(lead + (4, H))
        a4 = jnp.pad(a4, [(0, 0)] * (a4.ndim - 1) + [(0, GH - H)])
        return a4.reshape(lead + (4 * GH,))

    def pad_rows(a, rows):
        return jnp.pad(a, ((0, rows - a.shape[0]), (0, 0)))

    layers = []
    # Layer 1: split encoder / speaker input columns so the [B,T,ENC+SPK] concat is
    # never built; speaker term becomes a per-batch gate bias on the host.
    l0 = {}
    for d in ("fwd", "bwd"):
        dp = tp["lstm"][0][d]
        w_ih_t = gate_pad(dp["w_ih"].T)                                   # [ENC+SPK, 4GH]
        l0[d] = {"w_enc": pad_rows(w_ih_t[:enc_size], ENC_P).astype(cdt),
                 "w_spk": w_ih_t[enc_size:].astype(cdt),
                 "w_hh": pad_rows(gate_pad(dp["w_hh"].T), GH).astype(cdt),
                 "b": gate_pad(dp["b_ih"] + dp["b_hh"])}                  # f32
    layers.append(l0)

    # Layer 2: split the 2H input rows into the h_f / h_b halves and pad each to GH rows
    # (zero rows for the GH-H pad columns) so the padded layout flows end-to-end.
    l1 = {}
    for d in ("fwd", "bwd"):
        dp = tp["lstm"][1][d]
        w_ih_t = gate_pad(dp["w_ih"].T)                                   # [2H, 4GH]
        l1[d] = {"w_a": pad_rows(w_ih_t[:H], GH).astype(cdt),
                 "w_b": pad_rows(w_ih_t[H:], GH).astype(cdt),
                 "w_hh": pad_rows(gate_pad(dp["w_hh"].T), GH).astype(cdt),
                 "b": gate_pad(dp["b_ih"] + dp["b_hh"])}
    layers.append(l1)

    mel_w_t = jnp.pad(tp["mel"]["w"].T, ((0, 0), (0, MELP - mel_size)))   # [2H, MELP]
    mel_wa = pad_rows(mel_w_t[:H], GH).astype(cdt)
    mel_wb = pad_rows(mel_w_t[H:], GH).astype(cdt)
    mel_b = jnp.pad(tp["mel"]["b"], (0, MELP - mel_size))[None, :]        # [1, MELP] f32
    return {"layers": layers, "mel_wa": mel_wa, "mel_wb": mel_wb, "mel_b": mel_b,
            "H": H, "GH": GH, "ENC_P": ENC_P, "MEL": mel_size, "MELP": MELP}


# ---------------------------------------------------------------------------
# Pure-JAX reference (mirrors the bf16-operand / f32-accumulate choices)
# ---------------------------------------------------------------------------
def _ref_forward(tp, upsampling_output, masked_durations, speaker_embeddings):
    cdt = _COMPUTE_DTYPE
    B, T, _ = upsampling_output.shape
    lengths = jnp.sum(masked_durations, axis=1).astype(jnp.int32)
    spk_b = jnp.broadcast_to(speaker_embeddings[:, None, :],
                             (B, T, speaker_embeddings.shape[-1]))
    x = jnp.concatenate([upsampling_output, spk_b], -1)                   # [B, T, in]
    mask = (jnp.arange(T)[None, :] < lengths[:, None]).astype(jnp.float32)[:, :, None]

    def rev_valid(a):
        t_idx = jnp.arange(a.shape[1])[None, :]
        valid = t_idx < lengths[:, None]
        src = jnp.where(valid, lengths[:, None] - 1 - t_idx, 0)
        g = jnp.take_along_axis(a, jnp.broadcast_to(src[:, :, None], a.shape), axis=1)
        return jnp.where(valid[:, :, None], g, jnp.zeros_like(g))

    def run_dir(x_btd, dp):
        H = dp["w_hh"].shape[1]
        w_ih_t = dp["w_ih"].T.astype(cdt)
        w_hh_t = dp["w_hh"].T.astype(cdt)
        b = (dp["b_ih"] + dp["b_hh"])[None, :]
        x_tb = jnp.transpose(x_btd, (1, 0, 2)).astype(cdt)
        m_tb = jnp.transpose(mask, (1, 0, 2))

        def step(carry, inp):
            h, c = carry
            x_t, m_t = inp
            gates = (jnp.dot(x_t, w_ih_t, preferred_element_type=jnp.float32)
                     + jnp.dot(h.astype(cdt), w_hh_t,
                               preferred_element_type=jnp.float32) + b)
            i = jax.nn.sigmoid(gates[:, 0 * H:1 * H])
            f = jax.nn.sigmoid(gates[:, 1 * H:2 * H])
            g = jnp.tanh(gates[:, 2 * H:3 * H])
            o = jax.nn.sigmoid(gates[:, 3 * H:4 * H])
            c = f * c + i * g
            h = o * jnp.tanh(c)
            return (h, c), (h * m_t).astype(cdt)

        init = (jnp.zeros((B, H), jnp.float32), jnp.zeros((B, H), jnp.float32))
        _, hs = jax.lax.scan(step, init, (x_tb, m_tb))
        return jnp.transpose(hs, (1, 0, 2))                               # [B, T, H]

    h_in = x
    for layer in tp["lstm"]:
        h_f = run_dir(h_in, layer["fwd"])
        h_b = rev_valid(run_dir(rev_valid(h_in), layer["bwd"]))
        h_in = jnp.concatenate([h_f, h_b], -1)

    out = (jnp.dot(h_in.reshape(B * T, -1).astype(cdt),
                   tp["mel"]["w"].T.astype(cdt),
                   preferred_element_type=jnp.float32)
           + tp["mel"]["b"][None, :])
    return out.reshape(B, T, -1)


# ---------------------------------------------------------------------------
if __name__ == "__main__":
    B, T, ENC, SPK, H, MEL, N_ENC = 2, 8, 32, 16, 32, 24, 4
    INPUT_SIZE = ENC + SPK

    root = jax.random.PRNGKey(0)
    k_p, k_u, k_s = jax.random.split(root, 3)
    tparams = init_torch_params(k_p, INPUT_SIZE, H, MEL)
    kparams = prepare_kernel_params(tparams, ENC, SPK, H, MEL)

    upsampling_output = jax.random.normal(k_u, (B, T, ENC), jnp.float32)
    speaker_embeddings = jax.random.normal(k_s, (B, SPK), jnp.float32)
    # durations per encoder frame; lengths = row sums = [8, 6] (sorted, max == T)
    masked_durations = jnp.array([[2., 2., 2., 2.],
                                  [3., 2., 1., 0.]], jnp.float32)

    out = nar_taco_decoder_forward(kparams, upsampling_output, masked_durations,
                                   speaker_embeddings)
    out = jax.block_until_ready(out)

    ref = jax.block_until_ready(
        _ref_forward(tparams, upsampling_output, masked_durations,
                     speaker_embeddings))

    assert out.shape == (B, T, MEL), out.shape
    np.testing.assert_allclose(np.asarray(out, np.float32),
                               np.asarray(ref, np.float32),
                               rtol=5e-3, atol=5e-3)
    print("KERNEL_OK")
</pallas_src>

<mosaic_0001>
module attributes {stable_mosaic.version = 11 : i64} {
  func.func @_blstm_kernel(%arg0: i32, %arg1: memref<128x128xbf16, #tpu.memory_space<vmem>>, %arg2: memref<128x128xbf16, #tpu.memory_space<vmem>>, %arg3: memref<128x1xf32, #tpu.memory_space<vmem>>, %arg4: memref<128x512xbf16, #tpu.memory_space<vmem>>, %arg5: memref<128x512xbf16, #tpu.memory_space<vmem>>, %arg6: memref<128x512xbf16, #tpu.memory_space<vmem>>, %arg7: memref<128x512xbf16, #tpu.memory_space<vmem>>, %arg8: memref<16x512xf32, #tpu.memory_space<vmem>>, %arg9: memref<16x512xf32, #tpu.memory_space<vmem>>, %arg10: memref<128x256xbf16, #tpu.memory_space<vmem>>, %arg11: memref<16x128xf32, #tpu.memory_space<vmem>>, %arg12: memref<16x128xf32, #tpu.memory_space<vmem>>, %arg13: memref<16x128xf32, #tpu.memory_space<vmem>>, %arg14: memref<16x128xf32, #tpu.memory_space<vmem>>, %arg15: memref<128x512xf32, #tpu.memory_space<vmem>>, %arg16: memref<128x512xf32, #tpu.memory_space<vmem>>) attributes {dimension_semantics = [#tpu.dimension_semantics<arbitrary>], iteration_bounds = array<i64: 1>, scalar_prefetch = 0 : i64, scratch_operands = 6 : i64, tpu.core_type = #tpu.core_type<tc>, window_params = [{transform_indices = @transform_0, window_bounds = array<i64: 128, 128>}, {transform_indices = @transform_1, window_bounds = array<i64: 128, 128>}, {transform_indices = @transform_2, window_bounds = array<i64: 128, 1>}, {pipeline_mode = #tpu.pipeline_mode<synchronous>, transform_indices = @transform_3, window_bounds = array<i64: 128, 512>}, {pipeline_mode = #tpu.pipeline_mode<synchronous>, transform_indices = @transform_4, window_bounds = array<i64: 128, 512>}, {pipeline_mode = #tpu.pipeline_mode<synchronous>, transform_indices = @transform_5, window_bounds = array<i64: 128, 512>}, {pipeline_mode = #tpu.pipeline_mode<synchronous>, transform_indices = @transform_6, window_bounds = array<i64: 128, 512>}, {pipeline_mode = #tpu.pipeline_mode<synchronous>, transform_indices = @transform_7, window_bounds = array<i64: 16, 512>}, {pipeline_mode = #tpu.pipeline_mode<synchronous>, transform_indices = @transform_8, window_bounds = array<i64: 16, 512>}, {transform_indices = @transform_9, window_bounds = array<i64: 128, 256>}]} {
    %c0_i32 = arith.constant 0 : i32
    %0 = arith.cmpi eq, %arg0, %c0_i32 : i32
    %1 = arith.extui %0 : i1 to i32
    %c0_i32_0 = arith.constant 0 : i32
    %2 = arith.cmpi ne, %1, %c0_i32_0 : i32
    scf.if %2 {
      %cst_159 = arith.constant 0.000000e+00 : f32
      %576 = vector.broadcast %cst_159 : f32 to vector<16x128xf32>
      %c0_160 = arith.constant 0 : index
      %c0_161 = arith.constant 0 : index
      %577 = vector.load %arg11[%c0_160, %c0_161] : memref<16x128xf32, #tpu.memory_space<vmem>>, vector<16x128xf32>
      tpu.vector_store %arg11[%c0_160, %c0_161], %576 {strides = array<i32>} : memref<16x128xf32, #tpu.memory_space<vmem>>, vector<16x128xf32>,
      %cst_162 = arith.constant 0.000000e+00 : f32
      %578 = vector.broadcast %cst_162 : f32 to vector<16x128xf32>
      %c0_163 = arith.constant 0 : index
      %c0_164 = arith.constant 0 : index
      %579 = vector.load %arg12[%c0_163, %c0_164] : memref<16x128xf32, #tpu.memory_space<vmem>>, vector<16x128xf32>
      tpu.vector_store %arg12[%c0_163, %c0_164], %578 {strides = array<i32>} : memref<16x128xf32, #tpu.memory_space<vmem>>, vector<16x128xf32>,
      %cst_165 = arith.constant 0.000000e+00 : f32
      %580 = vector.broadcast %cst_165 : f32 to vector<16x128xf32>
      %c0_166 = arith.constant 0 : index
      %c0_167 = arith.constant 0 : index
      %581 = vector.load %arg13[%c0_166, %c0_167] : memref<16x128xf32, #tpu.memory_space<vmem>>, vector<16x128xf32>
      tpu.vector_store %arg13[%c0_166, %c0_167], %580 {strides = array<i32>} : memref<16x128xf32, #tpu.memory_space<vmem>>, vector<16x128xf32>,
      %cst_168 = arith.constant 0.000000e+00 : f32
      %582 = vector.broadcast %cst_168 : f32 to vector<16x128xf32>
      %c0_169 = arith.constant 0 : index
      %c0_170 = arith.constant 0 : index
      %583 = vector.load %arg14[%c0_169, %c0_170] : memref<16x128xf32, #tpu.memory_space<vmem>>, vector<16x128xf32>
      tpu.vector_store %arg14[%c0_169, %c0_170], %582 {strides = array<i32>} : memref<16x128xf32, #tpu.memory_space<vmem>>, vector<16x128xf32>,
    } else {
    }
    %c0 = arith.constant 0 : index
    %c0_1 = arith.constant 0 : index
    %3 = vector.load %arg1[%c0, %c0_1] : memref<128x128xbf16, #tpu.memory_space<vmem>>, vector<128x128xbf16>
    %c0_2 = arith.constant 0 : index
    %c0_3 = arith.constant 0 : index
    %4 = vector.load %arg4[%c0_2, %c0_3] : memref<128x512xbf16, #tpu.memory_space<vmem>>, vector<128x512xbf16>
    %cst = arith.constant dense<0.000000e+00> : vector<128x512xf32>
    %5 = tpu.matmul %3, %4, %cst {dimension_numbers = #tpu.dot_dimension_numbers<[1], [0], [0], [1], [0, 0, 1, 1], [], []>} : vector<128x128xbf16>, vector<128x512xbf16>, vector<128x512xf32> -> vector<128x512xf32>
    %c0_4 = arith.constant 0 : index
    %c0_5 = arith.constant 0 : index
    %6 = vector.load %arg15[%c0_4, %c0_5] : memref<128x512xf32, #tpu.memory_space<vmem>>, vector<128x512xf32>
    tpu.vector_store %arg15[%c0_4, %c0_5], %5 {strides = array<i32>} : memref<128x512xf32, #tpu.memory_space<vmem>>, vector<128x512xf32>,
    %c0_6 = arith.constant 0 : index
    %c0_7 = arith.constant 0 : index
    %7 = vector.load %arg2[%c0_6, %c0_7] : memref<128x128xbf16, #tpu.memory_space<vmem>>, vector<128x128xbf16>
    %c0_8 = arith.constant 0 : index
    %c0_9 = arith.constant 0 : index
    %8 = vector.load %arg5[%c0_8, %c0_9] : memref<128x512xbf16, #tpu.memory_space<vmem>>, vector<128x512xbf16>
    %cst_10 = arith.constant dense<0.000000e+00> : vector<128x512xf32>
    %9 = tpu.matmul %7, %8, %cst_10 {dimension_numbers = #tpu.dot_dimension_numbers<[1], [0], [0], [1], [0, 0, 1, 1], [], []>} : vector<128x128xbf16>, vector<128x512xbf16>, vector<128x512xf32> -> vector<128x512xf32>
    %c0_11 = arith.constant 0 : index
    %c0_12 = arith.constant 0 : index
    %10 = vector.load %arg16[%c0_11, %c0_12] : memref<128x512xf32, #tpu.memory_space<vmem>>, vector<128x512xf32>
    tpu.vector_store %arg16[%c0_11, %c0_12], %9 {strides = array<i32>} : memref<128x512xf32, #tpu.memory_space<vmem>>, vector<128x512xf32>,
    %c0_13 = arith.constant 0 : index
    %c0_14 = arith.constant 0 : index
    %11 = vector.load %arg6[%c0_13, %c0_14] : memref<128x512xbf16, #tpu.memory_space<vmem>>, vector<128x512xbf16>
    %c0_15 = arith.constant 0 : index
    %c0_16 = arith.constant 0 : index
    %12 = vector.load %arg7[%c0_15, %c0_16] : memref<128x512xbf16, #tpu.memory_space<vmem>>, vector<128x512xbf16>
    %c0_17 = arith.constant 0 : index
    %c0_18 = arith.constant 0 : index
    %13 = vector.load %arg8[%c0_17, %c0_18] : memref<16x512xf32, #tpu.memory_space<vmem>>, vector<16x512xf32>
    %c0_19 = arith.constant 0 : index
    %c0_20 = arith.constant 0 : index
    %14 = vector.load %arg9[%c0_19, %c0_20] : memref<16x512xf32, #tpu.memory_space<vmem>>, vector<16x512xf32>
    %c0_21 = arith.constant 0 : index
    %c0_22 = arith.constant 0 : index
    %15 = vector.load %arg3[%c0_21, %c0_22] : memref<128x1xf32, #tpu.memory_space<vmem>>, vector<128x1xf32>
    %c0_23 = arith.constant 0 : index
    %c0_24 = arith.constant 0 : index
    %16 = vector.load %arg11[%c0_23, %c0_24] : memref<16x128xf32, #tpu.memory_space<vmem>>, vector<16x128xf32>
    %c0_25 = arith.constant 0 : index
    %c0_26 = arith.constant 0 : index
    %17 = vector.load %arg12[%c0_25, %c0_26] : memref<16x128xf32, #tpu.memory_space<vmem>>, vector<16x128xf32>
    %c0_27 = arith.constant 0 : index
    %c0_28 = arith.constant 0 : index
    %18 = vector.load %arg13[%c0_27, %c0_28] : memref<16x128xf32, #tpu.memory_space<vmem>>, vector<16x128xf32>
    %c0_29 = arith.constant 0 : index
    %c0_30 = arith.constant 0 : index
    %19 = vector.load %arg14[%c0_29, %c0_30] : memref<16x128xf32, #tpu.memory_space<vmem>>, vector<16x128xf32>
    %20 = vector.extract_strided_slice %15 {offsets = [0, 0], sizes = [16, 1], strides = [1, 1]} : vector<128x1xf32> to vector<16x1xf32>
    %c0_31 = arith.constant 0 : index
    %c0_32 = arith.constant 0 : index
    %21 = vector.load %arg15[%c0_31, %c0_32] : memref<128x512xf32, #tpu.memory_space<vmem>>, vector<16x512xf32>
    %22 = arith.addf %21, %13 : vector<16x512xf32>
    %23 = arith.truncf %16 : vector<16x128xf32> to vector<16x128xbf16>
    %cst_33 = arith.constant dense<0.000000e+00> : vector<16x512xf32>
    %24 = tpu.matmul %23, %11, %cst_33 {dimension_numbers = #tpu.dot_dimension_numbers<[1], [0], [0], [1], [0, 0, 1, 1], [], []>} : vector<16x128xbf16>, vector<128x512xbf16>, vector<16x512xf32> -> vector<16x512xf32>
    %25 = arith.addf %22, %24 : vector<16x512xf32>
    %26 = vector.extract_strided_slice %25 {offsets = [0, 0], sizes = [16, 128], strides = [1, 1]} : vector<16x512xf32> to vector<16x128xf32>
    %27 = arith.negf %26 : vector<16x128xf32>
    %28 = math.exp %27 : vector<16x128xf32>
    %cst_34 = arith.constant 1.000000e+00 : f32
    %29 = vector.broadcast %cst_34 : f32 to vector<16x128xf32>
    %30 = arith.addf %29, %28 : vector<16x128xf32>
    %31 = arith.divf %29, %30 : vector<16x128xf32>
    %32 = vector.extract_strided_slice %25 {offsets = [0, 128], sizes = [16, 128], strides = [1, 1]} : vector<16x512xf32> to vector<16x128xf32>
    %33 = arith.negf %32 : vector<16x128xf32>
    %34 = math.exp %33 : vector<16x128xf32>
    %cst_35 = arith.constant 1.000000e+00 : f32
    %35 = vector.broadcast %cst_35 : f32 to vector<16x128xf32>
    %36 = arith.addf %35, %34 : vector<16x128xf32>
    %37 = arith.divf %35, %36 : vector<16x128xf32>
    %38 = vector.extract_strided_slice %25 {offsets = [0, 256], sizes = [16, 128], strides = [1, 1]} : vector<16x512xf32> to vector<16x128xf32>
    %39 = math.tanh %38 : vector<16x128xf32>
    %40 = vector.extract_strided_slice %25 {offsets = [0, 384], sizes = [16, 128], strides = [1, 1]} : vector<16x512xf32> to vector<16x128xf32>
    %41 = arith.negf %40 : vector<16x128xf32>
    %42 = math.exp %41 : vector<16x128xf32>
    %cst_36 = arith.constant 1.000000e+00 : f32
    %43 = vector.broadcast %cst_36 : f32 to vector<16x128xf32>
    %44 = arith.addf %43, %42 : vector<16x128xf32>
    %45 = arith.divf %43, %44 : vector<16x128xf32>
    %46 = arith.mulf %37, %18 : vector<16x128xf32>
    %47 = arith.mulf %31, %39 : vector<16x128xf32>
    %48 = arith.addf %46, %47 : vector<16x128xf32>
    %49 = math.tanh %48 : vector<16x128xf32>
    %50 = arith.mulf %45, %49 : vector<16x128xf32>
    %51 = vector.broadcast %20 : vector<16x1xf32> to vector<16x128xf32>
    %52 = arith.mulf %50, %51 : vector<16x128xf32>
    %53 = arith.truncf %52 : vector<16x128xf32> to vector<16x128xbf16>
    %c0_37 = arith.constant 0 : index
    %c0_38 = arith.constant 0 : index
    %54 = vector.load %arg10[%c0_37, %c0_38] : memref<128x256xbf16, #tpu.memory_space<vmem>>, vector<16x128xbf16>
    tpu.vector_store %arg10[%c0_37, %c0_38], %53 {strides = array<i32>} : memref<128x256xbf16, #tpu.memory_space<vmem>>, vector<16x128xbf16>,
    %c0_39 = arith.constant 0 : index
    %c0_40 = arith.constant 0 : index
    %55 = vector.load %arg16[%c0_39, %c0_40] : memref<128x512xf32, #tpu.memory_space<vmem>>, vector<16x512xf32>
    %56 = arith.addf %55, %14 : vector<16x512xf32>
    %57 = arith.truncf %17 : vector<16x128xf32> to vector<16x128xbf16>
    %cst_41 = arith.constant dense<0.000000e+00> : vector<16x512xf32>
    %58 = tpu.matmul %57, %12, %cst_41 {dimension_numbers = #tpu.dot_dimension_numbers<[1], [0], [0], [1], [0, 0, 1, 1], [], []>} : vector<16x128xbf16>, vector<128x512xbf16>, vector<16x512xf32> -> vector<16x512xf32>
    %59 = arith.addf %56, %58 : vector<16x512xf32>
    %60 = vector.extract_strided_slice %59 {offsets = [0, 0], sizes = [16, 128], strides = [1, 1]} : vector<16x512xf32> to vector<16x128xf32>
    %61 = arith.negf %60 : vector<16x128xf32>
    %62 = math.exp %61 : vector<16x128xf32>
    %cst_42 = arith.constant 1.000000e+00 : f32
    %63 = vector.broadcast %cst_42 : f32 to vector<16x128xf32>
    %64 = arith.addf %63, %62 : vector<16x128xf32>
    %65 = arith.divf %63, %64 : vector<16x128xf32>
    %66 = vector.extract_strided_slice %59 {offsets = [0, 128], sizes = [16, 128], strides = [1, 1]} : vector<16x512xf32> to vector<16x128xf32>
    %67 = arith.negf %66 : vector<16x128xf32>
    %68 = math.exp %67 : vector<16x128xf32>
    %cst_43 = arith.constant 1.000000e+00 : f32
    %69 = vector.broadcast %cst_43 : f32 to vector<16x128xf32>
    %70 = arith.addf %69, %68 : vector<16x128xf32>
    %71 = arith.divf %69, %70 : vector<16x128xf32>
    %72 = vector.extract_strided_slice %59 {offsets = [0, 256], sizes = [16, 128], strides = [1, 1]} : vector<16x512xf32> to vector<16x128xf32>
    %73 = math.tanh %72 : vector<16x128xf32>
    %74 = vector.extract_strided_slice %59 {offsets = [0, 384], sizes = [16, 128], strides = [1, 1]} : vector<16x512xf32> to vector<16x128xf32>
    %75 = arith.negf %74 : vector<16x128xf32>
    %76 = math.exp %75 : vector<16x128xf32>
    %cst_44 = arith.constant 1.000000e+00 : f32
    %77 = vector.broadcast %cst_44 : f32 to vector<16x128xf32>
    %78 = arith.addf %77, %76 : vector<16x128xf32>
    %79 = arith.divf %77, %78 : vector<16x128xf32>
    %80 = arith.mulf %71, %19 : vector<16x128xf32>
    %81 = arith.mulf %65, %73 : vector<16x128xf32>
    %82 = arith.addf %80, %81 : vector<16x128xf32>
    %83 = math.tanh %82 : vector<16x128xf32>
    %84 = arith.mulf %79, %83 : vector<16x128xf32>
    %85 = vector.broadcast %20 : vector<16x1xf32> to vector<16x128xf32>
    %86 = arith.mulf %84, %85 : vector<16x128xf32>
    %87 = arith.truncf %86 : vector<16x128xf32> to vector<16x128xbf16>
    %c0_45 = arith.constant 0 : index
    %c128 = arith.constant 128 : index
    %88 = vector.load %arg10[%c0_45, %c128] : memref<128x256xbf16, #tpu.memory_space<vmem>>, vector<16x128xbf16>
    tpu.vector_store %arg10[%c0_45, %c128], %87 {strides = array<i32>} : memref<128x256xbf16, #tpu.memory_space<vmem>>, vector<16x128xbf16>,
    %89 = vector.extract_strided_slice %15 {offsets = [16, 0], sizes = [16, 1], strides = [1, 1]} : vector<128x1xf32> to vector<16x1xf32>
    %c16 = arith.constant 16 : index
    %c0_46 = arith.constant 0 : index
    %90 = vector.load %arg15[%c16, %c0_46] : memref<128x512xf32, #tpu.memory_space<vmem>>, vector<16x512xf32>
    %91 = arith.addf %90, %13 : vector<16x512xf32>
    %92 = arith.truncf %50 : vector<16x128xf32> to vector<16x128xbf16>
    %cst_47 = arith.constant dense<0.000000e+00> : vector<16x512xf32>
    %93 = tpu.matmul %92, %11, %cst_47 {dimension_numbers = #tpu.dot_dimension_numbers<[1], [0], [0], [1], [0, 0, 1, 1], [], []>} : vector<16x128xbf16>, vector<128x512xbf16>, vector<16x512xf32> -> vector<16x512xf32>
    %94 = arith.addf %91, %93 : vector<16x512xf32>
    %95 = vector.extract_strided_slice %94 {offsets = [0, 0], sizes = [16, 128], strides = [1, 1]} : vector<16x512xf32> to vector<16x128xf32>
    %96 = arith.negf %95 : vector<16x128xf32>
    %97 = math.exp %96 : vector<16x128xf32>
    %cst_48 = arith.constant 1.000000e+00 : f32
    %98 = vector.broadcast %cst_48 : f32 to vector<16x128xf32>
    %99 = arith.addf %98, %97 : vector<16x128xf32>
    %100 = arith.divf %98, %99 : vector<16x128xf32>
    %101 = vector.extract_strided_slice %94 {offsets = [0, 128], sizes = [16, 128], strides = [1, 1]} : vector<16x512xf32> to vector<16x128xf32>
    %102 = arith.negf %101 : vector<16x128xf32>
    %103 = math.exp %102 : vector<16x128xf32>
    %cst_49 = arith.constant 1.000000e+00 : f32
    %104 = vector.broadcast %cst_49 : f32 to vector<16x128xf32>
    %105 = arith.addf %104, %103 : vector<16x128xf32>
    %106 = arith.divf %104, %105 : vector<16x128xf32>
    %107 = vector.extract_strided_slice %94 {offsets = [0, 256], sizes = [16, 128], strides = [1, 1]} : vector<16x512xf32> to vector<16x128xf32>
    %108 = math.tanh %107 : vector<16x128xf32>
    %109 = vector.extract_strided_slice %94 {offsets = [0, 384], sizes = [16, 128], strides = [1, 1]} : vector<16x512xf32> to vector<16x128xf32>
    %110 = arith.negf %109 : vector<16x128xf32>
    %111 = math.exp %110 : vector<16x128xf32>
    %cst_50 = arith.constant 1.000000e+00 : f32
    %112 = vector.broadcast %cst_50 : f32 to vector<16x128xf32>
    %113 = arith.addf %112, %111 : vector<16x128xf32>
    %114 = arith.divf %112, %113 : vector<16x128xf32>
    %115 = arith.mulf %106, %48 : vector<16x128xf32>
    %116 = arith.mulf %100, %108 : vector<16x128xf32>
    %117 = arith.addf %115, %116 : vector<16x128xf32>
    %118 = math.tanh %117 : vector<16x128xf32>
    %119 = arith.mulf %114, %118 : vector<16x128xf32>
    %120 = vector.broadcast %89 : vector<16x1xf32> to vector<16x128xf32>
    %121 = arith.mulf %119, %120 : vector<16x128xf32>
    %122 = arith.truncf %121 : vector<16x128xf32> to vector<16x128xbf16>
    %c16_51 = arith.constant 16 : index
    %c0_52 = arith.constant 0 : index
    %123 = vector.load %arg10[%c16_51, %c0_52] : memref<128x256xbf16, #tpu.memory_space<vmem>>, vector<16x128xbf16>
    tpu.vector_store %arg10[%c16_51, %c0_52], %122 {strides = array<i32>} : memref<128x256xbf16, #tpu.memory_space<vmem>>, vector<16x128xbf16>,
    %c16_53 = arith.constant 16 : index
    %c0_54 = arith.constant 0 : index
    %124 = vector.load %arg16[%c16_53, %c0_54] : memref<128x512xf32, #tpu.memory_space<vmem>>, vector<16x512xf32>
    %125 = arith.addf %124, %14 : vector<16x512xf32>
    %126 = arith.truncf %84 : vector<16x128xf32> to vector<16x128xbf16>
    %cst_55 = arith.constant dense<0.000000e+00> : vector<16x512xf32>
    %127 = tpu.matmul %126, %12, %cst_55 {dimension_numbers = #tpu.dot_dimension_numbers<[1], [0], [0], [1], [0, 0, 1, 1], [], []>} : vector<16x128xbf16>, vector<128x512xbf16>, vector<16x512xf32> -> vector<16x512xf32>
    %128 = arith.addf %125, %127 : vector<16x512xf32>
    %129 = vector.extract_strided_slice %128 {offsets = [0, 0], sizes = [16, 128], strides = [1, 1]} : vector<16x512xf32> to vector<16x128xf32>
    %130 = arith.negf %129 : vector<16x128xf32>
    %131 = math.exp %130 : vector<16x128xf32>
    %cst_56 = arith.constant 1.000000e+00 : f32
    %132 = vector.broadcast %cst_56 : f32 to vector<16x128xf32>
    %133 = arith.addf %132, %131 : vector<16x128xf32>
    %134 = arith.divf %132, %133 : vector<16x128xf32>
    %135 = vector.extract_strided_slice %128 {offsets = [0, 128], sizes = [16, 128], strides = [1, 1]} : vector<16x512xf32> to vector<16x128xf32>
    %136 = arith.negf %135 : vector<16x128xf32>
    %137 = math.exp %136 : vector<16x128xf32>
    %cst_57 = arith.constant 1.000000e+00 : f32
    %138 = vector.broadcast %cst_57 : f32 to vector<16x128xf32>
    %139 = arith.addf %138, %137 : vector<16x128xf32>
    %140 = arith.divf %138, %139 : vector<16x128xf32>
    %141 = vector.extract_strided_slice %128 {offsets = [0, 256], sizes = [16, 128], strides = [1, 1]} : vector<16x512xf32> to vector<16x128xf32>
    %142 = math.tanh %141 : vector<16x128xf32>
    %143 = vector.extract_strided_slice %128 {offsets = [0, 384], sizes = [16, 128], strides = [1, 1]} : vector<16x512xf32> to vector<16x128xf32>
    %144 = arith.negf %143 : vector<16x128xf32>
    %145 = math.exp %144 : vector<16x128xf32>
    %cst_58 = arith.constant 1.000000e+00 : f32
    %146 = vector.broadcast %cst_58 : f32 to vector<16x128xf32>
    %147 = arith.addf %146, %145 : vector<16x128xf32>
    %148 = arith.divf %146, %147 : vector<16x128xf32>
    %149 = arith.mulf %140, %82 : vector<16x128xf32>
    %150 = arith.mulf %134, %142 : vector<16x128xf32>
    %151 = arith.addf %149, %150 : vector<16x128xf32>
    %152 = math.tanh %151 : vector<16x128xf32>
    %153 = arith.mulf %148, %152 : vector<16x128xf32>
    %154 = vector.broadcast %89 : vector<16x1xf32> to vector<16x128xf32>
    %155 = arith.mulf %153, %154 : vector<16x128xf32>
    %156 = arith.truncf %155 : vector<16x128xf32> to vector<16x128xbf16>
    %c16_59 = arith.constant 16 : index
    %c128_60 = arith.constant 128 : index
    %157 = vector.load %arg10[%c16_59, %c128_60] : memref<128x256xbf16, #tpu.memory_space<vmem>>, vector<16x128xbf16>
    tpu.vector_store %arg10[%c16_59, %c128_60], %156 {strides = array<i32>} : memref<128x256xbf16, #tpu.memory_space<vmem>>, vector<16x128xbf16>,
    %158 = vector.extract_strided_slice %15 {offsets = [32, 0], sizes = [16, 1], strides = [1, 1]} : vector<128x1xf32> to vector<16x1xf32>
    %c32 = arith.constant 32 : index
    %c0_61 = arith.constant 0 : index
    %159 = vector.load %arg15[%c32, %c0_61] : memref<128x512xf32, #tpu.memory_space<vmem>>, vector<16x512xf32>
    %160 = arith.addf %159, %13 : vector<16x512xf32>
    %161 = arith.truncf %119 : vector<16x128xf32> to vector<16x128xbf16>
    %cst_62 = arith.constant dense<0.000000e+00> : vector<16x512xf32>
    %162 = tpu.matmul %161, %11, %cst_62 {dimension_numbers = #tpu.dot_dimension_numbers<[1], [0], [0], [1], [0, 0, 1, 1], [], []>} : vector<16x128xbf16>, vector<128x512xbf16>, vector<16x512xf32> -> vector<16x512xf32>
    %163 = arith.addf %160, %162 : vector<16x512xf32>
    %164 = vector.extract_strided_slice %163 {offsets = [0, 0], sizes = [16, 128], strides = [1, 1]} : vector<16x512xf32> to vector<16x128xf32>
    %165 = arith.negf %164 : vector<16x128xf32>
    %166 = math.exp %165 : vector<16x128xf32>
    %cst_63 = arith.constant 1.000000e+00 : f32
    %167 = vector.broadcast %cst_63 : f32 to vector<16x128xf32>
    %168 = arith.addf %167, %166 : vector<16x128xf32>
    %169 = arith.divf %167, %168 : vector<16x128xf32>
    %170 = vector.extract_strided_slice %163 {offsets = [0, 128], sizes = [16, 128], strides = [1, 1]} : vector<16x512xf32> to vector<16x128xf32>
    %171 = arith.negf %170 : vector<16x128xf32>
    %172 = math.exp %171 : vector<16x128xf32>
    %cst_64 = arith.constant 1.000000e+00 : f32
    %173 = vector.broadcast %cst_64 : f32 to vector<16x128xf32>
    %174 = arith.addf %173, %172 : vector<16x128xf32>
    %175 = arith.divf %173, %174 : vector<16x128xf32>
    %176 = vector.extract_strided_slice %163 {offsets = [0, 256], sizes = [16, 128], strides = [1, 1]} : vector<16x512xf32> to vector<16x128xf32>
    %177 = math.tanh %176 : vector<16x128xf32>
    %178 = vector.extract_strided_slice %163 {offsets = [0, 384], sizes = [16, 128], strides = [1, 1]} : vector<16x512xf32> to vector<16x128xf32>
    %179 = arith.negf %178 : vector<16x128xf32>
    %180 = math.exp %179 : vector<16x128xf32>
    %cst_65 = arith.constant 1.000000e+00 : f32
    %181 = vector.broadcast %cst_65 : f32 to vector<16x128xf32>
    %182 = arith.addf %181, %180 : vector<16x128xf32>
    %183 = arith.divf %181, %182 : vector<16x128xf32>
    %184 = arith.mulf %175, %117 : vector<16x128xf32>
    %185 = arith.mulf %169, %177 : vector<16x128xf32>
    %186 = arith.addf %184, %185 : vector<16x128xf32>
    %187 = math.tanh %186 : vector<16x128xf32>
    %188 = arith.mulf %183, %187 : vector<16x128xf32>
    %189 = vector.broadcast %158 : vector<16x1xf32> to vector<16x128xf32>
    %190 = arith.mulf %188, %189 : vector<16x128xf32>
    %191 = arith.truncf %190 : vector<16x128xf32> to vector<16x128xbf16>
    %c32_66 = arith.constant 32 : index
    %c0_67 = arith.constant 0 : index
    %192 = vector.load %arg10[%c32_66, %c0_67] : memref<128x256xbf16, #tpu.memory_space<vmem>>, vector<16x128xbf16>
    tpu.vector_store %arg10[%c32_66, %c0_67], %191 {strides = array<i32>} : memref<128x256xbf16, #tpu.memory_space<vmem>>, vector<16x128xbf16>,
    %c32_68 = arith.constant 32 : index
    %c0_69 = arith.constant 0 : index
    %193 = vector.load %arg16[%c32_68, %c0_69] : memref<128x512xf32, #tpu.memory_space<vmem>>, vector<16x512xf32>
    %194 = arith.addf %193, %14 : vector<16x512xf32>
    %195 = arith.truncf %153 : vector<16x128xf32> to vector<16x128xbf16>
    %cst_70 = arith.constant dense<0.000000e+00> : vector<16x512xf32>
    %196 = tpu.matmul %195, %12, %cst_70 {dimension_numbers = #tpu.dot_dimension_numbers<[1], [0], [0], [1], [0, 0, 1, 1], [], []>} : vector<16x128xbf16>, vector<128x512xbf16>, vector<16x512xf32> -> vector<16x512xf32>
    %197 = arith.addf %194, %196 : vector<16x512xf32>
    %198 = vector.extract_strided_slice %197 {offsets = [0, 0], sizes = [16, 128], strides = [1, 1]} : vector<16x512xf32> to vector<16x128xf32>
    %199 = arith.negf %198 : vector<16x128xf32>
    %200 = math.exp %199 : vector<16x128xf32>
    %cst_71 = arith.constant 1.000000e+00 : f32
    %201 = vector.broadcast %cst_71 : f32 to vector<16x128xf32>
    %202 = arith.addf %201, %200 : vector<16x128xf32>
    %203 = arith.divf %201, %202 : vector<16x128xf32>
    %204 = vector.extract_strided_slice %197 {offsets = [0, 128], sizes = [16, 128], strides = [1, 1]} : vector<16x512xf32> to vector<16x128xf32>
    %205 = arith.negf %204 : vector<16x128xf32>
    %206 = math.exp %205 : vector<16x128xf32>
    %cst_72 = arith.constant 1.000000e+00 : f32
    %207 = vector.broadcast %cst_72 : f32 to vector<16x128xf32>
    %208 = arith.addf %207, %206 : vector<16x128xf32>
    %209 = arith.divf %207, %208 : vector<16x128xf32>
    %210 = vector.extract_strided_slice %197 {offsets = [0, 256], sizes = [16, 128], strides = [1, 1]} : vector<16x512xf32> to vector<16x128xf32>
    %211 = math.tanh %210 : vector<16x128xf32>
    %212 = vector.extract_strided_slice %197 {offsets = [0, 384], sizes = [16, 128], strides = [1, 1]} : vector<16x512xf32> to vector<16x128xf32>
    %213 = arith.negf %212 : vector<16x128xf32>
    %214 = math.exp %213 : vector<16x128xf32>
    %cst_73 = arith.constant 1.000000e+00 : f32
    %215 = vector.broadcast %cst_73 : f32 to vector<16x128xf32>
    %216 = arith.addf %215, %214 : vector<16x128xf32>
    %217 = arith.divf %215, %216 : vector<16x128xf32>
    %218 = arith.mulf %209, %151 : vector<16x128xf32>
    %219 = arith.mulf %203, %211 : vector<16x128xf32>
    %220 = arith.addf %218, %219 : vector<16x128xf32>
    %221 = math.tanh %220 : vector<16x128xf32>
    %222 = arith.mulf %217, %221 : vector<16x128xf32>
    %223 = vector.broadcast %158 : vector<16x1xf32> to vector<16x128xf32>
    %224 = arith.mulf %222, %223 : vector<16x128xf32>
    %225 = arith.truncf %224 : vector<16x128xf32> to vector<16x128xbf16>
    %c32_74 = arith.constant 32 : index
    %c128_75 = arith.constant 128 : index
    %226 = vector.load %arg10[%c32_74, %c128_75] : memref<128x256xbf16, #tpu.memory_space<vmem>>, vector<16x128xbf16>
    tpu.vector_store %arg10[%c32_74, %c128_75], %225 {strides = array<i32>} : memref<128x256xbf16, #tpu.memory_space<vmem>>, vector<16x128xbf16>,
    %227 = vector.extract_strided_slice %15 {offsets = [48, 0], sizes = [16, 1], strides = [1, 1]} : vector<128x1xf32> to vector<16x1xf32>
    %c48 = arith.constant 48 : index
    %c0_76 = arith.constant 0 : index
    %228 = vector.load %arg15[%c48, %c0_76] : memref<128x512xf32, #tpu.memory_space<vmem>>, vector<16x512xf32>
    %229 = arith.addf %228, %13 : vector<16x512xf32>
    %230 = arith.truncf %188 : vector<16x128xf32> to vector<16x128xbf16>
    %cst_77 = arith.constant dense<0.000000e+00> : vector<16x512xf32>
    %231 = tpu.matmul %230, %11, %cst_77 {dimension_numbers = #tpu.dot_dimension_numbers<[1], [0], [0], [1], [0, 0, 1, 1], [], []>} : vector<16x128xbf16>, vector<128x512xbf16>, vector<16x512xf32> -> vector<16x512xf32>
    %232 = arith.addf %229, %231 : vector<16x512xf32>
    %233 = vector.extract_strided_slice %232 {offsets = [0, 0], sizes = [16, 128], strides = [1, 1]} : vector<16x512xf32> to vector<16x128xf32>
    %234 = arith.negf %233 : vector<16x128xf32>
    %235 = math.exp %234 : vector<16x128xf32>
    %cst_78 = arith.constant 1.000000e+00 : f32
    %236 = vector.broadcast %cst_78 : f32 to vector<16x128xf32>
    %237 = arith.addf %236, %235 : vector<16x128xf32>
    %238 = arith.divf %236, %237 : vector<16x128xf32>
    %239 = vector.extract_strided_slice %232 {offsets = [0, 128], sizes = [16, 128], strides = [1, 1]} : vector<16x512xf32> to vector<16x128xf32>
    %240 = arith.negf %239 : vector<16x128xf32>
    %241 = math.exp %240 : vector<16x128xf32>
    %cst_79 = arith.constant 1.000000e+00 : f32
    %242 = vector.broadcast %cst_79 : f32 to vector<16x128xf32>
    %243 = arith.addf %242, %241 : vector<16x128xf32>
    %244 = arith.divf %242, %243 : vector<16x128xf32>
    %245 = vector.extract_strided_slice %232 {offsets = [0, 256], sizes = [16, 128], strides = [1, 1]} : vector<16x512xf32> to vector<16x128xf32>
    %246 = math.tanh %245 : vector<16x128xf32>
    %247 = vector.extract_strided_slice %232 {offsets = [0, 384], sizes = [16, 128], strides = [1, 1]} : vector<16x512xf32> to vector<16x128xf32>
    %248 = arith.negf %247 : vector<16x128xf32>
    %249 = math.exp %248 : vector<16x128xf32>
    %cst_80 = arith.constant 1.000000e+00 : f32
    %250 = vector.broadcast %cst_80 : f32 to vector<16x128xf32>
    %251 = arith.addf %250, %249 : vector<16x128xf32>
    %252 = arith.divf %250, %251 : vector<16x128xf32>
    %253 = arith.mulf %244, %186 : vector<16x128xf32>
    %254 = arith.mulf %238, %246 : vector<16x128xf32>
    %255 = arith.addf %253, %254 : vector<16x128xf32>
    %256 = math.tanh %255 : vector<16x128xf32>
    %257 = arith.mulf %252, %256 : vector<16x128xf32>
    %258 = vector.broadcast %227 : vector<16x1xf32> to vector<16x128xf32>
    %259 = arith.mulf %257, %258 : vector<16x128xf32>
    %260 = arith.truncf %259 : vector<16x128xf32> to vector<16x128xbf16>
    %c48_81 = arith.constant 48 : index
    %c0_82 = arith.constant 0 : index
    %261 = vector.load %arg10[%c48_81, %c0_82] : memref<128x256xbf16, #tpu.memory_space<vmem>>, vector<16x128xbf16>
    tpu.vector_store %arg10[%c48_81, %c0_82], %260 {strides = array<i32>} : memref<128x256xbf16, #tpu.memory_space<vmem>>, vector<16x128xbf16>,
    %c48_83 = arith.constant 48 : index
    %c0_84 = arith.constant 0 : index
    %262 = vector.load %arg16[%c48_83, %c0_84] : memref<128x512xf32, #tpu.memory_space<vmem>>, vector<16x512xf32>
    %263 = arith.addf %262, %14 : vector<16x512xf32>
    %264 = arith.truncf %222 : vector<16x128xf32> to vector<16x128xbf16>
    %cst_85 = arith.constant dense<0.000000e+00> : vector<16x512xf32>
    %265 = tpu.matmul %264, %12, %cst_85 {dimension_numbers = #tpu.dot_dimension_numbers<[1], [0], [0], [1], [0, 0, 1, 1], [], []>} : vector<16x128xbf16>, vector<128x512xbf16>, vector<16x512xf32> -> vector<16x512xf32>
    %266 = arith.addf %263, %265 : vector<16x512xf32>
    %267 = vector.extract_strided_slice %266 {offsets = [0, 0], sizes = [16, 128], strides = [1, 1]} : vector<16x512xf32> to vector<16x128xf32>
    %268 = arith.negf %267 : vector<16x128xf32>
    %269 = math.exp %268 : vector<16x128xf32>
    %cst_86 = arith.constant 1.000000e+00 : f32
    %270 = vector.broadcast %cst_86 : f32 to vector<16x128xf32>
    %271 = arith.addf %270, %269 : vector<16x128xf32>
    %272 = arith.divf %270, %271 : vector<16x128xf32>
    %273 = vector.extract_strided_slice %266 {offsets = [0, 128], sizes = [16, 128], strides = [1, 1]} : vector<16x512xf32> to vector<16x128xf32>
    %274 = arith.negf %273 : vector<16x128xf32>
    %275 = math.exp %274 : vector<16x128xf32>
    %cst_87 = arith.constant 1.000000e+00 : f32
    %276 = vector.broadcast %cst_87 : f32 to vector<16x128xf32>
    %277 = arith.addf %276, %275 : vector<16x128xf32>
    %278 = arith.divf %276, %277 : vector<16x128xf32>
    %279 = vector.extract_strided_slice %266 {offsets = [0, 256], sizes = [16, 128], strides = [1, 1]} : vector<16x512xf32> to vector<16x128xf32>
    %280 = math.tanh %279 : vector<16x128xf32>
    %281 = vector.extract_strided_slice %266 {offsets = [0, 384], sizes = [16, 128], strides = [1, 1]} : vector<16x512xf32> to vector<16x128xf32>
    %282 = arith.negf %281 : vector<16x128xf32>
    %283 = math.exp %282 : vector<16x128xf32>
    %cst_88 = arith.constant 1.000000e+00 : f32
    %284 = vector.broadcast %cst_88 : f32 to vector<16x128xf32>
    %285 = arith.addf %284, %283 : vector<16x128xf32>
    %286 = arith.divf %284, %285 : vector<16x128xf32>
    %287 = arith.mulf %278, %220 : vector<16x128xf32>
    %288 = arith.mulf %272, %280 : vector<16x128xf32>
    %289 = arith.addf %287, %288 : vector<16x128xf32>
    %290 = math.tanh %289 : vector<16x128xf32>
    %291 = arith.mulf %286, %290 : vector<16x128xf32>
    %292 = vector.broadcast %227 : vector<16x1xf32> to vector<16x128xf32>
    %293 = arith.mulf %291, %292 : vector<16x128xf32>
    %294 = arith.truncf %293 : vector<16x128xf32> to vector<16x128xbf16>
    %c48_89 = arith.constant 48 : index
    %c128_90 = arith.constant 128 : index
    %295 = vector.load %arg10[%c48_89, %c128_90] : memref<128x256xbf16, #tpu.memory_space<vmem>>, vector<16x128xbf16>
    tpu.vector_store %arg10[%c48_89, %c128_90], %294 {strides = array<i32>} : memref<128x256xbf16, #tpu.memory_space<vmem>>, vector<16x128xbf16>,
    %296 = vector.extract_strided_slice %15 {offsets = [64, 0], sizes = [16, 1], strides = [1, 1]} : vector<128x1xf32> to vector<16x1xf32>
    %c64 = arith.constant 64 : index
    %c0_91 = arith.constant 0 : index
    %297 = vector.load %arg15[%c64, %c0_91] : memref<128x512xf32, #tpu.memory_space<vmem>>, vector<16x512xf32>
    %298 = arith.addf %297, %13 : vector<16x512xf32>
    %299 = arith.truncf %257 : vector<16x128xf32> to vector<16x128xbf16>
    %cst_92 = arith.constant dense<0.000000e+00> : vector<16x512xf32>
    %300 = tpu.matmul %299, %11, %cst_92 {dimension_numbers = #tpu.dot_dimension_numbers<[1], [0], [0], [1], [0, 0, 1, 1], [], []>} : vector<16x128xbf16>, vector<128x512xbf16>, vector<16x512xf32> -> vector<16x512xf32>
    %301 = arith.addf %298, %300 : vector<16x512xf32>
    %302 = vector.extract_strided_slice %301 {offsets = [0, 0], sizes = [16, 128], strides = [1, 1]} : vector<16x512xf32> to vector<16x128xf32>
    %303 = arith.negf %302 : vector<16x128xf32>
    %304 = math.exp %303 : vector<16x128xf32>
    %cst_93 = arith.constant 1.000000e+00 : f32
    %305 = vector.broadcast %cst_93 : f32 to vector<16x128xf32>
    %306 = arith.addf %305, %304 : vector<16x128xf32>
    %307 = arith.divf %305, %306 : vector<16x128xf32>
    %308 = vector.extract_strided_slice %301 {offsets = [0, 128], sizes = [16, 128], strides = [1, 1]} : vector<16x512xf32> to vector<16x128xf32>
    %309 = arith.negf %308 : vector<16x128xf32>
    %310 = math.exp %309 : vector<16x128xf32>
    %cst_94 = arith.constant 1.000000e+00 : f32
    %311 = vector.broadcast %cst_94 : f32 to vector<16x128xf32>
    %312 = arith.addf %311, %310 : vector<16x128xf32>
    %313 = arith.divf %311, %312 : vector<16x128xf32>
    %314 = vector.extract_strided_slice %301 {offsets = [0, 256], sizes = [16, 128], strides = [1, 1]} : vector<16x512xf32> to vector<16x128xf32>
    %315 = math.tanh %314 : vector<16x128xf32>
    %316 = vector.extract_strided_slice %301 {offsets = [0, 384], sizes = [16, 128], strides = [1, 1]} : vector<16x512xf32> to vector<16x128xf32>
    %317 = arith.negf %316 : vector<16x128xf32>
    %318 = math.exp %317 : vector<16x128xf32>
    %cst_95 = arith.constant 1.000000e+00 : f32
    %319 = vector.broadcast %cst_95 : f32 to vector<16x128xf32>
    %320 = arith.addf %319, %318 : vector<16x128xf32>
    %321 = arith.divf %319, %320 : vector<16x128xf32>
    %322 = arith.mulf %313, %255 : vector<16x128xf32>
    %323 = arith.mulf %307, %315 : vector<16x128xf32>
    %324 = arith.addf %322, %323 : vector<16x128xf32>
    %325 = math.tanh %324 : vector<16x128xf32>
    %326 = arith.mulf %321, %325 : vector<16x128xf32>
    %327 = vector.broadcast %296 : vector<16x1xf32> to vector<16x128xf32>
    %328 = arith.mulf %326, %327 : vector<16x128xf32>
    %329 = arith.truncf %328 : vector<16x128xf32> to vector<16x128xbf16>
    %c64_96 = arith.constant 64 : index
    %c0_97 = arith.constant 0 : index
    %330 = vector.load %arg10[%c64_96, %c0_97] : memref<128x256xbf16, #tpu.memory_space<vmem>>, vector<16x128xbf16>
    tpu.vector_store %arg10[%c64_96, %c0_97], %329 {strides = array<i32>} : memref<128x256xbf16, #tpu.memory_space<vmem>>, vector<16x128xbf16>,
    %c64_98 = arith.constant 64 : index
    %c0_99 = arith.constant 0 : index
    %331 = vector.load %arg16[%c64_98, %c0_99] : memref<128x512xf32, #tpu.memory_space<vmem>>, vector<16x512xf32>
    %332 = arith.addf %331, %14 : vector<16x512xf32>
    %333 = arith.truncf %291 : vector<16x128xf32> to vector<16x128xbf16>
    %cst_100 = arith.constant dense<0.000000e+00> : vector<16x512xf32>
    %334 = tpu.matmul %333, %12, %cst_100 {dimension_numbers = #tpu.dot_dimension_numbers<[1], [0], [0], [1], [0, 0, 1, 1], [], []>} : vector<16x128xbf16>, vector<128x512xbf16>, vector<16x512xf32> -> vector<16x512xf32>
    %335 = arith.addf %332, %334 : vector<16x512xf32>
    %336 = vector.extract_strided_slice %335 {offsets = [0, 0], sizes = [16, 128], strides = [1, 1]} : vector<16x512xf32> to vector<16x128xf32>
    %337 = arith.negf %336 : vector<16x128xf32>
    %338 = math.exp %337 : vector<16x128xf32>
    %cst_101 = arith.constant 1.000000e+00 : f32
    %339 = vector.broadcast %cst_101 : f32 to vector<16x128xf32>
    %340 = arith.addf %339, %338 : vector<16x128xf32>
    %341 = arith.divf %339, %340 : vector<16x128xf32>
    %342 = vector.extract_strided_slice %335 {offsets = [0, 128], sizes = [16, 128], strides = [1, 1]} : vector<16x512xf32> to vector<16x128xf32>
    %343 = arith.negf %342 : vector<16x128xf32>
    %344 = math.exp %343 : vector<16x128xf32>
    %cst_102 = arith.constant 1.000000e+00 : f32
    %345 = vector.broadcast %cst_102 : f32 to vector<16x128xf32>
    %346 = arith.addf %345, %344 : vector<16x128xf32>
    %347 = arith.divf %345, %346 : vector<16x128xf32>
    %348 = vector.extract_strided_slice %335 {offsets = [0, 256], sizes = [16, 128], strides = [1, 1]} : vector<16x512xf32> to vector<16x128xf32>
    %349 = math.tanh %348 : vector<16x128xf32>
    %350 = vector.extract_strided_slice %335 {offsets = [0, 384], sizes = [16, 128], strides = [1, 1]} : vector<16x512xf32> to vector<16x128xf32>
    %351 = arith.negf %350 : vector<16x128xf32>
    %352 = math.exp %351 : vector<16x128xf32>
    %cst_103 = arith.constant 1.000000e+00 : f32
    %353 = vector.broadcast %cst_103 : f32 to vector<16x128xf32>
    %354 = arith.addf %353, %352 : vector<16x128xf32>
    %355 = arith.divf %353, %354 : vector<16x128xf32>
    %356 = arith.mulf %347, %289 : vector<16x128xf32>
    %357 = arith.mulf %341, %349 : vector<16x128xf32>
    %358 = arith.addf %356, %357 : vector<16x128xf32>
    %359 = math.tanh %358 : vector<16x128xf32>
    %360 = arith.mulf %355, %359 : vector<16x128xf32>
    %361 = vector.broadcast %296 : vector<16x1xf32> to vector<16x128xf32>
    %362 = arith.mulf %360, %361 : vector<16x128xf32>
    %363 = arith.truncf %362 : vector<16x128xf32> to vector<16x128xbf16>
    %c64_104 = arith.constant 64 : index
    %c128_105 = arith.constant 128 : index
    %364 = vector.load %arg10[%c64_104, %c128_105] : memref<128x256xbf16, #tpu.memory_space<vmem>>, vector<16x128xbf16>
    tpu.vector_store %arg10[%c64_104, %c128_105], %363 {strides = array<i32>} : memref<128x256xbf16, #tpu.memory_space<vmem>>, vector<16x128xbf16>,
    %365 = vector.extract_strided_slice %15 {offsets = [80, 0], sizes = [16, 1], strides = [1, 1]} : vector<128x1xf32> to vector<16x1xf32>
    %c80 = arith.constant 80 : index
    %c0_106 = arith.constant 0 : index
    %366 = vector.load %arg15[%c80, %c0_106] : memref<128x512xf32, #tpu.memory_space<vmem>>, vector<16x512xf32>
    %367 = arith.addf %366, %13 : vector<16x512xf32>
    %368 = arith.truncf %326 : vector<16x128xf32> to vector<16x128xbf16>
    %cst_107 = arith.constant dense<0.000000e+00> : vector<16x512xf32>
    %369 = tpu.matmul %368, %11, %cst_107 {dimension_numbers = #tpu.dot_dimension_numbers<[1], [0], [0], [1], [0, 0, 1, 1], [], []>} : vector<16x128xbf16>, vector<128x512xbf16>, vector<16x512xf32> -> vector<16x512xf32>
    %370 = arith.addf %367, %369 : vector<16x512xf32>
    %371 = vector.extract_strided_slice %370 {offsets = [0, 0], sizes = [16, 128], strides = [1, 1]} : vector<16x512xf32> to vector<16x128xf32>
    %372 = arith.negf %371 : vector<16x128xf32>
    %373 = math.exp %372 : vector<16x128xf32>
    %cst_108 = arith.constant 1.000000e+00 : f32
    %374 = vector.broadcast %cst_108 : f32 to vector<16x128xf32>
    %375 = arith.addf %374, %373 : vector<16x128xf32>
    %376 = arith.divf %374, %375 : vector<16x128xf32>
    %377 = vector.extract_strided_slice %370 {offsets = [0, 128], sizes = [16, 128], strides = [1, 1]} : vector<16x512xf32> to vector<16x128xf32>
    %378 = arith.negf %377 : vector<16x128xf32>
    %379 = math.exp %378 : vector<16x128xf32>
    %cst_109 = arith.constant 1.000000e+00 : f32
    %380 = vector.broadcast %cst_109 : f32 to vector<16x128xf32>
    %381 = arith.addf %380, %379 : vector<16x128xf32>
    %382 = arith.divf %380, %381 : vector<16x128xf32>
    %383 = vector.extract_strided_slice %370 {offsets = [0, 256], sizes = [16, 128], strides = [1, 1]} : vector<16x512xf32> to vector<16x128xf32>
    %384 = math.tanh %383 : vector<16x128xf32>
    %385 = vector.extract_strided_slice %370 {offsets = [0, 384], sizes = [16, 128], strides = [1, 1]} : vector<16x512xf32> to vector<16x128xf32>
    %386 = arith.negf %385 : vector<16x128xf32>
    %387 = math.exp %386 : vector<16x128xf32>
    %cst_110 = arith.constant 1.000000e+00 : f32
    %388 = vector.broadcast %cst_110 : f32 to vector<16x128xf32>
    %389 = arith.addf %388, %387 : vector<16x128xf32>
    %390 = arith.divf %388, %389 : vector<16x128xf32>
    %391 = arith.mulf %382, %324 : vector<16x128xf32>
    %392 = arith.mulf %376, %384 : vector<16x128xf32>
    %393 = arith.addf %391, %392 : vector<16x128xf32>
    %394 = math.tanh %393 : vector<16x128xf32>
    %395 = arith.mulf %390, %394 : vector<16x128xf32>
    %396 = vector.broadcast %365 : vector<16x1xf32> to vector<16x128xf32>
    %397 = arith.mulf %395, %396 : vector<16x128xf32>
    %398 = arith.truncf %397 : vector<16x128xf32> to vector<16x128xbf16>
    %c80_111 = arith.constant 80 : index
    %c0_112 = arith.constant 0 : index
    %399 = vector.load %arg10[%c80_111, %c0_112] : memref<128x256xbf16, #tpu.memory_space<vmem>>, vector<16x128xbf16>
    tpu.vector_store %arg10[%c80_111, %c0_112], %398 {strides = array<i32>} : memref<128x256xbf16, #tpu.memory_space<vmem>>, vector<16x128xbf16>,
    %c80_113 = arith.constant 80 : index
    %c0_114 = arith.constant 0 : index
    %400 = vector.load %arg16[%c80_113, %c0_114] : memref<128x512xf32, #tpu.memory_space<vmem>>, vector<16x512xf32>
    %401 = arith.addf %400, %14 : vector<16x512xf32>
    %402 = arith.truncf %360 : vector<16x128xf32> to vector<16x128xbf16>
    %cst_115 = arith.constant dense<0.000000e+00> : vector<16x512xf32>
    %403 = tpu.matmul %402, %12, %cst_115 {dimension_numbers = #tpu.dot_dimension_numbers<[1], [0], [0], [1], [0, 0, 1, 1], [], []>} : vector<16x128xbf16>, vector<128x512xbf16>, vector<16x512xf32> -> vector<16x512xf32>
    %404 = arith.addf %401, %403 : vector<16x512xf32>
    %405 = vector.extract_strided_slice %404 {offsets = [0, 0], sizes = [16, 128], strides = [1, 1]} : vector<16x512xf32> to vector<16x128xf32>
    %406 = arith.negf %405 : vector<16x128xf32>
    %407 = math.exp %406 : vector<16x128xf32>
    %cst_116 = arith.constant 1.000000e+00 : f32
    %408 = vector.broadcast %cst_116 : f32 to vector<16x128xf32>
    %409 = arith.addf %408, %407 : vector<16x128xf32>
    %410 = arith.divf %408, %409 : vector<16x128xf32>
    %411 = vector.extract_strided_slice %404 {offsets = [0, 128], sizes = [16, 128], strides = [1, 1]} : vector<16x512xf32> to vector<16x128xf32>
    %412 = arith.negf %411 : vector<16x128xf32>
    %413 = math.exp %412 : vector<16x128xf32>
    %cst_117 = arith.constant 1.000000e+00 : f32
    %414 = vector.broadcast %cst_117 : f32 to vector<16x128xf32>
    %415 = arith.addf %414, %413 : vector<16x128xf32>
    %416 = arith.divf %414, %415 : vector<16x128xf32>
    %417 = vector.extract_strided_slice %404 {offsets = [0, 256], sizes = [16, 128], strides = [1, 1]} : vector<16x512xf32> to vector<16x128xf32>
    %418 = math.tanh %417 : vector<16x128xf32>
    %419 = vector.extract_strided_slice %404 {offsets = [0, 384], sizes = [16, 128], strides = [1, 1]} : vector<16x512xf32> to vector<16x128xf32>
    %420 = arith.negf %419 : vector<16x128xf32>
    %421 = math.exp %420 : vector<16x128xf32>
    %cst_118 = arith.constant 1.000000e+00 : f32
    %422 = vector.broadcast %cst_118 : f32 to vector<16x128xf32>
    %423 = arith.addf %422, %421 : vector<16x128xf32>
    %424 = arith.divf %422, %423 : vector<16x128xf32>
    %425 = arith.mulf %416, %358 : vector<16x128xf32>
    %426 = arith.mulf %410, %418 : vector<16x128xf32>
    %427 = arith.addf %425, %426 : vector<16x128xf32>
    %428 = math.tanh %427 : vector<16x128xf32>
    %429 = arith.mulf %424, %428 : vector<16x128xf32>
    %430 = vector.broadcast %365 : vector<16x1xf32> to vector<16x128xf32>
    %431 = arith.mulf %429, %430 : vector<16x128xf32>
    %432 = arith.truncf %431 : vector<16x128xf32> to vector<16x128xbf16>
    %c80_119 = arith.constant 80 : index
    %c128_120 = arith.constant 128 : index
    %433 = vector.load %arg10[%c80_119, %c128_120] : memref<128x256xbf16, #tpu.memory_space<vmem>>, vector<16x128xbf16>
    tpu.vector_store %arg10[%c80_119, %c128_120], %432 {strides = array<i32>} : memref<128x256xbf16, #tpu.memory_space<vmem>>, vector<16x128xbf16>,
    %434 = vector.extract_strided_slice %15 {offsets = [96, 0], sizes = [16, 1], strides = [1, 1]} : vector<128x1xf32> to vector<16x1xf32>
    %c96 = arith.constant 96 : index
    %c0_121 = arith.constant 0 : index
    %435 = vector.load %arg15[%c96, %c0_121] : memref<128x512xf32, #tpu.memory_space<vmem>>, vector<16x512xf32>
    %436 = arith.addf %435, %13 : vector<16x512xf32>
    %437 = arith.truncf %395 : vector<16x128xf32> to vector<16x128xbf16>
    %cst_122 = arith.constant dense<0.000000e+00> : vector<16x512xf32>
    %438 = tpu.matmul %437, %11, %cst_122 {dimension_numbers = #tpu.dot_dimension_numbers<[1], [0], [0], [1], [0, 0, 1, 1], [], []>} : vector<16x128xbf16>, vector<128x512xbf16>, vector<16x512xf32> -> vector<16x512xf32>
    %439 = arith.addf %436, %438 : vector<16x512xf32>
    %440 = vector.extract_strided_slice %439 {offsets = [0, 0], sizes = [16, 128], strides = [1, 1]} : vector<16x512xf32> to vector<16x128xf32>
    %441 = arith.negf %440 : vector<16x128xf32>
    %442 = math.exp %441 : vector<16x128xf32>
    %cst_123 = arith.constant 1.000000e+00 : f32
    %443 = vector.broadcast %cst_123 : f32 to vector<16x128xf32>
    %444 = arith.addf %443, %442 : vector<16x128xf32>
    %445 = arith.divf %443, %444 : vector<16x128xf32>
    %446 = vector.extract_strided_slice %439 {offsets = [0, 128], sizes = [16, 128], strides = [1, 1]} : vector<16x512xf32> to vector<16x128xf32>
    %447 = arith.negf %446 : vector<16x128xf32>
    %448 = math.exp %447 : vector<16x128xf32>
    %cst_124 = arith.constant 1.000000e+00 : f32
    %449 = vector.broadcast %cst_124 : f32 to vector<16x128xf32>
    %450 = arith.addf %449, %448 : vector<16x128xf32>
    %451 = arith.divf %449, %450 : vector<16x128xf32>
    %452 = vector.extract_strided_slice %439 {offsets = [0, 256], sizes = [16, 128], strides = [1, 1]} : vector<16x512xf32> to vector<16x128xf32>
    %453 = math.tanh %452 : vector<16x128xf32>
    %454 = vector.extract_strided_slice %439 {offsets = [0, 384], sizes = [16, 128], strides = [1, 1]} : vector<16x512xf32> to vector<16x128xf32>
    %455 = arith.negf %454 : vector<16x128xf32>
    %456 = math.exp %455 : vector<16x128xf32>
    %cst_125 = arith.constant 1.000000e+00 : f32
    %457 = vector.broadcast %cst_125 : f32 to vector<16x128xf32>
    %458 = arith.addf %457, %456 : vector<16x128xf32>
    %459 = arith.divf %457, %458 : vector<16x128xf32>
    %460 = arith.mulf %451, %393 : vector<16x128xf32>
    %461 = arith.mulf %445, %453 : vector<16x128xf32>
    %462 = arith.addf %460, %461 : vector<16x128xf32>
    %463 = math.tanh %462 : vector<16x128xf32>
    %464 = arith.mulf %459, %463 : vector<16x128xf32>
    %465 = vector.broadcast %434 : vector<16x1xf32> to vector<16x128xf32>
    %466 = arith.mulf %464, %465 : vector<16x128xf32>
    %467 = arith.truncf %466 : vector<16x128xf32> to vector<16x128xbf16>
    %c96_126 = arith.constant 96 : index
    %c0_127 = arith.constant 0 : index
    %468 = vector.load %arg10[%c96_126, %c0_127] : memref<128x256xbf16, #tpu.memory_space<vmem>>, vector<16x128xbf16>
    tpu.vector_store %arg10[%c96_126, %c0_127], %467 {strides = array<i32>} : memref<128x256xbf16, #tpu.memory_space<vmem>>, vector<16x128xbf16>,
    %c96_128 = arith.constant 96 : index
    %c0_129 = arith.constant 0 : index
    %469 = vector.load %arg16[%c96_128, %c0_129] : memref<128x512xf32, #tpu.memory_space<vmem>>, vector<16x512xf32>
    %470 = arith.addf %469, %14 : vector<16x512xf32>
    %471 = arith.truncf %429 : vector<16x128xf32> to vector<16x128xbf16>
    %cst_130 = arith.constant dense<0.000000e+00> : vector<16x512xf32>
    %472 = tpu.matmul %471, %12, %cst_130 {dimension_numbers = #tpu.dot_dimension_numbers<[1], [0], [0], [1], [0, 0, 1, 1], [], []>} : vector<16x128xbf16>, vector<128x512xbf16>, vector<16x512xf32> -> vector<16x512xf32>
    %473 = arith.addf %470, %472 : vector<16x512xf32>
    %474 = vector.extract_strided_slice %473 {offsets = [0, 0], sizes = [16, 128], strides = [1, 1]} : vector<16x512xf32> to vector<16x128xf32>
    %475 = arith.negf %474 : vector<16x128xf32>
    %476 = math.exp %475 : vector<16x128xf32>
    %cst_131 = arith.constant 1.000000e+00 : f32
    %477 = vector.broadcast %cst_131 : f32 to vector<16x128xf32>
    %478 = arith.addf %477, %476 : vector<16x128xf32>
    %479 = arith.divf %477, %478 : vector<16x128xf32>
    %480 = vector.extract_strided_slice %473 {offsets = [0, 128], sizes = [16, 128], strides = [1, 1]} : vector<16x512xf32> to vector<16x128xf32>
    %481 = arith.negf %480 : vector<16x128xf32>
    %482 = math.exp %481 : vector<16x128xf32>
    %cst_132 = arith.constant 1.000000e+00 : f32
    %483 = vector.broadcast %cst_132 : f32 to vector<16x128xf32>
    %484 = arith.addf %483, %482 : vector<16x128xf32>
    %485 = arith.divf %483, %484 : vector<16x128xf32>
    %486 = vector.extract_strided_slice %473 {offsets = [0, 256], sizes = [16, 128], strides = [1, 1]} : vector<16x512xf32> to vector<16x128xf32>
    %487 = math.tanh %486 : vector<16x128xf32>
    %488 = vector.extract_strided_slice %473 {offsets = [0, 384], sizes = [16, 128], strides = [1, 1]} : vector<16x512xf32> to vector<16x128xf32>
    %489 = arith.negf %488 : vector<16x128xf32>
    %490 = math.exp %489 : vector<16x128xf32>
    %cst_133 = arith.constant 1.000000e+00 : f32
    %491 = vector.broadcast %cst_133 : f32 to vector<16x128xf32>
    %492 = arith.addf %491, %490 : vector<16x128xf32>
    %493 = arith.divf %491, %492 : vector<16x128xf32>
    %494 = arith.mulf %485, %427 : vector<16x128xf32>
    %495 = arith.mulf %479, %487 : vector<16x128xf32>
    %496 = arith.addf %494, %495 : vector<16x128xf32>
    %497 = math.tanh %496 : vector<16x128xf32>
    %498 = arith.mulf %493, %497 : vector<16x128xf32>
    %499 = vector.broadcast %434 : vector<16x1xf32> to vector<16x128xf32>
    %500 = arith.mulf %498, %499 : vector<16x128xf32>
    %501 = arith.truncf %500 : vector<16x128xf32> to vector<16x128xbf16>
    %c96_134 = arith.constant 96 : index
    %c128_135 = arith.constant 128 : index
    %502 = vector.load %arg10[%c96_134, %c128_135] : memref<128x256xbf16, #tpu.memory_space<vmem>>, vector<16x128xbf16>
    tpu.vector_store %arg10[%c96_134, %c128_135], %501 {strides = array<i32>} : memref<128x256xbf16, #tpu.memory_space<vmem>>, vector<16x128xbf16>,
    %503 = vector.extract_strided_slice %15 {offsets = [112, 0], sizes = [16, 1], strides = [1, 1]} : vector<128x1xf32> to vector<16x1xf32>
    %c112 = arith.constant 112 : index
    %c0_136 = arith.constant 0 : index
    %504 = vector.load %arg15[%c112, %c0_136] : memref<128x512xf32, #tpu.memory_space<vmem>>, vector<16x512xf32>
    %505 = arith.addf %504, %13 : vector<16x512xf32>
    %506 = arith.truncf %464 : vector<16x128xf32> to vector<16x128xbf16>
    %cst_137 = arith.constant dense<0.000000e+00> : vector<16x512xf32>
    %507 = tpu.matmul %506, %11, %cst_137 {dimension_numbers = #tpu.dot_dimension_numbers<[1], [0], [0], [1], [0, 0, 1, 1], [], []>} : vector<16x128xbf16>, vector<128x512xbf16>, vector<16x512xf32> -> vector<16x512xf32>
    %508 = arith.addf %505, %507 : vector<16x512xf32>
    %509 = vector.extract_strided_slice %508 {offsets = [0, 0], sizes = [16, 128], strides = [1, 1]} : vector<16x512xf32> to vector<16x128xf32>
    %510 = arith.negf %509 : vector<16x128xf32>
    %511 = math.exp %510 : vector<16x128xf32>
    %cst_138 = arith.constant 1.000000e+00 : f32
    %512 = vector.broadcast %cst_138 : f32 to vector<16x128xf32>
    %513 = arith.addf %512, %511 : vector<16x128xf32>
    %514 = arith.divf %512, %513 : vector<16x128xf32>
    %515 = vector.extract_strided_slice %508 {offsets = [0, 128], sizes = [16, 128], strides = [1, 1]} : vector<16x512xf32> to vector<16x128xf32>
    %516 = arith.negf %515 : vector<16x128xf32>
    %517 = math.exp %516 : vector<16x128xf32>
    %cst_139 = arith.constant 1.000000e+00 : f32
    %518 = vector.broadcast %cst_139 : f32 to vector<16x128xf32>
    %519 = arith.addf %518, %517 : vector<16x128xf32>
    %520 = arith.divf %518, %519 : vector<16x128xf32>
    %521 = vector.extract_strided_slice %508 {offsets = [0, 256], sizes = [16, 128], strides = [1, 1]} : vector<16x512xf32> to vector<16x128xf32>
    %522 = math.tanh %521 : vector<16x128xf32>
    %523 = vector.extract_strided_slice %508 {offsets = [0, 384], sizes = [16, 128], strides = [1, 1]} : vector<16x512xf32> to vector<16x128xf32>
    %524 = arith.negf %523 : vector<16x128xf32>
    %525 = math.exp %524 : vector<16x128xf32>
    %cst_140 = arith.constant 1.000000e+00 : f32
    %526 = vector.broadcast %cst_140 : f32 to vector<16x128xf32>
    %527 = arith.addf %526, %525 : vector<16x128xf32>
    %528 = arith.divf %526, %527 : vector<16x128xf32>
    %529 = arith.mulf %520, %462 : vector<16x128xf32>
    %530 = arith.mulf %514, %522 : vector<16x128xf32>
    %531 = arith.addf %529, %530 : vector<16x128xf32>
    %532 = math.tanh %531 : vector<16x128xf32>
    %533 = arith.mulf %528, %532 : vector<16x128xf32>
    %534 = vector.broadcast %503 : vector<16x1xf32> to vector<16x128xf32>
    %535 = arith.mulf %533, %534 : vector<16x128xf32>
    %536 = arith.truncf %535 : vector<16x128xf32> to vector<16x128xbf16>
    %c112_141 = arith.constant 112 : index
    %c0_142 = arith.constant 0 : index
    %537 = vector.load %arg10[%c112_141, %c0_142] : memref<128x256xbf16, #tpu.memory_space<vmem>>, vector<16x128xbf16>
    tpu.vector_store %arg10[%c112_141, %c0_142], %536 {strides = array<i32>} : memref<128x256xbf16, #tpu.memory_space<vmem>>, vector<16x128xbf16>,
    %c112_143 = arith.constant 112 : index
    %c0_144 = arith.constant 0 : index
    %538 = vector.load %arg16[%c112_143, %c0_144] : memref<128x512xf32, #tpu.memory_space<vmem>>, vector<16x512xf32>
    %539 = arith.addf %538, %14 : vector<16x512xf32>
    %540 = arith.truncf %498 : vector<16x128xf32> to vector<16x128xbf16>
    %cst_145 = arith.constant dense<0.000000e+00> : vector<16x512xf32>
    %541 = tpu.matmul %540, %12, %cst_145 {dimension_numbers = #tpu.dot_dimension_numbers<[1], [0], [0], [1], [0, 0, 1, 1], [], []>} : vector<16x128xbf16>, vector<128x512xbf16>, vector<16x512xf32> -> vector<16x512xf32>
    %542 = arith.addf %539, %541 : vector<16x512xf32>
    %543 = vector.extract_strided_slice %542 {offsets = [0, 0], sizes = [16, 128], strides = [1, 1]} : vector<16x512xf32> to vector<16x128xf32>
    %544 = arith.negf %543 : vector<16x128xf32>
    %545 = math.exp %544 : vector<16x128xf32>
    %cst_146 = arith.constant 1.000000e+00 : f32
    %546 = vector.broadcast %cst_146 : f32 to vector<16x128xf32>
    %547 = arith.addf %546, %545 : vector<16x128xf32>
    %548 = arith.divf %546, %547 : vector<16x128xf32>
    %549 = vector.extract_strided_slice %542 {offsets = [0, 128], sizes = [16, 128], strides = [1, 1]} : vector<16x512xf32> to vector<16x128xf32>
    %550 = arith.negf %549 : vector<16x128xf32>
    %551 = math.exp %550 : vector<16x128xf32>
    %cst_147 = arith.constant 1.000000e+00 : f32
    %552 = vector.broadcast %cst_147 : f32 to vector<16x128xf32>
    %553 = arith.addf %552, %551 : vector<16x128xf32>
    %554 = arith.divf %552, %553 : vector<16x128xf32>
    %555 = vector.extract_strided_slice %542 {offsets = [0, 256], sizes = [16, 128], strides = [1, 1]} : vector<16x512xf32> to vector<16x128xf32>
    %556 = math.tanh %555 : vector<16x128xf32>
    %557 = vector.extract_strided_slice %542 {offsets = [0, 384], sizes = [16, 128], strides = [1, 1]} : vector<16x512xf32> to vector<16x128xf32>
    %558 = arith.negf %557 : vector<16x128xf32>
    %559 = math.exp %558 : vector<16x128xf32>
    %cst_148 = arith.constant 1.000000e+00 : f32
    %560 = vector.broadcast %cst_148 : f32 to vector<16x128xf32>
    %561 = arith.addf %560, %559 : vector<16x128xf32>
    %562 = arith.divf %560, %561 : vector<16x128xf32>
    %563 = arith.mulf %554, %496 : vector<16x128xf32>
    %564 = arith.mulf %548, %556 : vector<16x128xf32>
    %565 = arith.addf %563, %564 : vector<16x128xf32>
    %566 = math.tanh %565 : vector<16x128xf32>
    %567 = arith.mulf %562, %566 : vector<16x128xf32>
    %568 = vector.broadcast %503 : vector<16x1xf32> to vector<16x128xf32>
    %569 = arith.mulf %567, %568 : vector<16x128xf32>
    %570 = arith.truncf %569 : vector<16x128xf32> to vector<16x128xbf16>
    %c112_149 = arith.constant 112 : index
    %c128_150 = arith.constant 128 : index
    %571 = vector.load %arg10[%c112_149, %c128_150] : memref<128x256xbf16, #tpu.memory_space<vmem>>, vector<16x128xbf16>
    tpu.vector_store %arg10[%c112_149, %c128_150], %570 {strides = array<i32>} : memref<128x256xbf16, #tpu.memory_space<vmem>>, vector<16x128xbf16>,
    %c0_151 = arith.constant 0 : index
    %c0_152 = arith.constant 0 : index
    %572 = vector.load %arg11[%c0_151, %c0_152] : memref<16x128xf32, #tpu.memory_space<vmem>>, vector<16x128xf32>
    tpu.vector_store %arg11[%c0_151, %c0_152], %533 {strides = array<i32>} : memref<16x128xf32, #tpu.memory_space<vmem>>, vector<16x128xf32>,
    %c0_153 = arith.constant 0 : index
    %c0_154 = arith.constant 0 : index
    %573 = vector.load %arg13[%c0_153, %c0_154] : memref<16x128xf32, #tpu.memory_space<vmem>>, vector<16x128xf32>
    tpu.vector_store %arg13[%c0_153, %c0_154], %531 {strides = array<i32>} : memref<16x128xf32, #tpu.memory_space<vmem>>, vector<16x128xf32>,
    %c0_155 = arith.constant 0 : index
    %c0_156 = arith.constant 0 : index
    %574 = vector.load %arg12[%c0_155, %c0_156] : memref<16x128xf32, #tpu.memory_space<vmem>>, vector<16x128xf32>
    tpu.vector_store %arg12[%c0_155, %c0_156], %567 {strides = array<i32>} : memref<16x128xf32, #tpu.memory_space<vmem>>, vector<16x128xf32>,
    %c0_157 = arith.constant 0 : index
    %c0_158 = arith.constant 0 : index
    %575 = vector.load %arg14[%c0_157, %c0_158] : memref<16x128xf32, #tpu.memory_space<vmem>>, vector<16x128xf32>
    tpu.vector_store %arg14[%c0_157, %c0_158], %565 {strides = array<i32>} : memref<16x128xf32, #tpu.memory_space<vmem>>, vector<16x128xf32>,
    return
  }
  func.func @transform_0(%arg0: i32) -> (i32, i32) {
    %c0_i32 = arith.constant 0 : i32
    %c0_i32_0 = arith.constant 0 : i32
    return %arg0, %c0_i32 : i32, i32
  }
  func.func @transform_1(%arg0: i32) -> (i32, i32) {
    %c0_i32 = arith.constant 0 : i32
    %c0_i32_0 = arith.constant 0 : i32
    return %arg0, %c0_i32 : i32, i32
  }
  func.func @transform_2(%arg0: i32) -> (i32, i32) {
    %c0_i32 = arith.constant 0 : i32
    %c0_i32_0 = arith.constant 0 : i32
    return %arg0, %c0_i32 : i32, i32
  }
  func.func @transform_3(%arg0: i32) -> (i32, i32) {
    %c0_i32 = arith.constant 0 : i32
    %c0_i32_0 = arith.constant 0 : i32
    %c0_i32_1 = arith.constant 0 : i32
    return %c0_i32, %c0_i32_0 : i32, i32
  }
  func.func @transform_4(%arg0: i32) -> (i32, i32) {
    %c0_i32 = arith.constant 0 : i32
    %c0_i32_0 = arith.constant 0 : i32
    %c0_i32_1 = arith.constant 0 : i32
    return %c0_i32, %c0_i32_0 : i32, i32
  }
  func.func @transform_5(%arg0: i32) -> (i32, i32) {
    %c0_i32 = arith.constant 0 : i32
    %c0_i32_0 = arith.constant 0 : i32
    %c0_i32_1 = arith.constant 0 : i32
    return %c0_i32, %c0_i32_0 : i32, i32
  }
  func.func @transform_6(%arg0: i32) -> (i32, i32) {
    %c0_i32 = arith.constant 0 : i32
    %c0_i32_0 = arith.constant 0 : i32
    %c0_i32_1 = arith.constant 0 : i32
    return %c0_i32, %c0_i32_0 : i32, i32
  }
  func.func @transform_7(%arg0: i32) -> (i32, i32) {
    %c0_i32 = arith.constant 0 : i32
    %c0_i32_0 = arith.constant 0 : i32
    %c0_i32_1 = arith.constant 0 : i32
    return %c0_i32, %c0_i32_0 : i32, i32
  }
  func.func @transform_8(%arg0: i32) -> (i32, i32) {
    %c0_i32 = arith.constant 0 : i32
    %c0_i32_0 = arith.constant 0 : i32
    %c0_i32_1 = arith.constant 0 : i32
    return %c0_i32, %c0_i32_0 : i32, i32
  }
  func.func @transform_9(%arg0: i32) -> (i32, i32) {
    %c0_i32 = arith.constant 0 : i32
    %c0_i32_0 = arith.constant 0 : i32
    return %arg0, %c0_i32 : i32, i32
  }
}

</mosaic_0001>

<llo_original>
// kernel: tpu_custom_call.1
$region0: #{tpu_custom_call.1}
  #allocation0 [shape = 'u32[]', space=smem, size = 0x4, offset = 0x4, fixed_abs, tag = 'smem constant byte address 0x4 - core index']
  #allocation1 [shape = 'u32[144,128]{1,0:T(1,128)}', space=vmem, size = 0x12000, scoped, tag = 'internal scratch']
  #allocation2 [shape = 'f32[16,128]{1,0:T(8,128)}', space=vmem, size = 0x2000, scoped, tag = 'scratch operand']
  #allocation3 [shape = 'f32[16,128]{1,0:T(8,128)}', space=vmem, size = 0x2000, scoped, tag = 'scratch operand']
  #allocation4 [shape = 'f32[16,128]{1,0:T(8,128)}', space=vmem, size = 0x2000, scoped, tag = 'scratch operand']
  #allocation5 [shape = 'f32[16,128]{1,0:T(8,128)}', space=vmem, size = 0x2000, scoped, tag = 'scratch operand']
  #allocation6 [shape = 'f32[128,512]{1,0:T(8,128)}', space=vmem, size = 0x40000, scoped, tag = 'scratch operand']
  #allocation7 [shape = 'f32[128,512]{1,0:T(8,128)}', space=vmem, size = 0x40000, scoped, tag = 'scratch operand']
  %s0 = inlined_call_operand.vmem [shape: bf16[128,128], index: 0, kind: input, shape index: {}]
  %s1 = inlined_call_operand.vmem [shape: bf16[128,128], index: 1, kind: input, shape index: {}]
  %s2 = inlined_call_operand.vmem [shape: f32[128,1], index: 2, kind: input, shape index: {}]
  %s3 = inlined_call_operand.hbm [shape: bf16[128,512], index: 3, kind: input, shape index: {}]
  %s4 = inlined_call_operand.hbm [shape: bf16[128,512], index: 4, kind: input, shape index: {}]
  %s5 = inlined_call_operand.hbm [shape: bf16[128,512], index: 5, kind: input, shape index: {}]
  %s6 = inlined_call_operand.hbm [shape: bf16[128,512], index: 6, kind: input, shape index: {}]
  %s7 = inlined_call_operand.hbm [shape: f32[16,512], index: 7, kind: input, shape index: {}]
  %s8 = inlined_call_operand.hbm [shape: f32[16,512], index: 8, kind: input, shape index: {}]
  %s9 = inlined_call_operand.hbm [shape: bf16[128,256], index: 9, kind: output, shape index: {}]
  %s10 = sld [smem:[#allocation0]]
  $region74: #{tpu_custom_call.1} parent=0
    _
  %s12 = ssub.s32 1, %s10
  %s13 = scalar_select 0, %s12, %s10
  $region1: #{tpu_custom_call.1} parent=0
    #allocation8 [shape = 'u8[131072]{0}', space=vmem, size = 0x20000, scoped, tag = 'input window, operand 3, single buffered']
    #allocation9 [shape = 's32[1]{0}', space=sflag, size = 0x4, scoped, tag = 'scoped memory for tpu_custom_call.1']
    #allocation10 [shape = 's32[1]{0}', space=sflag, size = 0x4, scoped, tag = 'scoped memory for tpu_custom_call.1']
    #allocation11 [shape = 'u8[131072]{0}', space=vmem, size = 0x20000, scoped, tag = 'input window, operand 4, single buffered']
    #allocation12 [shape = 's32[1]{0}', space=sflag, size = 0x4, scoped, tag = 'scoped memory for tpu_custom_call.1']
    #allocation13 [shape = 'u8[131072]{0}', space=vmem, size = 0x20000, scoped, tag = 'input window, operand 5, single buffered']
    #allocation14 [shape = 'u8[131072]{0}', space=vmem, size = 0x20000, scoped, tag = 'input window, operand 6, single buffered']
    #allocation15 [shape = 's32[1]{0}', space=sflag, size = 0x4, scoped, tag = 'scoped memory for tpu_custom_call.1']
    #allocation16 [shape = 'u8[32768]{0}', space=vmem, size = 0x8000, scoped, tag = 'input window, operand 7, single buffered']
    #allocation17 [shape = 'u8[32768]{0}', space=vmem, size = 0x8000, scoped, tag = 'input window, operand 8, single buffered']
    #allocation18 [shape = 's32[1]{0}', space=sflag, size = 0x4, scoped, tag = 'scoped memory for tpu_custom_call.1']
    #allocation19 [shape = 'u8[65536]{0}', space=vmem, size = 0x10000, scoped, tag = 'output window, operand 0, single buffered']
    %14 = vsyncpa [#allocation9], 0
    %15 = vsyncpa [#allocation12], 0
    %16 = vsyncpa [#allocation15], 0
    %17 = vsyncpa [#allocation18], 0
    %18 = vsyncpa [#allocation10], 0
    // Predicated region
    $region2: #{tpu_custom_call.1} parent=1 // pred_check
      _
    $region3: #{tpu_custom_call.1} parent=1 // pred_check_branch
      %20 = sbr.rel (0) target = $region5
    $region4: #{tpu_custom_call.1} parent=1 // pred_region
      _
    $region5: #{tpu_custom_call.1} parent=1 // pred_fallthru
      _
    // Predicated region
    $region6: #{tpu_custom_call.1} parent=1 // pred_check
      _
    $region7: #{tpu_custom_call.1} parent=1 // pred_check_branch
      %22 = sbr.rel (0) target = $region9
    $region8: #{tpu_custom_call.1} parent=1 // pred_region
      _
    $region9: #{tpu_custom_call.1} parent=1 // pred_fallthru
      _
    // Predicated region
    $region10: #{tpu_custom_call.1} parent=1 // pred_check
      _
    $region11: #{tpu_custom_call.1} parent=1 // pred_check_branch
      %24 = sbr.rel (0) target = $region13
    $region12: #{tpu_custom_call.1} parent=1 // pred_region
      _
    $region13: #{tpu_custom_call.1} parent=1 // pred_fallthru
      _
    // Predicated region
    $region14: #{tpu_custom_call.1} parent=1 // pred_check
      _
    $region15: #{tpu_custom_call.1} parent=1 // pred_check_branch
      %26 = sbr.rel (0) target = $region17
    $region16: #{tpu_custom_call.1} parent=1 // pred_region
      %s28 = ssub.s32 4096, 4096
      %29 = vsyncadd [#allocation9], %s28
      %s30 = sshll.u32 [#allocation8], 4
      %s31 = int_to_ptr.vmem [resolvable:$true] %s30
      %36 = dma.hbm_to_vmem [thread:$0]  %s3, 4096, %s31, [#allocation9], 256, 256, 16
    $region17: #{tpu_custom_call.1} parent=1 // pred_fallthru
      _
    // Predicated region
    $region18: #{tpu_custom_call.1} parent=1 // pred_check
      _
    $region19: #{tpu_custom_call.1} parent=1 // pred_check_branch
      %38 = sbr.rel (0) target = $region21
    $region20: #{tpu_custom_call.1} parent=1 // pred_region
      %s40 = ssub.s32 4096, 4096
      %41 = vsyncadd [#allocation12], %s40
      %s42 = sshll.u32 [#allocation11], 4
      %s43 = int_to_ptr.vmem [resolvable:$true] %s42
      %48 = dma.hbm_to_vmem [thread:$0]  %s4, 4096, %s43, [#allocation12], 256, 256, 16
    $region21: #{tpu_custom_call.1} parent=1 // pred_fallthru
      _
    // Predicated region
    $region22: #{tpu_custom_call.1} parent=1 // pred_check
      _
    $region23: #{tpu_custom_call.1} parent=1 // pred_check_branch
      %50 = sbr.rel (0) target = $region25
    $region24: #{tpu_custom_call.1} parent=1 // pred_region
      %s52 = ssub.s32 4096, 4096
      %53 = vsyncadd [#allocation12], %s52
      %s54 = sshll.u32 [#allocation13], 4
      %s55 = int_to_ptr.vmem [resolvable:$true] %s54
      %60 = dma.hbm_to_vmem [thread:$0]  %s5, 4096, %s55, [#allocation12], 256, 256, 16
    $region25: #{tpu_custom_call.1} parent=1 // pred_fallthru
      _
    // Predicated region
    $region26: #{tpu_custom_call.1} parent=1 // pred_check
      _
    $region27: #{tpu_custom_call.1} parent=1 // pred_check_branch
      %62 = sbr.rel (0) target = $region29
    $region28: #{tpu_custom_call.1} parent=1 // pred_region
      %s64 = ssub.s32 4096, 4096
      %65 = vsyncadd [#allocation15], %s64
      %s66 = sshll.u32 [#allocation14], 4
      %s67 = int_to_ptr.vmem [resolvable:$true] %s66
      %72 = dma.hbm_to_vmem [thread:$0]  %s6, 4096, %s67, [#allocation15], 256, 256, 16
    $region29: #{tpu_custom_call.1} parent=1 // pred_fallthru
      _
    // Predicated region
    $region30: #{tpu_custom_call.1} parent=1 // pred_check
      _
    $region31: #{tpu_custom_call.1} parent=1 // pred_check_branch
      %74 = sbr.rel (0) target = $region33
    $region32: #{tpu_custom_call.1} parent=1 // pred_region
      %s76 = ssub.s32 1024, 1024
      %77 = vsyncadd [#allocation15], %s76
      %s78 = sshll.u32 [#allocation16], 4
      %s79 = int_to_ptr.vmem [resolvable:$true] %s78
      %84 = dma.hbm_to_vmem [thread:$0]  %s7, 1024, %s79, [#allocation15], 512, 512, 32
    $region33: #{tpu_custom_call.1} parent=1 // pred_fallthru
      _
    // Predicated region
    $region34: #{tpu_custom_call.1} parent=1 // pred_check
      _
    $region35: #{tpu_custom_call.1} parent=1 // pred_check_branch
      %86 = sbr.rel (0) target = $region37
    $region36: #{tpu_custom_call.1} parent=1 // pred_region
      %s88 = ssub.s32 1024, 1024
      %89 = vsyncadd [#allocation18], %s88
      %s90 = sshll.u32 [#allocation17], 4
      %s91 = int_to_ptr.vmem [resolvable:$true] %s90
      %96 = dma.hbm_to_vmem [thread:$0]  %s8, 1024, %s91, [#allocation18], 512, 512, 32
    $region37: #{tpu_custom_call.1} parent=1 // pred_fallthru
      _
    // Predicated region
    $region38: #{tpu_custom_call.1} parent=1 // pred_check
      _
    $region39: #{tpu_custom_call.1} parent=1 // pred_check_branch
      %98 = sbr.rel (0) target = $region41
    $region40: #{tpu_custom_call.1} parent=1 // pred_region
      %99 = dma.done [#allocation9], 4096
    $region41: #{tpu_custom_call.1} parent=1 // pred_fallthru
      _
    // Predicated region
    $region42: #{tpu_custom_call.1} parent=1 // pred_check
      _
    $region43: #{tpu_custom_call.1} parent=1 // pred_check_branch
      %101 = sbr.rel (0) target = $region45
    $region44: #{tpu_custom_call.1} parent=1 // pred_region
      %102 = dma.done [#allocation12], 4096
    $region45: #{tpu_custom_call.1} parent=1 // pred_fallthru
      _
    // Predicated region
    $region46: #{tpu_custom_call.1} parent=1 // pred_check
      _
    $region47: #{tpu_custom_call.1} parent=1 // pred_check_branch
      %104 = sbr.rel (0) target = $region49
    $region48: #{tpu_custom_call.1} parent=1 // pred_region
      %105 = dma.done [#allocation12], 4096
    $region49: #{tpu_custom_call.1} parent=1 // pred_fallthru
      _
    // Predicated region
    $region50: #{tpu_custom_call.1} parent=1 // pred_check
      _
    $region51: #{tpu_custom_call.1} parent=1 // pred_check_branch
      %107 = sbr.rel (0) target = $region53
    $region52: #{tpu_custom_call.1} parent=1 // pred_region
      %108 = dma.done [#allocation15], 4096
    $region53: #{tpu_custom_call.1} parent=1 // pred_fallthru
      _
    // Predicated region
    $region54: #{tpu_custom_call.1} parent=1 // pred_check
      _
    $region55: #{tpu_custom_call.1} parent=1 // pred_check_branch
      %110 = sbr.rel (0) target = $region57
    $region56: #{tpu_custom_call.1} parent=1 // pred_region
      %111 = dma.done [#allocation15], 1024
    $region57: #{tpu_custom_call.1} parent=1 // pred_fallthru
      _
    // Predicated region
    $region58: #{tpu_custom_call.1} parent=1 // pred_check
      _
    $region59: #{tpu_custom_call.1} parent=1 // pred_check_branch
      %113 = sbr.rel (0) target = $region61
    $region60: #{tpu_custom_call.1} parent=1 // pred_region
      %114 = dma.done [#allocation18], 1024
    $region61: #{tpu_custom_call.1} parent=1 // pred_fallthru
      _
    %p116 = scmp.eq.s32.totalorder 0, 0
    // Predicated region
    $region62: #{tpu_custom_call.1} parent=1 // pred_check
      %p117 = pneg %p116
    $region63: #{tpu_custom_call.1} parent=1 // pred_check_branch
      %119 = sbr.rel (%p117) target = $region65
    $region64: #{tpu_custom_call.1} parent=1 // pred_region
      %120 = vst [vmem:[#allocation2] sm:$0xff] 0.0
      %121 = vst [vmem:[#allocation2 + $0x8] sm:$0xff] 0.0
      %122 = vst [vmem:[#allocation3] sm:$0xff] 0.0
      %123 = vst [vmem:[#allocation3 + $0x8] sm:$0xff] 0.0
      %124 = vst [vmem:[#allocation4] sm:$0xff] 0.0
      %125 = vst [vmem:[#allocation4 + $0x8] sm:$0xff] 0.0
      %126 = vst [vmem:[#allocation5] sm:$0xff] 0.0
      %127 = vst [vmem:[#allocation5 + $0x8] sm:$0xff] 0.0
    $region65: #{tpu_custom_call.1} parent=1 // pred_fallthru
      _
    %v128 = vld [vmem:[%s0] sm:$0xf]
    %v129 = vld [vmem:[%s0 + $0x4] sm:$0xf]
    %v130 = vld [vmem:[%s0 + $0x8] sm:$0xf]
    %v131 = vld [vmem:[%s0 + $0xc] sm:$0xf]
    %v132 = vld [vmem:[%s0 + $0x10] sm:$0xf]
    %v133 = vld [vmem:[%s0 + $0x14] sm:$0xf]
    %v134 = vld [vmem:[%s0 + $0x18] sm:$0xf]
    %v135 = vld [vmem:[%s0 + $0x1c] sm:$0xf]
    %v136 = vld [vmem:[%s0 + $0x20] sm:$0xf]
    %v137 = vld [vmem:[%s0 + $0x24] sm:$0xf]
    %v138 = vld [vmem:[%s0 + $0x28] sm:$0xf]
    %v139 = vld [vmem:[%s0 + $0x2c] sm:$0xf]
    %v140 = vld [vmem:[%s0 + $0x30] sm:$0xf]
    %v141 = vld [vmem:[%s0 + $0x34] sm:$0xf]
    %v142 = vld [vmem:[%s0 + $0x38] sm:$0xf]
    %v143 = vld [vmem:[%s0 + $0x3c] sm:$0xf]
    %v144 = vld [vmem:[#allocation8] sm:$0xff]
    %v145 = vld [vmem:[#allocation8 + $0x8] sm:$0xff]
    %v146 = vld [vmem:[#allocation8 + $0x10] sm:$0xff]
    %v147 = vld [vmem:[#allocation8 + $0x18] sm:$0xff]
    %v148 = vld [vmem:[#allocation8 + $0x20] sm:$0xff]
    %v149 = vld [vmem:[#allocation8 + $0x28] sm:$0xff]
    %v150 = vld [vmem:[#allocation8 + $0x30] sm:$0xff]
    %v151 = vld [vmem:[#allocation8 + $0x38] sm:$0xff]
    %v152 = vld [vmem:[#allocation8 + $0x40] sm:$0xff]
    %v153 = vld [vmem:[#allocation8 + $0x48] sm:$0xff]
    %v154 = vld [vmem:[#allocation8 + $0x50] sm:$0xff]
    %v155 = vld [vmem:[#allocation8 + $0x58] sm:$0xff]
    %v156 = vld [vmem:[#allocation8 + $0x60] sm:$0xff]
    %v157 = vld [vmem:[#allocation8 + $0x68] sm:$0xff]
    %v158 = vld [vmem:[#allocation8 + $0x70] sm:$0xff]
    %v159 = vld [vmem:[#allocation8 + $0x78] sm:$0xff]
    %v160 = vld [vmem:[#allocation8 + $0x80] sm:$0xff]
    %v161 = vld [vmem:[#allocation8 + $0x88] sm:$0xff]
    %v162 = vld [vmem:[#allocation8 + $0x90] sm:$0xff]
    %v163 = vld [vmem:[#allocation8 + $0x98] sm:$0xff]
    %v164 = vld [vmem:[#allocation8 + $0xa0] sm:$0xff]
    %v165 = vld [vmem:[#allocation8 + $0xa8] sm:$0xff]
    %v166 = vld [vmem:[#allocation8 + $0xb0] sm:$0xff]
    %v167 = vld [vmem:[#allocation8 + $0xb8] sm:$0xff]
    %v168 = vld [vmem:[#allocation8 + $0xc0] sm:$0xff]
    %v169 = vld [vmem:[#allocation8 + $0xc8] sm:$0xff]
    %v170 = vld [vmem:[#allocation8 + $0xd0] sm:$0xff]
    %v171 = vld [vmem:[#allocation8 + $0xd8] sm:$0xff]
    %v172 = vld [vmem:[#allocation8 + $0xe0] sm:$0xff]
    %v173 = vld [vmem:[#allocation8 + $0xe8] sm:$0xff]
    %v174 = vld [vmem:[#allocation8 + $0xf0] sm:$0xff]
    %v175 = vld [vmem:[#allocation8 + $0xf8] sm:$0xff]
    %v192 = vunpack.c.l.b16 %v128
    %v193 = vunpack.c.l.b16 %v129
    %v194 = vunpack.c.l.b16 %v130
    %v195 = vunpack.c.l.b16 %v131
    %v196 = vunpack.c.l.b16 %v132
    %v197 = vunpack.c.l.b16 %v133
    %v198 = vunpack.c.l.b16 %v134
    %v199 = vunpack.c.l.b16 %v135
    %v200 = vunpack.c.l.b16 %v136
    %v201 = vunpack.c.l.b16 %v137
    %v202 = vunpack.c.l.b16 %v138
    %v203 = vunpack.c.l.b16 %v139
    %v204 = vunpack.c.l.b16 %v140
    %v205 = vunpack.c.l.b16 %v141
    %v206 = vunpack.c.l.b16 %v142
    %v207 = vunpack.c.l.b16 %v143
    %v208 = vpack.c.b16 %v193, %v192
    %v209 = vpack.c.b16 %v195, %v194
    %v210 = vpack.c.b16 %v197, %v196
    %v211 = vpack.c.b16 %v199, %v198
    %v212 = vpack.c.b16 %v201, %v200
    %v213 = vpack.c.b16 %v203, %v202
    %v214 = vpack.c.b16 %v205, %v204
    %v215 = vpack.c.b16 %v207, %v206
    %v256 = vunpack.c.l.b16 %v144
    %v257 = vunpack.c.h.b16 %v144
    %v258 = vunpack.c.l.b16 %v145
    %v259 = vunpack.c.h.b16 %v145
    %v260 = vunpack.c.l.b16 %v146
    %v261 = vunpack.c.h.b16 %v146
    %v262 = vunpack.c.l.b16 %v147
    %v263 = vunpack.c.h.b16 %v147
    %v264 = vunpack.c.l.b16 %v148
    %v265 = vunpack.c.h.b16 %v148
    %v266 = vunpack.c.l.b16 %v149
    %v267 = vunpack.c.h.b16 %v149
    %v268 = vunpack.c.l.b16 %v150
    %v269 = vunpack.c.h.b16 %v150
    %v270 = vunpack.c.l.b16 %v151
    %v271 = vunpack.c.h.b16 %v151
    %v272 = vunpack.c.l.b16 %v152
    %v273 = vunpack.c.h.b16 %v152
    %v274 = vunpack.c.l.b16 %v153
    %v275 = vunpack.c.h.b16 %v153
    %v276 = vunpack.c.l.b16 %v154
    %v277 = vunpack.c.h.b16 %v154
    %v278 = vunpack.c.l.b16 %v155
    %v279 = vunpack.c.h.b16 %v155
    %v280 = vunpack.c.l.b16 %v156
    %v281 = vunpack.c.h.b16 %v156
    %v282 = vunpack.c.l.b16 %v157
    %v283 = vunpack.c.h.b16 %v157
    %v284 = vunpack.c.l.b16 %v158
    %v285 = vunpack.c.h.b16 %v158
    %v286 = vunpack.c.l.b16 %v159
    %v287 = vunpack.c.h.b16 %v159
    %v288 = vunpack.c.l.b16 %v160
    %v289 = vunpack.c.h.b16 %v160
    %v290 = vunpack.c.l.b16 %v161
    %v291 = vunpack.c.h.b16 %v161
    %v292 = vunpack.c.l.b16 %v162
    %v293 = vunpack.c.h.b16 %v162
    %v294 = vunpack.c.l.b16 %v163
    %v295 = vunpack.c.h.b16 %v163
    %v296 = vunpack.c.l.b16 %v164
    %v297 = vunpack.c.h.b16 %v164
    %v298 = vunpack.c.l.b16 %v165
    %v299 = vunpack.c.h.b16 %v165
    %v300 = vunpack.c.l.b16 %v166
    %v301 = vunpack.c.h.b16 %v166
    %v302 = vunpack.c.l.b16 %v167
    %v303 = vunpack.c.h.b16 %v167
    %v304 = vunpack.c.l.b16 %v168
    %v305 = vunpack.c.h.b16 %v168
    %v306 = vunpack.c.l.b16 %v169
    %v307 = vunpack.c.h.b16 %v169
    %v308 = vunpack.c.l.b16 %v170
    %v309 = vunpack.c.h.b16 %v170
    %v310 = vunpack.c.l.b16 %v171
    %v311 = vunpack.c.h.b16 %v171
    %v312 = vunpack.c.l.b16 %v172
    %v313 = vunpack.c.h.b16 %v172
    %v314 = vunpack.c.l.b16 %v173
    %v315 = vunpack.c.h.b16 %v173
    %v316 = vunpack.c.l.b16 %v174
    %v317 = vunpack.c.h.b16 %v174
    %v318 = vunpack.c.l.b16 %v175
    %v319 = vunpack.c.h.b16 %v175
    %v320 = vpack.c.b16 %v260, %v256
    %v321 = vpack.c.b16 %v261, %v257
    %v322 = vpack.c.b16 %v262, %v258
    %v323 = vpack.c.b16 %v263, %v259
    %v324 = vpack.c.b16 %v268, %v264
    %v325 = vpack.c.b16 %v269, %v265
    %v326 = vpack.c.b16 %v270, %v266
    %v327 = vpack.c.b16 %v271, %v267
    %v328 = vpack.c.b16 %v276, %v272
    %v329 = vpack.c.b16 %v277, %v273
    %v330 = vpack.c.b16 %v278, %v274
    %v331 = vpack.c.b16 %v279, %v275
    %v332 = vpack.c.b16 %v284, %v280
    %v333 = vpack.c.b16 %v285, %v281
    %v334 = vpack.c.b16 %v286, %v282
    %v335 = vpack.c.b16 %v287, %v283
    %v336 = vpack.c.b16 %v292, %v288
    %v337 = vpack.c.b16 %v293, %v289
    %v338 = vpack.c.b16 %v294, %v290
    %v339 = vpack.c.b16 %v295, %v291
    %v340 = vpack.c.b16 %v300, %v296
    %v341 = vpack.c.b16 %v301, %v297
    %v342 = vpack.c.b16 %v302, %v298
    %v343 = vpack.c.b16 %v303, %v299
    %v344 = vpack.c.b16 %v308, %v304
    %v345 = vpack.c.b16 %v309, %v305
    %v346 = vpack.c.b16 %v310, %v306
    %v347 = vpack.c.b16 %v311, %v307
    %v348 = vpack.c.b16 %v316, %v312
    %v349 = vpack.c.b16 %v317, %v313
    %v350 = vpack.c.b16 %v318, %v314
    %v351 = vpack.c.b16 %v319, %v315
    %384 = vmatprep.subr.bf16.mxu0 %v321
    %385 = vmatpush1.bf16.msra.mxu0 %v320
    %386 = vmatprep.subr.bf16.mxu0 %v325
    %387 = vmatpush1.bf16.msra.mxu0 %v324
    %388 = vmatprep.subr.bf16.mxu0 %v329
    %389 = vmatpush1.bf16.msra.mxu0 %v328
    %390 = vmatprep.subr.bf16.mxu0 %v333
    %391 = vmatpush1.bf16.msra.mxu0 %v332
    %392 = vmatprep.subr.bf16.mxu0 %v337
    %393 = vmatpush1.bf16.msra.mxu0 %v336
    %394 = vmatprep.subr.bf16.mxu0 %v341
    %395 = vmatpush1.bf16.msra.mxu0 %v340
    %396 = vmatprep.subr.bf16.mxu0 %v345
    %397 = vmatpush1.bf16.msra.mxu0 %v344
    %398 = vmatprep.subr.bf16.mxu0 %v349
    %399 = vmatpush1.bf16.msra.mxu0 %v348
    %400 = vmatprep.subr.bf16.mxu0 0
    %401 = vmatpush1.bf16.msra.mxu0 0
    %402 = vmatprep.subr.bf16.mxu0 0
    %403 = vmatpush1.bf16.msra.mxu0 0
    %404 = vmatprep.subr.bf16.mxu0 0
    %405 = vmatpush1.bf16.msra.mxu0 0
    %406 = vmatprep.subr.bf16.mxu0 0
    %407 = vmatpush1.bf16.msra.mxu0 0
    %408 = vmatprep.subr.bf16.mxu0 0
    %409 = vmatpush1.bf16.msra.mxu0 0
    %410 = vmatprep.subr.bf16.mxu0 0
    %411 = vmatpush1.bf16.msra.mxu0 0
    %412 = vmatprep.subr.bf16.mxu0 0
    %413 = vmatpush1.bf16.msra.mxu0 0
    %414 = vmatprep.subr.bf16.mxu0 0
    %415 = vmatpush1.bf16.msra.mxu0 0
    %416 = vmatprep.mubr.bf16.mxu0 0
    %417 = vmatmul.mubr.bf16.gmra.mrb[0].mxu0 %v208
    %v418 = vpop.f32.mrb[0].mxu0
    %v419 = vadd.f32 0.0, %v418
    %v420 = vpop.f32.mrb[0].mxu0
    %v421 = vadd.f32 0.0, %v420
    %v422 = vpop.f32.mrb[0].mxu0
    %v423 = vadd.f32 0.0, %v422
    %v424 = vpop.f32.mrb[0].mxu0
    %v425 = vadd.f32 0.0, %v424
    %426 = vmatprep.mubr.bf16.mxu0 0
    %427 = vmatmul.mubr.bf16.gmra.mrb[0].mxu0 %v209
    %v428 = vpop.f32.mrb[0].mxu0
    %v429 = vadd.f32 0.0, %v428
    %v430 = vpop.f32.mrb[0].mxu0
    %v431 = vadd.f32 0.0, %v430
    %v432 = vpop.f32.mrb[0].mxu0
    %v433 = vadd.f32 0.0, %v432
    %v434 = vpop.f32.mrb[0].mxu0
    %v435 = vadd.f32 0.0, %v434
    %436 = vmatprep.mubr.bf16.mxu0 0
    %437 = vmatmul.mubr.bf16.gmra.mrb[0].mxu0 %v210
    %v438 = vpop.f32.mrb[0].mxu0
    %v439 = vadd.f32 0.0, %v438
    %v440 = vpop.f32.mrb[0].mxu0
    %v441 = vadd.f32 0.0, %v440
    %v442 = vpop.f32.mrb[0].mxu0
    %v443 = vadd.f32 0.0, %v442
    %v444 = vpop.f32.mrb[0].mxu0
    %v445 = vadd.f32 0.0, %v444
    %446 = vmatprep.mubr.bf16.mxu0 0
    %447 = vmatmul.mubr.bf16.gmra.mrb[0].mxu0 %v211
    %v448 = vpop.f32.mrb[0].mxu0
    %v449 = vadd.f32 0.0, %v448
    %v450 = vpop.f32.mrb[0].mxu0
    %v451 = vadd.f32 0.0, %v450
    %v452 = vpop.f32.mrb[0].mxu0
    %v453 = vadd.f32 0.0, %v452
    %v454 = vpop.f32.mrb[0].mxu0
    %v455 = vadd.f32 0.0, %v454
    %456 = vmatprep.mubr.bf16.mxu0 0
    %457 = vmatmul.mubr.bf16.gmra.mrb[0].mxu0 %v212
    %v458 = vpop.f32.mrb[0].mxu0
    %v459 = vadd.f32 0.0, %v458
    %v460 = vpop.f32.mrb[0].mxu0
    %v461 = vadd.f32 0.0, %v460
    %v462 = vpop.f32.mrb[0].mxu0
    %v463 = vadd.f32 0.0, %v462
    %v464 = vpop.f32.mrb[0].mxu0
    %v465 = vadd.f32 0.0, %v464
    %466 = vmatprep.mubr.bf16.mxu0 0
    %467 = vmatmul.mubr.bf16.gmra.mrb[0].mxu0 %v213
    %v468 = vpop.f32.mrb[0].mxu0
    %v469 = vadd.f32 0.0, %v468
    %v470 = vpop.f32.mrb[0].mxu0
    %v471 = vadd.f32 0.0, %v470
    %v472 = vpop.f32.mrb[0].mxu0
    %v473 = vadd.f32 0.0, %v472
    %v474 = vpop.f32.mrb[0].mxu0
    %v475 = vadd.f32 0.0, %v474
    %476 = vmatprep.mubr.bf16.mxu0 0
    %477 = vmatmul.mubr.bf16.gmra.mrb[0].mxu0 %v214
    %v478 = vpop.f32.mrb[0].mxu0
    %v479 = vadd.f32 0.0, %v478
    %v480 = vpop.f32.mrb[0].mxu0
    %v481 = vadd.f32 0.0, %v480
    %v482 = vpop.f32.mrb[0].mxu0
    %v483 = vadd.f32 0.0, %v482
    %v484 = vpop.f32.mrb[0].mxu0
    %v485 = vadd.f32 0.0, %v484
    %486 = vmatprep.mubr.bf16.mxu0 0
    %487 = vmatmul.mubr.bf16.gmra.mrb[0].mxu0 %v215
    %v488 = vpop.f32.mrb[0].mxu0
    %v489 = vadd.f32 0.0, %v488
    %v490 = vpop.f32.mrb[0].mxu0
    %v491 = vadd.f32 0.0, %v490
    %v492 = vpop.f32.mrb[0].mxu0
    %v493 = vadd.f32 0.0, %v492
    %v494 = vpop.f32.mrb[0].mxu0
    %v495 = vadd.f32 0.0, %v494
    %496 = vdwg.mxu0
    %497 = vmatprep.subr.bf16.mxu0 %v323
    %498 = vmatpush1.bf16.msra.mxu0 %v322
    %499 = vmatprep.subr.bf16.mxu0 %v327
    %500 = vmatpush1.bf16.msra.mxu0 %v326
    %501 = vmatprep.subr.bf16.mxu0 %v331
    %502 = vmatpush1.bf16.msra.mxu0 %v330
    %503 = vmatprep.subr.bf16.mxu0 %v335
    %504 = vmatpush1.bf16.msra.mxu0 %v334
    %505 = vmatprep.subr.bf16.mxu0 %v339
    %506 = vmatpush1.bf16.msra.mxu0 %v338
    %507 = vmatprep.subr.bf16.mxu0 %v343
    %508 = vmatpush1.bf16.msra.mxu0 %v342
    %509 = vmatprep.subr.bf16.mxu0 %v347
    %510 = vmatpush1.bf16.msra.mxu0 %v346
    %511 = vmatprep.subr.bf16.mxu0 %v351
    %512 = vmatpush1.bf16.msra.mxu0 %v350
    %513 = vmatprep.subr.bf16.mxu0 0
    %514 = vmatpush1.bf16.msra.mxu0 0
    %515 = vmatprep.subr.bf16.mxu0 0
    %516 = vmatpush1.bf16.msra.mxu0 0
    %517 = vmatprep.subr.bf16.mxu0 0
    %518 = vmatpush1.bf16.msra.mxu0 0
    %519 = vmatprep.subr.bf16.mxu0 0
    %520 = vmatpush1.bf16.msra.mxu0 0
    %521 = vmatprep.subr.bf16.mxu0 0
    %522 = vmatpush1.bf16.msra.mxu0 0
    %523 = vmatprep.subr.bf16.mxu0 0
    %524 = vmatpush1.bf16.msra.mxu0 0
    %525 = vmatprep.subr.bf16.mxu0 0
    %526 = vmatpush1.bf16.msra.mxu0 0
    %527 = vmatprep.subr.bf16.mxu0 0
    %528 = vmatpush1.bf16.msra.mxu0 0
    %529 = vmatprep.mubr.bf16.mxu0 0
    %530 = vmatmul.mubr.bf16.gmra.mrb[0].mxu0 %v208
    %v531 = vpop.f32.mrb[0].mxu0
    %v532 = vadd.f32 0.0, %v531
    %v533 = vpop.f32.mrb[0].mxu0
    %v534 = vadd.f32 0.0, %v533
    %v535 = vpop.f32.mrb[0].mxu0
    %v536 = vadd.f32 0.0, %v535
    %v537 = vpop.f32.mrb[0].mxu0
    %v538 = vadd.f32 0.0, %v537
    %539 = vmatprep.mubr.bf16.mxu0 0
    %540 = vmatmul.mubr.bf16.gmra.mrb[0].mxu0 %v209
    %v541 = vpop.f32.mrb[0].mxu0
    %v542 = vadd.f32 0.0, %v541
    %v543 = vpop.f32.mrb[0].mxu0
    %v544 = vadd.f32 0.0, %v543
    %v545 = vpop.f32.mrb[0].mxu0
    %v546 = vadd.f32 0.0, %v545
    %v547 = vpop.f32.mrb[0].mxu0
    %v548 = vadd.f32 0.0, %v547
    %549 = vmatprep.mubr.bf16.mxu0 0
    %550 = vmatmul.mubr.bf16.gmra.mrb[0].mxu0 %v210
    %v551 = vpop.f32.mrb[0].mxu0
    %v552 = vadd.f32 0.0, %v551
    %v553 = vpop.f32.mrb[0].mxu0
    %v554 = vadd.f32 0.0, %v553
    %v555 = vpop.f32.mrb[0].mxu0
    %v556 = vadd.f32 0.0, %v555
    %v557 = vpop.f32.mrb[0].mxu0
    %v558 = vadd.f32 0.0, %v557
    %559 = vmatprep.mubr.bf16.mxu0 0
    %560 = vmatmul.mubr.bf16.gmra.mrb[0].mxu0 %v211
    %v561 = vpop.f32.mrb[0].mxu0
    %v562 = vadd.f32 0.0, %v561
    %v563 = vpop.f32.mrb[0].mxu0
    %v564 = vadd.f32 0.0, %v563
    %v565 = vpop.f32.mrb[0].mxu0
    %v566 = vadd.f32 0.0, %v565
    %v567 = vpop.f32.mrb[0].mxu0
    %v568 = vadd.f32 0.0, %v567
    %569 = vmatprep.mubr.bf16.mxu0 0
    %570 = vmatmul.mubr.bf16.gmra.mrb[0].mxu0 %v212
    %v571 = vpop.f32.mrb[0].mxu0
    %v572 = vadd.f32 0.0, %v571
    %v573 = vpop.f32.mrb[0].mxu0
    %v574 = vadd.f32 0.0, %v573
    %v575 = vpop.f32.mrb[0].mxu0
    %v576 = vadd.f32 0.0, %v575
    %v577 = vpop.f32.mrb[0].mxu0
    %v578 = vadd.f32 0.0, %v577
    %579 = vmatprep.mubr.bf16.mxu0 0
    %580 = vmatmul.mubr.bf16.gmra.mrb[0].mxu0 %v213
    %v581 = vpop.f32.mrb[0].mxu0
    %v582 = vadd.f32 0.0, %v581
    %v583 = vpop.f32.mrb[0].mxu0
    %v584 = vadd.f32 0.0, %v583
    %v585 = vpop.f32.mrb[0].mxu0
    %v586 = vadd.f32 0.0, %v585
    %v587 = vpop.f32.mrb[0].mxu0
    %v588 = vadd.f32 0.0, %v587
    %589 = vmatprep.mubr.bf16.mxu0 0
    %590 = vmatmul.mubr.bf16.gmra.mrb[0].mxu0 %v214
    %v591 = vpop.f32.mrb[0].mxu0
    %v592 = vadd.f32 0.0, %v591
    %v593 = vpop.f32.mrb[0].mxu0
    %v594 = vadd.f32 0.0, %v593
    %v595 = vpop.f32.mrb[0].mxu0
    %v596 = vadd.f32 0.0, %v595
    %v597 = vpop.f32.mrb[0].mxu0
    %v598 = vadd.f32 0.0, %v597
    %599 = vmatprep.mubr.bf16.mxu0 0
    %600 = vmatmul.mubr.bf16.gmra.mrb[0].mxu0 %v215
    %v601 = vpop.f32.mrb[0].mxu0
    %v602 = vadd.f32 0.0, %v601
    %v603 = vpop.f32.mrb[0].mxu0
    %v604 = vadd.f32 0.0, %v603
    %v605 = vpop.f32.mrb[0].mxu0
    %v606 = vadd.f32 0.0, %v605
    %v607 = vpop.f32.mrb[0].mxu0
    %v608 = vadd.f32 0.0, %v607
    %609 = vdwg.mxu0
    %610 = vst [vmem:[#allocation6] sm:$0xff] %v419
    %611 = vst [vmem:[#allocation6 + $0x8] sm:$0xff] %v421
    %612 = vst [vmem:[#allocation6 + $0x10] sm:$0xff] %v532
    %613 = vst [vmem:[#allocation6 + $0x18] sm:$0xff] %v534
    %614 = vst [vmem:[#allocation6 + $0x20] sm:$0xff] %v423
    %615 = vst [vmem:[#allocation6 + $0x28] sm:$0xff] %v425
    %616 = vst [vmem:[#allocation6 + $0x30] sm:$0xff] %v536
    %617 = vst [vmem:[#allocation6 + $0x38] sm:$0xff] %v538
    %618 = vst [vmem:[#allocation6 + $0x40] sm:$0xff] %v429
    %619 = vst [vmem:[#allocation6 + $0x48] sm:$0xff] %v431
    %620 = vst [vmem:[#allocation6 + $0x50] sm:$0xff] %v542
    %621 = vst [vmem:[#allocation6 + $0x58] sm:$0xff] %v544
    %622 = vst [vmem:[#allocation6 + $0x60] sm:$0xff] %v433
    %623 = vst [vmem:[#allocation6 + $0x68] sm:$0xff] %v435
    %624 = vst [vmem:[#allocation6 + $0x70] sm:$0xff] %v546
    %625 = vst [vmem:[#allocation6 + $0x78] sm:$0xff] %v548
    %626 = vst [vmem:[#allocation6 + $0x80] sm:$0xff] %v439
    %627 = vst [vmem:[#allocation6 + $0x88] sm:$0xff] %v441
    %628 = vst [vmem:[#allocation6 + $0x90] sm:$0xff] %v552
    %629 = vst [vmem:[#allocation6 + $0x98] sm:$0xff] %v554
    %630 = vst [vmem:[#allocation6 + $0xa0] sm:$0xff] %v443
    %631 = vst [vmem:[#allocation6 + $0xa8] sm:$0xff] %v445
    %632 = vst [vmem:[#allocation6 + $0xb0] sm:$0xff] %v556
    %633 = vst [vmem:[#allocation6 + $0xb8] sm:$0xff] %v558
    %634 = vst [vmem:[#allocation6 + $0xc0] sm:$0xff] %v449
    %635 = vst [vmem:[#allocation6 + $0xc8] sm:$0xff] %v451
    %636 = vst [vmem:[#allocation6 + $0xd0] sm:$0xff] %v562
    %637 = vst [vmem:[#allocation6 + $0xd8] sm:$0xff] %v564
    %638 = vst [vmem:[#allocation6 + $0xe0] sm:$0xff] %v453
    %639 = vst [vmem:[#allocation6 + $0xe8] sm:$0xff] %v455
    %640 = vst [vmem:[#allocation6 + $0xf0] sm:$0xff] %v566
    %641 = vst [vmem:[#allocation6 + $0xf8] sm:$0xff] %v568
    %642 = vst [vmem:[#allocation6 + $0x100] sm:$0xff] %v459
    %643 = vst [vmem:[#allocation6 + $0x108] sm:$0xff] %v461
    %644 = vst [vmem:[#allocation6 + $0x110] sm:$0xff] %v572
    %645 = vst [vmem:[#allocation6 + $0x118] sm:$0xff] %v574
    %646 = vst [vmem:[#allocation6 + $0x120] sm:$0xff] %v463
    %647 = vst [vmem:[#allocation6 + $0x128] sm:$0xff] %v465
    %648 = vst [vmem:[#allocation6 + $0x130] sm:$0xff] %v576
    %649 = vst [vmem:[#allocation6 + $0x138] sm:$0xff] %v578
    %650 = vst [vmem:[#allocation6 + $0x140] sm:$0xff] %v469
    %651 = vst [vmem:[#allocation6 + $0x148] sm:$0xff] %v471
    %652 = vst [vmem:[#allocation6 + $0x150] sm:$0xff] %v582
    %653 = vst [vmem:[#allocation6 + $0x158] sm:$0xff] %v584
    %654 = vst [vmem:[#allocation6 + $0x160] sm:$0xff] %v473
    %655 = vst [vmem:[#allocation6 + $0x168] sm:$0xff] %v475
    %656 = vst [vmem:[#allocation6 + $0x170] sm:$0xff] %v586
    %657 = vst [vmem:[#allocation6 + $0x178] sm:$0xff] %v588
    %658 = vst [vmem:[#allocation6 + $0x180] sm:$0xff] %v479
    %659 = vst [vmem:[#allocation6 + $0x188] sm:$0xff] %v481
    %660 = vst [vmem:[#allocation6 + $0x190] sm:$0xff] %v592
    %661 = vst [vmem:[#allocation6 + $0x198] sm:$0xff] %v594
    %662 = vst [vmem:[#allocation6 + $0x1a0] sm:$0xff] %v483
    %663 = vst [vmem:[#allocation6 + $0x1a8] sm:$0xff] %v485
    %664 = vst [vmem:[#allocation6 + $0x1b0] sm:$0xff] %v596
    %665 = vst [vmem:[#allocation6 + $0x1b8] sm:$0xff] %v598
    %666 = vst [vmem:[#allocation6 + $0x1c0] sm:$0xff] %v489
    %667 = vst [vmem:[#allocation6 + $0x1c8] sm:$0xff] %v491
    %668 = vst [vmem:[#allocation6 + $0x1d0] sm:$0xff] %v602
    %669 = vst [vmem:[#allocation6 + $0x1d8] sm:$0xff] %v604
    %670 = vst [vmem:[#allocation6 + $0x1e0] sm:$0xff] %v493
    %671 = vst [vmem:[#allocation6 + $0x1e8] sm:$0xff] %v495
    %672 = vst [vmem:[#allocation6 + $0x1f0] sm:$0xff] %v606
    %673 = vst [vmem:[#allocation6 + $0x1f8] sm:$0xff] %v608
    %v674 = vld [vmem:[%s1] sm:$0xf]
    %v675 = vld [vmem:[%s1 + $0x4] sm:$0xf]
    %v676 = vld [vmem:[%s1 + $0x8] sm:$0xf]
    %v677 = vld [vmem:[%s1 + $0xc] sm:$0xf]
    %v678 = vld [vmem:[%s1 + $0x10] sm:$0xf]
    %v679 = vld [vmem:[%s1 + $0x14] sm:$0xf]
    %v680 = vld [vmem:[%s1 + $0x18] sm:$0xf]
    %v681 = vld [vmem:[%s1 + $0x1c] sm:$0xf]
    %v682 = vld [vmem:[%s1 + $0x20] sm:$0xf]
    %v683 = vld [vmem:[%s1 + $0x24] sm:$0xf]
    %v684 = vld [vmem:[%s1 + $0x28] sm:$0xf]
    %v685 = vld [vmem:[%s1 + $0x2c] sm:$0xf]
    %v686 = vld [vmem:[%s1 + $0x30] sm:$0xf]
    %v687 = vld [vmem:[%s1 + $0x34] sm:$0xf]
    %v688 = vld [vmem:[%s1 + $0x38] sm:$0xf]
    %v689 = vld [vmem:[%s1 + $0x3c] sm:$0xf]
    %v690 = vld [vmem:[#allocation11] sm:$0xff]
    %v691 = vld [vmem:[#allocation11 + $0x8] sm:$0xff]
    %v692 = vld [vmem:[#allocation11 + $0x10] sm:$0xff]
    %v693 = vld [vmem:[#allocation11 + $0x18] sm:$0xff]
    %v694 = vld [vmem:[#allocation11 + $0x20] sm:$0xff]
    %v695 = vld [vmem:[#allocation11 + $0x28] sm:$0xff]
    %v696 = vld [vmem:[#allocation11 + $0x30] sm:$0xff]
    %v697 = vld [vmem:[#allocation11 + $0x38] sm:$0xff]
    %v698 = vld [vmem:[#allocation11 + $0x40] sm:$0xff]
    %v699 = vld [vmem:[#allocation11 + $0x48] sm:$0xff]
    %v700 = vld [vmem:[#allocation11 + $0x50] sm:$0xff]
    %v701 = vld [vmem:[#allocation11 + $0x58] sm:$0xff]
    %v702 = vld [vmem:[#allocation11 + $0x60] sm:$0xff]
    %v703 = vld [vmem:[#allocation11 + $0x68] sm:$0xff]
    %v704 = vld [vmem:[#allocation11 + $0x70] sm:$0xff]
    %v705 = vld [vmem:[#allocation11 + $0x78] sm:$0xff]
    %v706 = vld [vmem:[#allocation11 + $0x80] sm:$0xff]
    %v707 = vld [vmem:[#allocation11 + $0x88] sm:$0xff]
    %v708 = vld [vmem:[#allocation11 + $0x90] sm:$0xff]
    %v709 = vld [vmem:[#allocation11 + $0x98] sm:$0xff]
    %v710 = vld [vmem:[#allocation11 + $0xa0] sm:$0xff]
    %v711 = vld [vmem:[#allocation11 + $0xa8] sm:$0xff]
    %v712 = vld [vmem:[#allocation11 + $0xb0] sm:$0xff]
    %v713 = vld [vmem:[#allocation11 + $0xb8] sm:$0xff]
    %v714 = vld [vmem:[#allocation11 + $0xc0] sm:$0xff]
    %v715 = vld [vmem:[#allocation11 + $0xc8] sm:$0xff]
    %v716 = vld [vmem:[#allocation11 + $0xd0] sm:$0xff]
    %v717 = vld [vmem:[#allocation11 + $0xd8] sm:$0xff]
    %v718 = vld [vmem:[#allocation11 + $0xe0] sm:$0xff]
    %v719 = vld [vmem:[#allocation11 + $0xe8] sm:$0xff]
    %v720 = vld [vmem:[#allocation11 + $0xf0] sm:$0xff]
    %v721 = vld [vmem:[#allocation11 + $0xf8] sm:$0xff]
    %v738 = vunpack.c.l.b16 %v674
    %v739 = vunpack.c.l.b16 %v675
    %v740 = vunpack.c.l.b16 %v676
    %v741 = vunpack.c.l.b16 %v677
    %v742 = vunpack.c.l.b16 %v678
    %v743 = vunpack.c.l.b16 %v679
    %v744 = vunpack.c.l.b16 %v680
    %v745 = vunpack.c.l.b16 %v681
    %v746 = vunpack.c.l.b16 %v682
    %v747 = vunpack.c.l.b16 %v683
    %v748 = vunpack.c.l.b16 %v684
    %v749 = vunpack.c.l.b16 %v685
    %v750 = vunpack.c.l.b16 %v686
    %v751 = vunpack.c.l.b16 %v687
    %v752 = vunpack.c.l.b16 %v688
    %v753 = vunpack.c.l.b16 %v689
    %v754 = vpack.c.b16 %v739, %v738
    %v755 = vpack.c.b16 %v741, %v740
    %v756 = vpack.c.b16 %v743, %v742
    %v757 = vpack.c.b16 %v745, %v744
    %v758 = vpack.c.b16 %v747, %v746
    %v759 = vpack.c.b16 %v749, %v748
    %v760 = vpack.c.b16 %v751, %v750
    %v761 = vpack.c.b16 %v753, %v752
    %v802 = vunpack.c.l.b16 %v690
    %v803 = vunpack.c.h.b16 %v690
    %v804 = vunpack.c.l.b16 %v691
    %v805 = vunpack.c.h.b16 %v691
    %v806 = vunpack.c.l.b16 %v692
    %v807 = vunpack.c.h.b16 %v692
    %v808 = vunpack.c.l.b16 %v693
    %v809 = vunpack.c.h.b16 %v693
    %v810 = vunpack.c.l.b16 %v694
    %v811 = vunpack.c.h.b16 %v694
    %v812 = vunpack.c.l.b16 %v695
    %v813 = vunpack.c.h.b16 %v695
    %v814 = vunpack.c.l.b16 %v696
    %v815 = vunpack.c.h.b16 %v696
    %v816 = vunpack.c.l.b16 %v697
    %v817 = vunpack.c.h.b16 %v697
    %v818 = vunpack.c.l.b16 %v698
    %v819 = vunpack.c.h.b16 %v698
    %v820 = vunpack.c.l.b16 %v699
    %v821 = vunpack.c.h.b16 %v699
    %v822 = vunpack.c.l.b16 %v700
    %v823 = vunpack.c.h.b16 %v700
    %v824 = vunpack.c.l.b16 %v701
    %v825 = vunpack.c.h.b16 %v701
    %v826 = vunpack.c.l.b16 %v702
    %v827 = vunpack.c.h.b16 %v702
    %v828 = vunpack.c.l.b16 %v703
    %v829 = vunpack.c.h.b16 %v703
    %v830 = vunpack.c.l.b16 %v704
    %v831 = vunpack.c.h.b16 %v704
    %v832 = vunpack.c.l.b16 %v705
    %v833 = vunpack.c.h.b16 %v705
    %v834 = vunpack.c.l.b16 %v706
    %v835 = vunpack.c.h.b16 %v706
    %v836 = vunpack.c.l.b16 %v707
    %v837 = vunpack.c.h.b16 %v707
    %v838 = vunpack.c.l.b16 %v708
    %v839 = vunpack.c.h.b16 %v708
    %v840 = vunpack.c.l.b16 %v709
    %v841 = vunpack.c.h.b16 %v709
    %v842 = vunpack.c.l.b16 %v710
    %v843 = vunpack.c.h.b16 %v710
    %v844 = vunpack.c.l.b16 %v711
    %v845 = vunpack.c.h.b16 %v711
    %v846 = vunpack.c.l.b16 %v712
    %v847 = vunpack.c.h.b16 %v712
    %v848 = vunpack.c.l.b16 %v713
    %v849 = vunpack.c.h.b16 %v713
    %v850 = vunpack.c.l.b16 %v714
    %v851 = vunpack.c.h.b16 %v714
    %v852 = vunpack.c.l.b16 %v715
    %v853 = vunpack.c.h.b16 %v715
    %v854 = vunpack.c.l.b16 %v716
    %v855 = vunpack.c.h.b16 %v716
    %v856 = vunpack.c.l.b16 %v717
    %v857 = vunpack.c.h.b16 %v717
    %v858 = vunpack.c.l.b16 %v718
    %v859 = vunpack.c.h.b16 %v718
    %v860 = vunpack.c.l.b16 %v719
    %v861 = vunpack.c.h.b16 %v719
    %v862 = vunpack.c.l.b16 %v720
    %v863 = vunpack.c.h.b16 %v720
    %v864 = vunpack.c.l.b16 %v721
    %v865 = vunpack.c.h.b16 %v721
    %v866 = vpack.c.b16 %v806, %v802
    %v867 = vpack.c.b16 %v807, %v803
    %v868 = vpack.c.b16 %v808, %v804
    %v869 = vpack.c.b16 %v809, %v805
    %v870 = vpack.c.b16 %v814, %v810
    %v871 = vpack.c.b16 %v815, %v811
    %v872 = vpack.c.b16 %v816, %v812
    %v873 = vpack.c.b16 %v817, %v813
    %v874 = vpack.c.b16 %v822, %v818
    %v875 = vpack.c.b16 %v823, %v819
    %v876 = vpack.c.b16 %v824, %v820
    %v877 = vpack.c.b16 %v825, %v821
    %v878 = vpack.c.b16 %v830, %v826
    %v879 = vpack.c.b16 %v831, %v827
    %v880 = vpack.c.b16 %v832, %v828
    %v881 = vpack.c.b16 %v833, %v829
    %v882 = vpack.c.b16 %v838, %v834
    %v883 = vpack.c.b16 %v839, %v835
    %v884 = vpack.c.b16 %v840, %v836
    %v885 = vpack.c.b16 %v841, %v837
    %v886 = vpack.c.b16 %v846, %v842
    %v887 = vpack.c.b16 %v847, %v843
    %v888 = vpack.c.b16 %v848, %v844
    %v889 = vpack.c.b16 %v849, %v845
    %v890 = vpack.c.b16 %v854, %v850
    %v891 = vpack.c.b16 %v855, %v851
    %v892 = vpack.c.b16 %v856, %v852
    %v893 = vpack.c.b16 %v857, %v853
    %v894 = vpack.c.b16 %v862, %v858
    %v895 = vpack.c.b16 %v863, %v859
    %v896 = vpack.c.b16 %v864, %v860
    %v897 = vpack.c.b16 %v865, %v861
    %930 = vmatprep.subr.bf16.mxu0 %v867
    %931 = vmatpush1.bf16.msra.mxu0 %v866
    %932 = vmatprep.subr.bf16.mxu0 %v871
    %933 = vmatpush1.bf16.msra.mxu0 %v870
    %934 = vmatprep.subr.bf16.mxu0 %v875
    %935 = vmatpush1.bf16.msra.mxu0 %v874
    %936 = vmatprep.subr.bf16.mxu0 %v879
    %937 = vmatpush1.bf16.msra.mxu0 %v878
    %938 = vmatprep.subr.bf16.mxu0 %v883
    %939 = vmatpush1.bf16.msra.mxu0 %v882
    %940 = vmatprep.subr.bf16.mxu0 %v887
    %941 = vmatpush1.bf16.msra.mxu0 %v886
    %942 = vmatprep.subr.bf16.mxu0 %v891
    %943 = vmatpush1.bf16.msra.mxu0 %v890
    %944 = vmatprep.subr.bf16.mxu0 %v895
    %945 = vmatpush1.bf16.msra.mxu0 %v894
    %946 = vmatprep.subr.bf16.mxu0 0
    %947 = vmatpush1.bf16.msra.mxu0 0
    %948 = vmatprep.subr.bf16.mxu0 0
    %949 = vmatpush1.bf16.msra.mxu0 0
    %950 = vmatprep.subr.bf16.mxu0 0
    %951 = vmatpush1.bf16.msra.mxu0 0
    %952 = vmatprep.subr.bf16.mxu0 0
    %953 = vmatpush1.bf16.msra.mxu0 0
    %954 = vmatprep.subr.bf16.mxu0 0
    %955 = vmatpush1.bf16.msra.mxu0 0
    %956 = vmatprep.subr.bf16.mxu0 0
    %957 = vmatpush1.bf16.msra.mxu0 0
    %958 = vmatprep.subr.bf16.mxu0 0
    %959 = vmatpush1.bf16.msra.mxu0 0
    %960 = vmatprep.subr.bf16.mxu0 0
    %961 = vmatpush1.bf16.msra.mxu0 0
    %962 = vmatprep.mubr.bf16.mxu0 0
    %963 = vmatmul.mubr.bf16.gmra.mrb[0].mxu0 %v754
    %v964 = vpop.f32.mrb[0].mxu0
    %v965 = vadd.f32 0.0, %v964
    %v966 = vpop.f32.mrb[0].mxu0
    %v967 = vadd.f32 0.0, %v966
    %v968 = vpop.f32.mrb[0].mxu0
    %v969 = vadd.f32 0.0, %v968
    %v970 = vpop.f32.mrb[0].mxu0
    %v971 = vadd.f32 0.0, %v970
    %972 = vmatprep.mubr.bf16.mxu0 0
    %973 = vmatmul.mubr.bf16.gmra.mrb[0].mxu0 %v755
    %v974 = vpop.f32.mrb[0].mxu0
    %v975 = vadd.f32 0.0, %v974
    %v976 = vpop.f32.mrb[0].mxu0
    %v977 = vadd.f32 0.0, %v976
    %v978 = vpop.f32.mrb[0].mxu0
    %v979 = vadd.f32 0.0, %v978
    %v980 = vpop.f32.mrb[0].mxu0
    %v981 = vadd.f32 0.0, %v980
    %982 = vmatprep.mubr.bf16.mxu0 0
    %983 = vmatmul.mubr.bf16.gmra.mrb[0].mxu0 %v756
    %v984 = vpop.f32.mrb[0].mxu0
    %v985 = vadd.f32 0.0, %v984
    %v986 = vpop.f32.mrb[0].mxu0
    %v987 = vadd.f32 0.0, %v986
    %v988 = vpop.f32.mrb[0].mxu0
    %v989 = vadd.f32 0.0, %v988
    %v990 = vpop.f32.mrb[0].mxu0
    %v991 = vadd.f32 0.0, %v990
    %992 = vmatprep.mubr.bf16.mxu0 0
    %993 = vmatmul.mubr.bf16.gmra.mrb[0].mxu0 %v757
    %v994 = vpop.f32.mrb[0].mxu0
    %v995 = vadd.f32 0.0, %v994
    %v996 = vpop.f32.mrb[0].mxu0
    %v997 = vadd.f32 0.0, %v996
    %v998 = vpop.f32.mrb[0].mxu0
    %v999 = vadd.f32 0.0, %v998
    %v1000 = vpop.f32.mrb[0].mxu0
    %v1001 = vadd.f32 0.0, %v1000
    %1002 = vmatprep.mubr.bf16.mxu0 0
    %1003 = vmatmul.mubr.bf16.gmra.mrb[0].mxu0 %v758
    %v1004 = vpop.f32.mrb[0].mxu0
    %v1005 = vadd.f32 0.0, %v1004
    %v1006 = vpop.f32.mrb[0].mxu0
    %v1007 = vadd.f32 0.0, %v1006
    %v1008 = vpop.f32.mrb[0].mxu0
    %v1009 = vadd.f32 0.0, %v1008
    %v1010 = vpop.f32.mrb[0].mxu0
    %v1011 = vadd.f32 0.0, %v1010
    %1012 = vmatprep.mubr.bf16.mxu0 0
    %1013 = vmatmul.mubr.bf16.gmra.mrb[0].mxu0 %v759
    %v1014 = vpop.f32.mrb[0].mxu0
    %v1015 = vadd.f32 0.0, %v1014
    %v1016 = vpop.f32.mrb[0].mxu0
    %v1017 = vadd.f32 0.0, %v1016
    %v1018 = vpop.f32.mrb[0].mxu0
    %v1019 = vadd.f32 0.0, %v1018
    %v1020 = vpop.f32.mrb[0].mxu0
    %v1021 = vadd.f32 0.0, %v1020
    %1022 = vmatprep.mubr.bf16.mxu0 0
    %1023 = vmatmul.mubr.bf16.gmra.mrb[0].mxu0 %v760
    %v1024 = vpop.f32.mrb[0].mxu0
    %v1025 = vadd.f32 0.0, %v1024
    %v1026 = vpop.f32.mrb[0].mxu0
    %v1027 = vadd.f32 0.0, %v1026
    %v1028 = vpop.f32.mrb[0].mxu0
    %v1029 = vadd.f32 0.0, %v1028
    %v1030 = vpop.f32.mrb[0].mxu0
    %v1031 = vadd.f32 0.0, %v1030
    %1032 = vmatprep.mubr.bf16.mxu0 0
    %1033 = vmatmul.mubr.bf16.gmra.mrb[0].mxu0 %v761
    %v1034 = vpop.f32.mrb[0].mxu0
    %v1035 = vadd.f32 0.0, %v1034
    %v1036 = vpop.f32.mrb[0].mxu0
    %v1037 = vadd.f32 0.0, %v1036
    %v1038 = vpop.f32.mrb[0].mxu0
    %v1039 = vadd.f32 0.0, %v1038
    %v1040 = vpop.f32.mrb[0].mxu0
    %v1041 = vadd.f32 0.0, %v1040
    %1042 = vdwg.mxu0
    %1043 = vmatprep.subr.bf16.mxu0 %v869
    %1044 = vmatpush1.bf16.msra.mxu0 %v868
    %1045 = vmatprep.subr.bf16.mxu0 %v873
    %1046 = vmatpush1.bf16.msra.mxu0 %v872
    %1047 = vmatprep.subr.bf16.mxu0 %v877
    %1048 = vmatpush1.bf16.msra.mxu0 %v876
    %1049 = vmatprep.subr.bf16.mxu0 %v881
    %1050 = vmatpush1.bf16.msra.mxu0 %v880
    %1051 = vmatprep.subr.bf16.mxu0 %v885
    %1052 = vmatpush1.bf16.msra.mxu0 %v884
    %1053 = vmatprep.subr.bf16.mxu0 %v889
    %1054 = vmatpush1.bf16.msra.mxu0 %v888
    %1055 = vmatprep.subr.bf16.mxu0 %v893
    %1056 = vmatpush1.bf16.msra.mxu0 %v892
    %1057 = vmatprep.subr.bf16.mxu0 %v897
    %1058 = vmatpush1.bf16.msra.mxu0 %v896
    %1059 = vmatprep.subr.bf16.mxu0 0
    %1060 = vmatpush1.bf16.msra.mxu0 0
    %1061 = vmatprep.subr.bf16.mxu0 0
    %1062 = vmatpush1.bf16.msra.mxu0 0
    %1063 = vmatprep.subr.bf16.mxu0 0
    %1064 = vmatpush1.bf16.msra.mxu0 0
    %1065 = vmatprep.subr.bf16.mxu0 0
    %1066 = vmatpush1.bf16.msra.mxu0 0
    %1067 = vmatprep.subr.bf16.mxu0 0
    %1068 = vmatpush1.bf16.msra.mxu0 0
    %1069 = vmatprep.subr.bf16.mxu0 0
    %1070 = vmatpush1.bf16.msra.mxu0 0
    %1071 = vmatprep.subr.bf16.mxu0 0
    %1072 = vmatpush1.bf16.msra.mxu0 0
    %1073 = vmatprep.subr.bf16.mxu0 0
    %1074 = vmatpush1.bf16.msra.mxu0 0
    %1075 = vmatprep.mubr.bf16.mxu0 0
    %1076 = vmatmul.mubr.bf16.gmra.mrb[0].mxu0 %v754
    %v1077 = vpop.f32.mrb[0].mxu0
    %v1078 = vadd.f32 0.0, %v1077
    %v1079 = vpop.f32.mrb[0].mxu0
    %v1080 = vadd.f32 0.0, %v1079
    %v1081 = vpop.f32.mrb[0].mxu0
    %v1082 = vadd.f32 0.0, %v1081
    %v1083 = vpop.f32.mrb[0].mxu0
    %v1084 = vadd.f32 0.0, %v1083
    %1085 = vmatprep.mubr.bf16.mxu0 0
    %1086 = vmatmul.mubr.bf16.gmra.mrb[0].mxu0 %v755
    %v1087 = vpop.f32.mrb[0].mxu0
    %v1088 = vadd.f32 0.0, %v1087
    %v1089 = vpop.f32.mrb[0].mxu0
    %v1090 = vadd.f32 0.0, %v1089
    %v1091 = vpop.f32.mrb[0].mxu0
    %v1092 = vadd.f32 0.0, %v1091
    %v1093 = vpop.f32.mrb[0].mxu0
    %v1094 = vadd.f32 0.0, %v1093
    %1095 = vmatprep.mubr.bf16.mxu0 0
    %1096 = vmatmul.mubr.bf16.gmra.mrb[0].mxu0 %v756
    %v1097 = vpop.f32.mrb[0].mxu0
    %v1098 = vadd.f32 0.0, %v1097
    %v1099 = vpop.f32.mrb[0].mxu0
    %v1100 = vadd.f32 0.0, %v1099
    %v1101 = vpop.f32.mrb[0].mxu0
    %v1102 = vadd.f32 0.0, %v1101
    %v1103 = vpop.f32.mrb[0].mxu0
    %v1104 = vadd.f32 0.0, %v1103
    %1105 = vmatprep.mubr.bf16.mxu0 0
    %1106 = vmatmul.mubr.bf16.gmra.mrb[0].mxu0 %v757
    %v1107 = vpop.f32.mrb[0].mxu0
    %v1108 = vadd.f32 0.0, %v1107
    %v1109 = vpop.f32.mrb[0].mxu0
    %v1110 = vadd.f32 0.0, %v1109
    %v1111 = vpop.f32.mrb[0].mxu0
    %v1112 = vadd.f32 0.0, %v1111
    %v1113 = vpop.f32.mrb[0].mxu0
    %v1114 = vadd.f32 0.0, %v1113
    %1115 = vmatprep.mubr.bf16.mxu0 0
    %1116 = vmatmul.mubr.bf16.gmra.mrb[0].mxu0 %v758
    %v1117 = vpop.f32.mrb[0].mxu0
    %v1118 = vadd.f32 0.0, %v1117
    %v1119 = vpop.f32.mrb[0].mxu0
    %v1120 = vadd.f32 0.0, %v1119
    %v1121 = vpop.f32.mrb[0].mxu0
    %v1122 = vadd.f32 0.0, %v1121
    %v1123 = vpop.f32.mrb[0].mxu0
    %v1124 = vadd.f32 0.0, %v1123
    %1125 = vmatprep.mubr.bf16.mxu0 0
    %1126 = vmatmul.mubr.bf16.gmra.mrb[0].mxu0 %v759
    %v1127 = vpop.f32.mrb[0].mxu0
    %v1128 = vadd.f32 0.0, %v1127
    %v1129 = vpop.f32.mrb[0].mxu0
    %v1130 = vadd.f32 0.0, %v1129
    %v1131 = vpop.f32.mrb[0].mxu0
    %v1132 = vadd.f32 0.0, %v1131
    %v1133 = vpop.f32.mrb[0].mxu0
    %v1134 = vadd.f32 0.0, %v1133
    %1135 = vmatprep.mubr.bf16.mxu0 0
    %1136 = vmatmul.mubr.bf16.gmra.mrb[0].mxu0 %v760
    %v1137 = vpop.f32.mrb[0].mxu0
    %v1138 = vadd.f32 0.0, %v1137
    %v1139 = vpop.f32.mrb[0].mxu0
    %v1140 = vadd.f32 0.0, %v1139
    %v1141 = vpop.f32.mrb[0].mxu0
    %v1142 = vadd.f32 0.0, %v1141
    %v1143 = vpop.f32.mrb[0].mxu0
    %v1144 = vadd.f32 0.0, %v1143
    %1145 = vmatprep.mubr.bf16.mxu0 0
    %1146 = vmatmul.mubr.bf16.gmra.mrb[0].mxu0 %v761
    %v1147 = vpop.f32.mrb[0].mxu0
    %v1148 = vadd.f32 0.0, %v1147
    %v1149 = vpop.f32.mrb[0].mxu0
    %v1150 = vadd.f32 0.0, %v1149
    %v1151 = vpop.f32.mrb[0].mxu0
    %v1152 = vadd.f32 0.0, %v1151
    %v1153 = vpop.f32.mrb[0].mxu0
    %v1154 = vadd.f32 0.0, %v1153
    %1155 = vdwg.mxu0
    %1156 = vst [vmem:[#allocation7] sm:$0xff] %v965
    %1157 = vst [vmem:[#allocation7 + $0x8] sm:$0xff] %v967
    %1158 = vst [vmem:[#allocation7 + $0x10] sm:$0xff] %v1078
    %1159 = vst [vmem:[#allocation7 + $0x18] sm:$0xff] %v1080
    %1160 = vst [vmem:[#allocation7 + $0x20] sm:$0xff] %v969
    %1161 = vst [vmem:[#allocation7 + $0x28] sm:$0xff] %v971
    %1162 = vst [vmem:[#allocation7 + $0x30] sm:$0xff] %v1082
    %1163 = vst [vmem:[#allocation7 + $0x38] sm:$0xff] %v1084
    %1164 = vst [vmem:[#allocation7 + $0x40] sm:$0xff] %v975
    %1165 = vst [vmem:[#allocation7 + $0x48] sm:$0xff] %v977
    %1166 = vst [vmem:[#allocation7 + $0x50] sm:$0xff] %v1088
    %1167 = vst [vmem:[#allocation7 + $0x58] sm:$0xff] %v1090
    %1168 = vst [vmem:[#allocation7 + $0x60] sm:$0xff] %v979
    %1169 = vst [vmem:[#allocation7 + $0x68] sm:$0xff] %v981
    %1170 = vst [vmem:[#allocation7 + $0x70] sm:$0xff] %v1092
    %1171 = vst [vmem:[#allocation7 + $0x78] sm:$0xff] %v1094
    %1172 = vst [vmem:[#allocation7 + $0x80] sm:$0xff] %v985
    %1173 = vst [vmem:[#allocation7 + $0x88] sm:$0xff] %v987
    %1174 = vst [vmem:[#allocation7 + $0x90] sm:$0xff] %v1098
    %1175 = vst [vmem:[#allocation7 + $0x98] sm:$0xff] %v1100
    %1176 = vst [vmem:[#allocation7 + $0xa0] sm:$0xff] %v989
    %1177 = vst [vmem:[#allocation7 + $0xa8] sm:$0xff] %v991
    %1178 = vst [vmem:[#allocation7 + $0xb0] sm:$0xff] %v1102
    %1179 = vst [vmem:[#allocation7 + $0xb8] sm:$0xff] %v1104
    %1180 = vst [vmem:[#allocation7 + $0xc0] sm:$0xff] %v995
    %1181 = vst [vmem:[#allocation7 + $0xc8] sm:$0xff] %v997
    %1182 = vst [vmem:[#allocation7 + $0xd0] sm:$0xff] %v1108
    %1183 = vst [vmem:[#allocation7 + $0xd8] sm:$0xff] %v1110
    %1184 = vst [vmem:[#allocation7 + $0xe0] sm:$0xff] %v999
    %1185 = vst [vmem:[#allocation7 + $0xe8] sm:$0xff] %v1001
    %1186 = vst [vmem:[#allocation7 + $0xf0] sm:$0xff] %v1112
    %1187 = vst [vmem:[#allocation7 + $0xf8] sm:$0xff] %v1114
    %1188 = vst [vmem:[#allocation7 + $0x100] sm:$0xff] %v1005
    %1189 = vst [vmem:[#allocation7 + $0x108] sm:$0xff] %v1007
    %1190 = vst [vmem:[#allocation7 + $0x110] sm:$0xff] %v1118
    %1191 = vst [vmem:[#allocation7 + $0x118] sm:$0xff] %v1120
    %1192 = vst [vmem:[#allocation7 + $0x120] sm:$0xff] %v1009
    %1193 = vst [vmem:[#allocation7 + $0x128] sm:$0xff] %v1011
    %1194 = vst [vmem:[#allocation7 + $0x130] sm:$0xff] %v1122
    %1195 = vst [vmem:[#allocation7 + $0x138] sm:$0xff] %v1124
    %1196 = vst [vmem:[#allocation7 + $0x140] sm:$0xff] %v1015
    %1197 = vst [vmem:[#allocation7 + $0x148] sm:$0xff] %v1017
    %1198 = vst [vmem:[#allocation7 + $0x150] sm:$0xff] %v1128
    %1199 = vst [vmem:[#allocation7 + $0x158] sm:$0xff] %v1130
    %1200 = vst [vmem:[#allocation7 + $0x160] sm:$0xff] %v1019
    %1201 = vst [vmem:[#allocation7 + $0x168] sm:$0xff] %v1021
    %1202 = vst [vmem:[#allocation7 + $0x170] sm:$0xff] %v1132
    %1203 = vst [vmem:[#allocation7 + $0x178] sm:$0xff] %v1134
    %1204 = vst [vmem:[#allocation7 + $0x180] sm:$0xff] %v1025
    %1205 = vst [vmem:[#allocation7 + $0x188] sm:$0xff] %v1027
    %1206 = vst [vmem:[#allocation7 + $0x190] sm:$0xff] %v1138
    %1207 = vst [vmem:[#allocation7 + $0x198] sm:$0xff] %v1140
    %1208 = vst [vmem:[#allocation7 + $0x1a0] sm:$0xff] %v1029
    %1209 = vst [vmem:[#allocation7 + $0x1a8] sm:$0xff] %v1031
    %1210 = vst [vmem:[#allocation7 + $0x1b0] sm:$0xff] %v1142
    %1211 = vst [vmem:[#allocation7 + $0x1b8] sm:$0xff] %v1144
    %1212 = vst [vmem:[#allocation7 + $0x1c0] sm:$0xff] %v1035
    %1213 = vst [vmem:[#allocation7 + $0x1c8] sm:$0xff] %v1037
    %1214 = vst [vmem:[#allocation7 + $0x1d0] sm:$0xff] %v1148
    %1215 = vst [vmem:[#allocation7 + $0x1d8] sm:$0xff] %v1150
    %1216 = vst [vmem:[#allocation7 + $0x1e0] sm:$0xff] %v1039
    %1217 = vst [vmem:[#allocation7 + $0x1e8] sm:$0xff] %v1041
    %1218 = vst [vmem:[#allocation7 + $0x1f0] sm:$0xff] %v1152
    %1219 = vst [vmem:[#allocation7 + $0x1f8] sm:$0xff] %v1154
    %v1220 = vld [vmem:[#allocation13] sm:$0xff]
    %v1221 = vld [vmem:[#allocation13 + $0x8] sm:$0xff]
    %v1222 = vld [vmem:[#allocation13 + $0x10] sm:$0xff]
    %v1223 = vld [vmem:[#allocation13 + $0x18] sm:$0xff]
    %v1224 = vld [vmem:[#allocation13 + $0x20] sm:$0xff]
    %v1225 = vld [vmem:[#allocation13 + $0x28] sm:$0xff]
    %v1226 = vld [vmem:[#allocation13 + $0x30] sm:$0xff]
    %v1227 = vld [vmem:[#allocation13 + $0x38] sm:$0xff]
    %v1228 = vld [vmem:[#allocation13 + $0x40] sm:$0xff]
    %v1229 = vld [vmem:[#allocation13 + $0x48] sm:$0xff]
    %v1230 = vld [vmem:[#allocation13 + $0x50] sm:$0xff]
    %v1231 = vld [vmem:[#allocation13 + $0x58] sm:$0xff]
    %v1232 = vld [vmem:[#allocation13 + $0x60] sm:$0xff]
    %v1233 = vld [vmem:[#allocation13 + $0x68] sm:$0xff]
    %v1234 = vld [vmem:[#allocation13 + $0x70] sm:$0xff]
    %v1235 = vld [vmem:[#allocation13 + $0x78] sm:$0xff]
    %v1236 = vld [vmem:[#allocation13 + $0x80] sm:$0xff]
    %v1237 = vld [vmem:[#allocation13 + $0x88] sm:$0xff]
    %v1238 = vld [vmem:[#allocation13 + $0x90] sm:$0xff]
    %v1239 = vld [vmem:[#allocation13 + $0x98] sm:$0xff]
    %v1240 = vld [vmem:[#allocation13 + $0xa0] sm:$0xff]
    %v1241 = vld [vmem:[#allocation13 + $0xa8] sm:$0xff]
    %v1242 = vld [vmem:[#allocation13 + $0xb0] sm:$0xff]
    %v1243 = vld [vmem:[#allocation13 + $0xb8] sm:$0xff]
    %v1244 = vld [vmem:[#allocation13 + $0xc0] sm:$0xff]
    %v1245 = vld [vmem:[#allocation13 + $0xc8] sm:$0xff]
    %v1246 = vld [vmem:[#allocation13 + $0xd0] sm:$0xff]
    %v1247 = vld [vmem:[#allocation13 + $0xd8] sm:$0xff]
    %v1248 = vld [vmem:[#allocation13 + $0xe0] sm:$0xff]
    %v1249 = vld [vmem:[#allocation13 + $0xe8] sm:$0xff]
    %v1250 = vld [vmem:[#allocation13 + $0xf0] sm:$0xff]
    %v1251 = vld [vmem:[#allocation13 + $0xf8] sm:$0xff]
    %v1252 = vld [vmem:[#allocation14] sm:$0xff]
    %v1253 = vld [vmem:[#allocation14 + $0x8] sm:$0xff]
    %v1254 = vld [vmem:[#allocation14 + $0x10] sm:$0xff]
    %v1255 = vld [vmem:[#allocation14 + $0x18] sm:$0xff]
    %v1256 = vld [vmem:[#allocation14 + $0x20] sm:$0xff]
    %v1257 = vld [vmem:[#allocation14 + $0x28] sm:$0xff]
    %v1258 = vld [vmem:[#allocation14 + $0x30] sm:$0xff]
    %v1259 = vld [vmem:[#allocation14 + $0x38] sm:$0xff]
    %v1260 = vld [vmem:[#allocation14 + $0x40] sm:$0xff]
    %v1261 = vld [vmem:[#allocation14 + $0x48] sm:$0xff]
    %v1262 = vld [vmem:[#allocation14 + $0x50] sm:$0xff]
    %v1263 = vld [vmem:[#allocation14 + $0x58] sm:$0xff]
    %v1264 = vld [vmem:[#allocation14 + $0x60] sm:$0xff]
    %v1265 = vld [vmem:[#allocation14 + $0x68] sm:$0xff]
    %v1266 = vld [vmem:[#allocation14 + $0x70] sm:$0xff]
    %v1267 = vld [vmem:[#allocation14 + $0x78] sm:$0xff]
    %v1268 = vld [vmem:[#allocation14 + $0x80] sm:$0xff]
    %v1269 = vld [vmem:[#allocation14 + $0x88] sm:$0xff]
    %v1270 = vld [vmem:[#allocation14 + $0x90] sm:$0xff]
    %v1271 = vld [vmem:[#allocation14 + $0x98] sm:$0xff]
    %v1272 = vld [vmem:[#allocation14 + $0xa0] sm:$0xff]
    %v1273 = vld [vmem:[#allocation14 + $0xa8] sm:$0xff]
    %v1274 = vld [vmem:[#allocation14 + $0xb0] sm:$0xff]
    %v1275 = vld [vmem:[#allocation14 + $0xb8] sm:$0xff]
    %v1276 = vld [vmem:[#allocation14 + $0xc0] sm:$0xff]
    %v1277 = vld [vmem:[#allocation14 + $0xc8] sm:$0xff]
    %v1278 = vld [vmem:[#allocation14 + $0xd0] sm:$0xff]
    %v1279 = vld [vmem:[#allocation14 + $0xd8] sm:$0xff]
    %v1280 = vld [vmem:[#allocation14 + $0xe0] sm:$0xff]
    %v1281 = vld [vmem:[#allocation14 + $0xe8] sm:$0xff]
    %v1282 = vld [vmem:[#allocation14 + $0xf0] sm:$0xff]
    %v1283 = vld [vmem:[#allocation14 + $0xf8] sm:$0xff]
    %v1284 = vld [vmem:[#allocation16] sm:$0xff]
    %v1285 = vld [vmem:[#allocation16 + $0x8] sm:$0xff]
    %v1286 = vld [vmem:[#allocation16 + $0x10] sm:$0xff]
    %v1287 = vld [vmem:[#allocation16 + $0x18] sm:$0xff]
    %v1288 = vld [vmem:[#allocation16 + $0x20] sm:$0xff]
    %v1289 = vld [vmem:[#allocation16 + $0x28] sm:$0xff]
    %v1290 = vld [vmem:[#allocation16 + $0x30] sm:$0xff]
    %v1291 = vld [vmem:[#allocation16 + $0x38] sm:$0xff]
    %v1292 = vld [vmem:[#allocation17] sm:$0xff]
    %v1293 = vld [vmem:[#allocation17 + $0x8] sm:$0xff]
    %v1294 = vld [vmem:[#allocation17 + $0x10] sm:$0xff]
    %v1295 = vld [vmem:[#allocation17 + $0x18] sm:$0xff]
    %v1296 = vld [vmem:[#allocation17 + $0x20] sm:$0xff]
    %v1297 = vld [vmem:[#allocation17 + $0x28] sm:$0xff]
    %v1298 = vld [vmem:[#allocation17 + $0x30] sm:$0xff]
    %v1299 = vld [vmem:[#allocation17 + $0x38] sm:$0xff]
    %v1300 = vld [vmem:[%s2] sm:$0xff]
    %v1301 = vld [vmem:[%s2 + $0x8] sm:$0xff]
    %v1302 = vld [vmem:[%s2 + $0x10] sm:$0xff]
    %v1303 = vld [vmem:[%s2 + $0x18] sm:$0xff]
    %v1304 = vld [vmem:[%s2 + $0x20] sm:$0xff]
    %v1305 = vld [vmem:[%s2 + $0x28] sm:$0xff]
    %v1306 = vld [vmem:[%s2 + $0x30] sm:$0xff]
    %v1307 = vld [vmem:[%s2 + $0x38] sm:$0xff]
    %v1308 = vld [vmem:[%s2 + $0x40] sm:$0xff]
    %v1309 = vld [vmem:[%s2 + $0x48] sm:$0xff]
    %v1310 = vld [vmem:[%s2 + $0x50] sm:$0xff]
    %v1311 = vld [vmem:[%s2 + $0x58] sm:$0xff]
    %v1312 = vld [vmem:[%s2 + $0x60] sm:$0xff]
    %v1313 = vld [vmem:[%s2 + $0x68] sm:$0xff]
    %v1314 = vld [vmem:[%s2 + $0x70] sm:$0xff]
    %v1315 = vld [vmem:[%s2 + $0x78] sm:$0xff]
    %v1316 = vld [vmem:[#allocation2] sm:$0xff]
    %v1317 = vld [vmem:[#allocation2 + $0x8] sm:$0xff]
    %v1318 = vld [vmem:[#allocation3] sm:$0xff]
    %v1319 = vld [vmem:[#allocation3 + $0x8] sm:$0xff]
    %v1320 = vld [vmem:[#allocation4] sm:$0xff]
    %v1321 = vld [vmem:[#allocation4 + $0x8] sm:$0xff]
    %v1322 = vld [vmem:[#allocation5] sm:$0xff]
    %v1323 = vld [vmem:[#allocation5 + $0x8] sm:$0xff]
    %v1324 = vld [vmem:[#allocation6] sm:$0xff]
    %v1325 = vld [vmem:[#allocation6 + $0x8] sm:$0xff]
    %v1326 = vld [vmem:[#allocation6 + $0x10] sm:$0xff]
    %v1327 = vld [vmem:[#allocation6 + $0x18] sm:$0xff]
    %v1328 = vld [vmem:[#allocation6 + $0x20] sm:$0xff]
    %v1329 = vld [vmem:[#allocation6 + $0x28] sm:$0xff]
    %v1330 = vld [vmem:[#allocation6 + $0x30] sm:$0xff]
    %v1331 = vld [vmem:[#allocation6 + $0x38] sm:$0xff]
    %v1332 = vadd.f32 %v1324, %v1284
    %v1333 = vadd.f32 %v1325, %v1285
    %v1334 = vadd.f32 %v1326, %v1286
    %v1335 = vadd.f32 %v1327, %v1287
    %v1336 = vadd.f32 %v1328, %v1288
    %v1337 = vadd.f32 %v1329, %v1289
    %v1338 = vadd.f32 %v1330, %v1290
    %v1339 = vadd.f32 %v1331, %v1291
    %v1340 = vpack.c.bf16 %v1317, %v1316
    %v1373 = vunpack.c.l.b16 %v1220
    %v1374 = vunpack.c.h.b16 %v1220
    %v1375 = vunpack.c.l.b16 %v1221
    %v1376 = vunpack.c.h.b16 %v1221
    %v1377 = vunpack.c.l.b16 %v1222
    %v1378 = vunpack.c.h.b16 %v1222
    %v1379 = vunpack.c.l.b16 %v1223
    %v1380 = vunpack.c.h.b16 %v1223
    %v1381 = vunpack.c.l.b16 %v1224
    %v1382 = vunpack.c.h.b16 %v1224
    %v1383 = vunpack.c.l.b16 %v1225
    %v1384 = vunpack.c.h.b16 %v1225
    %v1385 = vunpack.c.l.b16 %v1226
    %v1386 = vunpack.c.h.b16 %v1226
    %v1387 = vunpack.c.l.b16 %v1227
    %v1388 = vunpack.c.h.b16 %v1227
    %v1389 = vunpack.c.l.b16 %v1228
    %v1390 = vunpack.c.h.b16 %v1228
    %v1391 = vunpack.c.l.b16 %v1229
    %v1392 = vunpack.c.h.b16 %v1229
    %v1393 = vunpack.c.l.b16 %v1230
    %v1394 = vunpack.c.h.b16 %v1230
    %v1395 = vunpack.c.l.b16 %v1231
    %v1396 = vunpack.c.h.b16 %v1231
    %v1397 = vunpack.c.l.b16 %v1232
    %v1398 = vunpack.c.h.b16 %v1232
    %v1399 = vunpack.c.l.b16 %v1233
    %v1400 = vunpack.c.h.b16 %v1233
    %v1401 = vunpack.c.l.b16 %v1234
    %v1402 = vunpack.c.h.b16 %v1234
    %v1403 = vunpack.c.l.b16 %v1235
    %v1404 = vunpack.c.h.b16 %v1235
    %v1405 = vunpack.c.l.b16 %v1236
    %v1406 = vunpack.c.h.b16 %v1236
    %v1407 = vunpack.c.l.b16 %v1237
    %v1408 = vunpack.c.h.b16 %v1237
    %v1409 = vunpack.c.l.b16 %v1238
    %v1410 = vunpack.c.h.b16 %v1238
    %v1411 = vunpack.c.l.b16 %v1239
    %v1412 = vunpack.c.h.b16 %v1239
    %v1413 = vunpack.c.l.b16 %v1240
    %v1414 = vunpack.c.h.b16 %v1240
    %v1415 = vunpack.c.l.b16 %v1241
    %v1416 = vunpack.c.h.b16 %v1241
    %v1417 = vunpack.c.l.b16 %v1242
    %v1418 = vunpack.c.h.b16 %v1242
    %v1419 = vunpack.c.l.b16 %v1243
    %v1420 = vunpack.c.h.b16 %v1243
    %v1421 = vunpack.c.l.b16 %v1244
    %v1422 = vunpack.c.h.b16 %v1244
    %v1423 = vunpack.c.l.b16 %v1245
    %v1424 = vunpack.c.h.b16 %v1245
    %v1425 = vunpack.c.l.b16 %v1246
    %v1426 = vunpack.c.h.b16 %v1246
    %v1427 = vunpack.c.l.b16 %v1247
    %v1428 = vunpack.c.h.b16 %v1247
    %v1429 = vunpack.c.l.b16 %v1248
    %v1430 = vunpack.c.h.b16 %v1248
    %v1431 = vunpack.c.l.b16 %v1249
    %v1432 = vunpack.c.h.b16 %v1249
    %v1433 = vunpack.c.l.b16 %v1250
    %v1434 = vunpack.c.h.b16 %v1250
    %v1435 = vunpack.c.l.b16 %v1251
    %v1436 = vunpack.c.h.b16 %v1251
    %v1437 = vpack.c.b16 %v1377, %v1373
    %v1438 = vpack.c.b16 %v1378, %v1374
    %v1439 = vpack.c.b16 %v1379, %v1375
    %v1440 = vpack.c.b16 %v1380, %v1376
    %v1441 = vpack.c.b16 %v1385, %v1381
    %v1442 = vpack.c.b16 %v1386, %v1382
    %v1443 = vpack.c.b16 %v1387, %v1383
    %v1444 = vpack.c.b16 %v1388, %v1384
    %v1445 = vpack.c.b16 %v1393, %v1389
    %v1446 = vpack.c.b16 %v1394, %v1390
    %v1447 = vpack.c.b16 %v1395, %v1391
    %v1448 = vpack.c.b16 %v1396, %v1392
    %v1449 = vpack.c.b16 %v1401, %v1397
    %v1450 = vpack.c.b16 %v1402, %v1398
    %v1451 = vpack.c.b16 %v1403, %v1399
    %v1452 = vpack.c.b16 %v1404, %v1400
    %v1453 = vpack.c.b16 %v1409, %v1405
    %v1454 = vpack.c.b16 %v1410, %v1406
    %v1455 = vpack.c.b16 %v1411, %v1407
    %v1456 = vpack.c.b16 %v1412, %v1408
    %v1457 = vpack.c.b16 %v1417, %v1413
    %v1458 = vpack.c.b16 %v1418, %v1414
    %v1459 = vpack.c.b16 %v1419, %v1415
    %v1460 = vpack.c.b16 %v1420, %v1416
    %v1461 = vpack.c.b16 %v1425, %v1421
    %v1462 = vpack.c.b16 %v1426, %v1422
    %v1463 = vpack.c.b16 %v1427, %v1423
    %v1464 = vpack.c.b16 %v1428, %v1424
    %v1465 = vpack.c.b16 %v1433, %v1429
    %v1466 = vpack.c.b16 %v1434, %v1430
    %v1467 = vpack.c.b16 %v1435, %v1431
    %v1468 = vpack.c.b16 %v1436, %v1432
    %1501 = vmatprep.subr.bf16.mxu0 %v1438
    %1502 = vmatpush1.bf16.msra.mxu0 %v1437
    %1503 = vmatprep.subr.bf16.mxu0 %v1442
    %1504 = vmatpush1.bf16.msra.mxu0 %v1441
    %1505 = vmatprep.subr.bf16.mxu0 %v1446
    %1506 = vmatpush1.bf16.msra.mxu0 %v1445
    %1507 = vmatprep.subr.bf16.mxu0 %v1450
    %1508 = vmatpush1.bf16.msra.mxu0 %v1449
    %1509 = vmatprep.subr.bf16.mxu0 %v1454
    %1510 = vmatpush1.bf16.msra.mxu0 %v1453
    %1511 = vmatprep.subr.bf16.mxu0 %v1458
    %1512 = vmatpush1.bf16.msra.mxu0 %v1457
    %1513 = vmatprep.subr.bf16.mxu0 %v1462
    %1514 = vmatpush1.bf16.msra.mxu0 %v1461
    %1515 = vmatprep.subr.bf16.mxu0 %v1466
    %1516 = vmatpush1.bf16.msra.mxu0 %v1465
    %1517 = vmatprep.subr.bf16.mxu0 0
    %1518 = vmatpush1.bf16.msra.mxu0 0
    %1519 = vmatprep.subr.bf16.mxu0 0
    %1520 = vmatpush1.bf16.msra.mxu0 0
    %1521 = vmatprep.subr.bf16.mxu0 0
    %1522 = vmatpush1.bf16.msra.mxu0 0
    %1523 = vmatprep.subr.bf16.mxu0 0
    %1524 = vmatpush1.bf16.msra.mxu0 0
    %1525 = vmatprep.subr.bf16.mxu0 0
    %1526 = vmatpush1.bf16.msra.mxu0 0
    %1527 = vmatprep.subr.bf16.mxu0 0
    %1528 = vmatpush1.bf16.msra.mxu0 0
    %1529 = vmatprep.subr.bf16.mxu0 0
    %1530 = vmatpush1.bf16.msra.mxu0 0
    %1531 = vmatprep.subr.bf16.mxu0 0
    %1532 = vmatpush1.bf16.msra.mxu0 0
    %1533 = vmatprep.mubr.bf16.mxu0 0
    %1534 = vmatmul.mubr.bf16.gmra.mrb[0].mxu0 %v1340
    %v1535 = vpop.f32.mrb[0].mxu0
    %v1536 = vadd.f32 0.0, %v1535
    %v1537 = vpop.f32.mrb[0].mxu0
    %v1538 = vadd.f32 0.0, %v1537
    %v1539 = vpop.f32.mrb[0].mxu0
    %v1540 = vadd.f32 0.0, %v1539
    %v1541 = vpop.f32.mrb[0].mxu0
    %v1542 = vadd.f32 0.0, %v1541
    %1543 = vdwg.mxu0
    %1544 = vmatprep.subr.bf16.mxu0 %v1440
    %1545 = vmatpush1.bf16.msra.mxu0 %v1439
    %1546 = vmatprep.subr.bf16.mxu0 %v1444
    %1547 = vmatpush1.bf16.msra.mxu0 %v1443
    %1548 = vmatprep.subr.bf16.mxu0 %v1448
    %1549 = vmatpush1.bf16.msra.mxu0 %v1447
    %1550 = vmatprep.subr.bf16.mxu0 %v1452
    %1551 = vmatpush1.bf16.msra.mxu0 %v1451
    %1552 = vmatprep.subr.bf16.mxu0 %v1456
    %1553 = vmatpush1.bf16.msra.mxu0 %v1455
    %1554 = vmatprep.subr.bf16.mxu0 %v1460
    %1555 = vmatpush1.bf16.msra.mxu0 %v1459
    %1556 = vmatprep.subr.bf16.mxu0 %v1464
    %1557 = vmatpush1.bf16.msra.mxu0 %v1463
    %1558 = vmatprep.subr.bf16.mxu0 %v1468
    %1559 = vmatpush1.bf16.msra.mxu0 %v1467
    %1560 = vmatprep.subr.bf16.mxu0 0
    %1561 = vmatpush1.bf16.msra.mxu0 0
    %1562 = vmatprep.subr.bf16.mxu0 0
    %1563 = vmatpush1.bf16.msra.mxu0 0
    %1564 = vmatprep.subr.bf16.mxu0 0
    %1565 = vmatpush1.bf16.msra.mxu0 0
    %1566 = vmatprep.subr.bf16.mxu0 0
    %1567 = vmatpush1.bf16.msra.mxu0 0
    %1568 = vmatprep.subr.bf16.mxu0 0
    %1569 = vmatpush1.bf16.msra.mxu0 0
    %1570 = vmatprep.subr.bf16.mxu0 0
    %1571 = vmatpush1.bf16.msra.mxu0 0
    %1572 = vmatprep.subr.bf16.mxu0 0
    %1573 = vmatpush1.bf16.msra.mxu0 0
    %1574 = vmatprep.subr.bf16.mxu0 0
    %1575 = vmatpush1.bf16.msra.mxu0 0
    %1576 = vmatprep.mubr.bf16.mxu0 0
    %1577 = vmatmul.mubr.bf16.gmra.mrb[0].mxu0 %v1340
    %v1578 = vpop.f32.mrb[0].mxu0
    %v1579 = vadd.f32 0.0, %v1578
    %v1580 = vpop.f32.mrb[0].mxu0
    %v1581 = vadd.f32 0.0, %v1580
    %v1582 = vpop.f32.mrb[0].mxu0
    %v1583 = vadd.f32 0.0, %v1582
    %v1584 = vpop.f32.mrb[0].mxu0
    %v1585 = vadd.f32 0.0, %v1584
    %1586 = vdwg.mxu0
    %v1587 = vadd.f32 %v1332, %v1536
    %v1588 = vadd.f32 %v1333, %v1538
    %v1589 = vadd.f32 %v1334, %v1579
    %v1590 = vadd.f32 %v1335, %v1581
    %v1591 = vadd.f32 %v1336, %v1540
    %v1592 = vadd.f32 %v1337, %v1542
    %v1593 = vadd.f32 %v1338, %v1583
    %v1594 = vadd.f32 %v1339, %v1585
    %v1595 = vxor.u32 %v1587, 2147483648
    %v1596 = vxor.u32 %v1591, 2147483648
    %v1597 = vmul.f32 %v1595, 1.442695
    %v1598 = vpow.pop %v1597
    %v1599 = vmul.f32 %v1596, 1.442695
    %v1600 = vpow.pop %v1599
    %v1601 = vadd.f32 %v1598, 1.0
    %v1602 = vadd.f32 %v1600, 1.0
    %v1603 = vrcp.pop %v1601
    %v1604 = vmul.f32 1.0, %v1603
    %v1605 = vrcp.pop %v1602
    %v1606 = vmul.f32 1.0, %v1605
    %v1607 = vxor.u32 %v1588, 2147483648
    %v1608 = vxor.u32 %v1592, 2147483648
    %v1609 = vmul.f32 %v1607, 1.442695
    %v1610 = vpow.pop %v1609
    %v1611 = vmul.f32 %v1608, 1.442695
    %v1612 = vpow.pop %v1611
    %v1613 = vadd.f32 %v1610, 1.0
    %v1614 = vadd.f32 %v1612, 1.0
    %v1615 = vrcp.pop %v1613
    %v1616 = vmul.f32 1.0, %v1615
    %v1617 = vrcp.pop %v1614
    %v1618 = vmul.f32 1.0, %v1617
    %v1619 = vtanh.pop %v1589
    %v1620 = vtanh.pop %v1593
    %v1621 = vxor.u32 %v1590, 2147483648
    %v1622 = vxor.u32 %v1594, 2147483648
    %v1623 = vmul.f32 %v1621, 1.442695
    %v1624 = vpow.pop %v1623
    %v1625 = vmul.f32 %v1622, 1.442695
    %v1626 = vpow.pop %v1625
    %v1627 = vadd.f32 %v1624, 1.0
    %v1628 = vadd.f32 %v1626, 1.0
    %v1629 = vrcp.pop %v1627
    %v1630 = vmul.f32 1.0, %v1629
    %v1631 = vrcp.pop %v1628
    %v1632 = vmul.f32 1.0, %v1631
    %v1633 = vmul.f32 %v1616, %v1320
    %v1634 = vmul.f32 %v1618, %v1321
    %v1635 = vmul.f32 %v1604, %v1619
    %v1636 = vmul.f32 %v1606, %v1620
    %v1637 = vadd.f32 %v1633, %v1635
    %v1638 = vadd.f32 %v1634, %v1636
    %v1639 = vtanh.pop %v1637
    %v1640 = vtanh.pop %v1638
    %v1641 = vmul.f32 %v1630, %v1639
    %v1642 = vmul.f32 %v1632, %v1640
    %1644 = vset.pattern.permute.xlu0 0
    %1645 = vperm.xlu0 %1644, %v1300
    %v1646 = vpop.permute.xlu0 %1645
    %1649 = vset.pattern.permute.xlu0 0
    %1650 = vperm.xlu0 %1649, %v1301
    %v1651 = vpop.permute.xlu0 %1650
    %v1653 = vmul.f32 %v1641, %v1646
    %v1654 = vmul.f32 %v1642, %v1651
    %v1655 = vpack.c.bf16 %v1654, %v1653
    %v1657 = vunpack.c.l.b16 %v1655
    %v1658 = vunpack.c.h.b16 %v1655
    %v1659 = vpack.c.b16 %v1657, %v1657
    %v1660 = vpack.c.b16 %v1658, %v1658
    %1663 = vst [vmem:[#allocation19] sm:$0xf] %v1659
    %1664 = vst [vmem:[#allocation19 + $0x8] sm:$0xf] %v1660
    %v1665 = vld [vmem:[#allocation7] sm:$0xff]
    %v1666 = vld [vmem:[#allocation7 + $0x8] sm:$0xff]
    %v1667 = vld [vmem:[#allocation7 + $0x10] sm:$0xff]
    %v1668 = vld [vmem:[#allocation7 + $0x18] sm:$0xff]
    %v1669 = vld [vmem:[#allocation7 + $0x20] sm:$0xff]
    %v1670 = vld [vmem:[#allocation7 + $0x28] sm:$0xff]
    %v1671 = vld [vmem:[#allocation7 + $0x30] sm:$0xff]
    %v1672 = vld [vmem:[#allocation7 + $0x38] sm:$0xff]
    %v1673 = vadd.f32 %v1665, %v1292
    %v1674 = vadd.f32 %v1666, %v1293
    %v1675 = vadd.f32 %v1667, %v1294
    %v1676 = vadd.f32 %v1668, %v1295
    %v1677 = vadd.f32 %v1669, %v1296
    %v1678 = vadd.f32 %v1670, %v1297
    %v1679 = vadd.f32 %v1671, %v1298
    %v1680 = vadd.f32 %v1672, %v1299
    %v1681 = vpack.c.bf16 %v1319, %v1318
    %v1714 = vunpack.c.l.b16 %v1252
    %v1715 = vunpack.c.h.b16 %v1252
    %v1716 = vunpack.c.l.b16 %v1253
    %v1717 = vunpack.c.h.b16 %v1253
    %v1718 = vunpack.c.l.b16 %v1254
    %v1719 = vunpack.c.h.b16 %v1254
    %v1720 = vunpack.c.l.b16 %v1255
    %v1721 = vunpack.c.h.b16 %v1255
    %v1722 = vunpack.c.l.b16 %v1256
    %v1723 = vunpack.c.h.b16 %v1256
    %v1724 = vunpack.c.l.b16 %v1257
    %v1725 = vunpack.c.h.b16 %v1257
    %v1726 = vunpack.c.l.b16 %v1258
    %v1727 = vunpack.c.h.b16 %v1258
    %v1728 = vunpack.c.l.b16 %v1259
    %v1729 = vunpack.c.h.b16 %v1259
    %v1730 = vunpack.c.l.b16 %v1260
    %v1731 = vunpack.c.h.b16 %v1260
    %v1732 = vunpack.c.l.b16 %v1261
    %v1733 = vunpack.c.h.b16 %v1261
    %v1734 = vunpack.c.l.b16 %v1262
    %v1735 = vunpack.c.h.b16 %v1262
    %v1736 = vunpack.c.l.b16 %v1263
    %v1737 = vunpack.c.h.b16 %v1263
    %v1738 = vunpack.c.l.b16 %v1264
    %v1739 = vunpack.c.h.b16 %v1264
    %v1740 = vunpack.c.l.b16 %v1265
    %v1741 = vunpack.c.h.b16 %v1265
    %v1742 = vunpack.c.l.b16 %v1266
    %v1743 = vunpack.c.h.b16 %v1266
    %v1744 = vunpack.c.l.b16 %v1267
    %v1745 = vunpack.c.h.b16 %v1267
    %v1746 = vunpack.c.l.b16 %v1268
    %v1747 = vunpack.c.h.b16 %v1268
    %v1748 = vunpack.c.l.b16 %v1269
    %v1749 = vunpack.c.h.b16 %v1269
    %v1750 = vunpack.c.l.b16 %v1270
    %v1751 = vunpack.c.h.b16 %v1270
    %v1752 = vunpack.c.l.b16 %v1271
    %v1753 = vunpack.c.h.b16 %v1271
    %v1754 = vunpack.c.l.b16 %v1272
    %v1755 = vunpack.c.h.b16 %v1272
    %v1756 = vunpack.c.l.b16 %v1273
    %v1757 = vunpack.c.h.b16 %v1273
    %v1758 = vunpack.c.l.b16 %v1274
    %v1759 = vunpack.c.h.b16 %v1274
    %v1760 = vunpack.c.l.b16 %v1275
    %v1761 = vunpack.c.h.b16 %v1275
    %v1762 = vunpack.c.l.b16 %v1276
    %v1763 = vunpack.c.h.b16 %v1276
    %v1764 = vunpack.c.l.b16 %v1277
    %v1765 = vunpack.c.h.b16 %v1277
    %v1766 = vunpack.c.l.b16 %v1278
    %v1767 = vunpack.c.h.b16 %v1278
    %v1768 = vunpack.c.l.b16 %v1279
    %v1769 = vunpack.c.h.b16 %v1279
    %v1770 = vunpack.c.l.b16 %v1280
    %v1771 = vunpack.c.h.b16 %v1280
    %v1772 = vunpack.c.l.b16 %v1281
    %v1773 = vunpack.c.h.b16 %v1281
    %v1774 = vunpack.c.l.b16 %v1282
    %v1775 = vunpack.c.h.b16 %v1282
    %v1776 = vunpack.c.l.b16 %v1283
    %v1777 = vunpack.c.h.b16 %v1283
    %v1778 = vpack.c.b16 %v1718, %v1714
    %v1779 = vpack.c.b16 %v1719, %v1715
    %v1780 = vpack.c.b16 %v1720, %v1716
    %v1781 = vpack.c.b16 %v1721, %v1717
    %v1782 = vpack.c.b16 %v1726, %v1722
    %v1783 = vpack.c.b16 %v1727, %v1723
    %v1784 = vpack.c.b16 %v1728, %v1724
    %v1785 = vpack.c.b16 %v1729, %v1725
    %v1786 = vpack.c.b16 %v1734, %v1730
    %v1787 = vpack.c.b16 %v1735, %v1731
    %v1788 = vpack.c.b16 %v1736, %v1732
    %v1789 = vpack.c.b16 %v1737, %v1733
    %v1790 = vpack.c.b16 %v1742, %v1738
    %v1791 = vpack.c.b16 %v1743, %v1739
    %v1792 = vpack.c.b16 %v1744, %v1740
    %v1793 = vpack.c.b16 %v1745, %v1741
    %v1794 = vpack.c.b16 %v1750, %v1746
    %v1795 = vpack.c.b16 %v1751, %v1747
    %v1796 = vpack.c.b16 %v1752, %v1748
    %v1797 = vpack.c.b16 %v1753, %v1749
    %v1798 = vpack.c.b16 %v1758, %v1754
    %v1799 = vpack.c.b16 %v1759, %v1755
    %v1800 = vpack.c.b16 %v1760, %v1756
    %v1801 = vpack.c.b16 %v1761, %v1757
    %v1802 = vpack.c.b16 %v1766, %v1762
    %v1803 = vpack.c.b16 %v1767, %v1763
    %v1804 = vpack.c.b16 %v1768, %v1764
    %v1805 = vpack.c.b16 %v1769, %v1765
    %v1806 = vpack.c.b16 %v1774, %v1770
    %v1807 = vpack.c.b16 %v1775, %v1771
    %v1808 = vpack.c.b16 %v1776, %v1772
    %v1809 = vpack.c.b16 %v1777, %v1773
    %1842 = vmatprep.subr.bf16.mxu0 %v1779
    %1843 = vmatpush1.bf16.msra.mxu0 %v1778
    %1844 = vmatprep.subr.bf16.mxu0 %v1783
    %1845 = vmatpush1.bf16.msra.mxu0 %v1782
    %1846 = vmatprep.subr.bf16.mxu0 %v1787
    %1847 = vmatpush1.bf16.msra.mxu0 %v1786
    %1848 = vmatprep.subr.bf16.mxu0 %v1791
    %1849 = vmatpush1.bf16.msra.mxu0 %v1790
    %1850 = vmatprep.subr.bf16.mxu0 %v1795
    %1851 = vmatpush1.bf16.msra.mxu0 %v1794
    %1852 = vmatprep.subr.bf16.mxu0 %v1799
    %1853 = vmatpush1.bf16.msra.mxu0 %v1798
    %1854 = vmatprep.subr.bf16.mxu0 %v1803
    %1855 = vmatpush1.bf16.msra.mxu0 %v1802
    %1856 = vmatprep.subr.bf16.mxu0 %v1807
    %1857 = vmatpush1.bf16.msra.mxu0 %v1806
    %1858 = vmatprep.subr.bf16.mxu0 0
    %1859 = vmatpush1.bf16.msra.mxu0 0
    %1860 = vmatprep.subr.bf16.mxu0 0
    %1861 = vmatpush1.bf16.msra.mxu0 0
    %1862 = vmatprep.subr.bf16.mxu0 0
    %1863 = vmatpush1.bf16.msra.mxu0 0
    %1864 = vmatprep.subr.bf16.mxu0 0
    %1865 = vmatpush1.bf16.msra.mxu0 0
    %1866 = vmatprep.subr.bf16.mxu0 0
    %1867 = vmatpush1.bf16.msra.mxu0 0
    %1868 = vmatprep.subr.bf16.mxu0 0
    %1869 = vmatpush1.bf16.msra.mxu0 0
    %1870 = vmatprep.subr.bf16.mxu0 0
    %1871 = vmatpush1.bf16.msra.mxu0 0
    %1872 = vmatprep.subr.bf16.mxu0 0
    %1873 = vmatpush1.bf16.msra.mxu0 0
    %1874 = vmatprep.mubr.bf16.mxu0 0
    %1875 = vmatmul.mubr.bf16.gmra.mrb[0].mxu0 %v1681
    %v1876 = vpop.f32.mrb[0].mxu0
    %v1877 = vadd.f32 0.0, %v1876
    %v1878 = vpop.f32.mrb[0].mxu0
    %v1879 = vadd.f32 0.0, %v1878
    %v1880 = vpop.f32.mrb[0].mxu0
    %v1881 = vadd.f32 0.0, %v1880
    %v1882 = vpop.f32.mrb[0].mxu0
    %v1883 = vadd.f32 0.0, %v1882
    %1884 = vdwg.mxu0
    %1885 = vmatprep.subr.bf16.mxu0 %v1781
    %1886 = vmatpush1.bf16.msra.mxu0 %v1780
    %1887 = vmatprep.subr.bf16.mxu0 %v1785
    %1888 = vmatpush1.bf16.msra.mxu0 %v1784
    %1889 = vmatprep.subr.bf16.mxu0 %v1789
    %1890 = vmatpush1.bf16.msra.mxu0 %v1788
    %1891 = vmatprep.subr.bf16.mxu0 %v1793
    %1892 = vmatpush1.bf16.msra.mxu0 %v1792
    %1893 = vmatprep.subr.bf16.mxu0 %v1797
    %1894 = vmatpush1.bf16.msra.mxu0 %v1796
    %1895 = vmatprep.subr.bf16.mxu0 %v1801
    %1896 = vmatpush1.bf16.msra.mxu0 %v1800
    %1897 = vmatprep.subr.bf16.mxu0 %v1805
    %1898 = vmatpush1.bf16.msra.mxu0 %v1804
    %1899 = vmatprep.subr.bf16.mxu0 %v1809
    %1900 = vmatpush1.bf16.msra.mxu0 %v1808
    %1901 = vmatprep.subr.bf16.mxu0 0
    %1902 = vmatpush1.bf16.msra.mxu0 0
    %1903 = vmatprep.subr.bf16.mxu0 0
    %1904 = vmatpush1.bf16.msra.mxu0 0
    %1905 = vmatprep.subr.bf16.mxu0 0
    %1906 = vmatpush1.bf16.msra.mxu0 0
    %1907 = vmatprep.subr.bf16.mxu0 0
    %1908 = vmatpush1.bf16.msra.mxu0 0
    %1909 = vmatprep.subr.bf16.mxu0 0
    %1910 = vmatpush1.bf16.msra.mxu0 0
    %1911 = vmatprep.subr.bf16.mxu0 0
    %1912 = vmatpush1.bf16.msra.mxu0 0
    %1913 = vmatprep.subr.bf16.mxu0 0
    %1914 = vmatpush1.bf16.msra.mxu0 0
    %1915 = vmatprep.subr.bf16.mxu0 0
    %1916 = vmatpush1.bf16.msra.mxu0 0
    %1917 = vmatprep.mubr.bf16.mxu0 0
    %1918 = vmatmul.mubr.bf16.gmra.mrb[0].mxu0 %v1681
    %v1919 = vpop.f32.mrb[0].mxu0
    %v1920 = vadd.f32 0.0, %v1919
    %v1921 = vpop.f32.mrb[0].mxu0
    %v1922 = vadd.f32 0.0, %v1921
    %v1923 = vpop.f32.mrb[0].mxu0
    %v1924 = vadd.f32 0.0, %v1923
    %v1925 = vpop.f32.mrb[0].mxu0
    %v1926 = vadd.f32 0.0, %v1925
    %1927 = vdwg.mxu0
    %v1928 = vadd.f32 %v1673, %v1877
    %v1929 = vadd.f32 %v1674, %v1879
    %v1930 = vadd.f32 %v1675, %v1920
    %v1931 = vadd.f32 %v1676, %v1922
    %v1932 = vadd.f32 %v1677, %v1881
    %v1933 = vadd.f32 %v1678, %v1883
    %v1934 = vadd.f32 %v1679, %v1924
    %v1935 = vadd.f32 %v1680, %v1926
    %v1936 = vxor.u32 %v1928, 2147483648
    %v1937 = vxor.u32 %v1932, 2147483648
    %v1938 = vmul.f32 %v1936, 1.442695
    %v1939 = vpow.pop %v1938
    %v1940 = vmul.f32 %v1937, 1.442695
    %v1941 = vpow.pop %v1940
    %v1942 = vadd.f32 %v1939, 1.0
    %v1943 = vadd.f32 %v1941, 1.0
    %v1944 = vrcp.pop %v1942
    %v1945 = vmul.f32 1.0, %v1944
    %v1946 = vrcp.pop %v1943
    %v1947 = vmul.f32 1.0, %v1946
    %v1948 = vxor.u32 %v1929, 2147483648
    %v1949 = vxor.u32 %v1933, 2147483648
    %v1950 = vmul.f32 %v1948, 1.442695
    %v1951 = vpow.pop %v1950
    %v1952 = vmul.f32 %v1949, 1.442695
    %v1953 = vpow.pop %v1952
    %v1954 = vadd.f32 %v1951, 1.0
    %v1955 = vadd.f32 %v1953, 1.0
    %v1956 = vrcp.pop %v1954
    %v1957 = vmul.f32 1.0, %v1956
    %v1958 = vrcp.pop %v1955
    %v1959 = vmul.f32 1.0, %v1958
    %v1960 = vtanh.pop %v1930
    %v1961 = vtanh.pop %v1934
    %v1962 = vxor.u32 %v1931, 2147483648
    %v1963 = vxor.u32 %v1935, 2147483648
    %v1964 = vmul.f32 %v1962, 1.442695
    %v1965 = vpow.pop %v1964
    %v1966 = vmul.f32 %v1963, 1.442695
    %v1967 = vpow.pop %v1966
    %v1968 = vadd.f32 %v1965, 1.0
    %v1969 = vadd.f32 %v1967, 1.0
    %v1970 = vrcp.pop %v1968
    %v1971 = vmul.f32 1.0, %v1970
    %v1972 = vrcp.pop %v1969
    %v1973 = vmul.f32 1.0, %v1972
    %v1974 = vmul.f32 %v1957, %v1322
    %v1975 = vmul.f32 %v1959, %v1323
    %v1976 = vmul.f32 %v1945, %v1960
    %v1977 = vmul.f32 %v1947, %v1961
    %v1978 = vadd.f32 %v1974, %v1976
    %v1979 = vadd.f32 %v1975, %v1977
    %v1980 = vtanh.pop %v1978
    %v1981 = vtanh.pop %v1979
    %v1982 = vmul.f32 %v1971, %v1980
    %v1983 = vmul.f32 %v1973, %v1981
    %v1984 = vmul.f32 %v1982, %v1646
    %v1985 = vmul.f32 %v1983, %v1651
    %v1986 = vpack.c.bf16 %v1985, %v1984
    %v1988 = vunpack.c.l.b16 %v1986
    %v1989 = vunpack.c.h.b16 %v1986
    %v1990 = vpack.c.b16 %v1988, %v1988
    %v1991 = vpack.c.b16 %v1989, %v1989
    %1994 = vst [vmem:[#allocation19 + $0x4] sm:$0xf] %v1990
    %1995 = vst [vmem:[#allocation19 + $0xc] sm:$0xf] %v1991
    %v1996 = vld [vmem:[#allocation6 + $0x40] sm:$0xff]
    %v1997 = vld [vmem:[#allocation6 + $0x48] sm:$0xff]
    %v1998 = vld [vmem:[#allocation6 + $0x50] sm:$0xff]
    %v1999 = vld [vmem:[#allocation6 + $0x58] sm:$0xff]
    %v2000 = vld [vmem:[#allocation6 + $0x60] sm:$0xff]
    %v2001 = vld [vmem:[#allocation6 + $0x68] sm:$0xff]
    %v2002 = vld [vmem:[#allocation6 + $0x70] sm:$0xff]
    %v2003 = vld [vmem:[#allocation6 + $0x78] sm:$0xff]
    %v2004 = vadd.f32 %v1996, %v1284
    %v2005 = vadd.f32 %v1997, %v1285
    %v2006 = vadd.f32 %v1998, %v1286
    %v2007 = vadd.f32 %v1999, %v1287
    %v2008 = vadd.f32 %v2000, %v1288
    %v2009 = vadd.f32 %v2001, %v1289
    %v2010 = vadd.f32 %v2002, %v1290
    %v2011 = vadd.f32 %v2003, %v1291
    %v2012 = vpack.c.bf16 %v1642, %v1641
    %2013 = vmatprep.subr.bf16.mxu0 %v1438
    %2014 = vmatpush1.bf16.msra.mxu0 %v1437
    %2015 = vmatprep.subr.bf16.mxu0 %v1442
    %2016 = vmatpush1.bf16.msra.mxu0 %v1441
    %2017 = vmatprep.subr.bf16.mxu0 %v1446
    %2018 = vmatpush1.bf16.msra.mxu0 %v1445
    %2019 = vmatprep.subr.bf16.mxu0 %v1450
    %2020 = vmatpush1.bf16.msra.mxu0 %v1449
    %2021 = vmatprep.subr.bf16.mxu0 %v1454
    %2022 = vmatpush1.bf16.msra.mxu0 %v1453
    %2023 = vmatprep.subr.bf16.mxu0 %v1458
    %2024 = vmatpush1.bf16.msra.mxu0 %v1457
    %2025 = vmatprep.subr.bf16.mxu0 %v1462
    %2026 = vmatpush1.bf16.msra.mxu0 %v1461
    %2027 = vmatprep.subr.bf16.mxu0 %v1466
    %2028 = vmatpush1.bf16.msra.mxu0 %v1465
    %2029 = vmatprep.subr.bf16.mxu0 0
    %2030 = vmatpush1.bf16.msra.mxu0 0
    %2031 = vmatprep.subr.bf16.mxu0 0
    %2032 = vmatpush1.bf16.msra.mxu0 0
    %2033 = vmatprep.subr.bf16.mxu0 0
    %2034 = vmatpush1.bf16.msra.mxu0 0
    %2035 = vmatprep.subr.bf16.mxu0 0
    %2036 = vmatpush1.bf16.msra.mxu0 0
    %2037 = vmatprep.subr.bf16.mxu0 0
    %2038 = vmatpush1.bf16.msra.mxu0 0
    %2039 = vmatprep.subr.bf16.mxu0 0
    %2040 = vmatpush1.bf16.msra.mxu0 0
    %2041 = vmatprep.subr.bf16.mxu0 0
    %2042 = vmatpush1.bf16.msra.mxu0 0
    %2043 = vmatprep.subr.bf16.mxu0 0
    %2044 = vmatpush1.bf16.msra.mxu0 0
    %2045 = vmatprep.mubr.bf16.mxu0 0
    %2046 = vmatmul.mubr.bf16.gmra.mrb[0].mxu0 %v2012
    %v2047 = vpop.f32.mrb[0].mxu0
    %v2048 = vadd.f32 0.0, %v2047
    %v2049 = vpop.f32.mrb[0].mxu0
    %v2050 = vadd.f32 0.0, %v2049
    %v2051 = vpop.f32.mrb[0].mxu0
    %v2052 = vadd.f32 0.0, %v2051
    %v2053 = vpop.f32.mrb[0].mxu0
    %v2054 = vadd.f32 0.0, %v2053
    %2055 = vdwg.mxu0
    %2056 = vmatprep.subr.bf16.mxu0 %v1440
    %2057 = vmatpush1.bf16.msra.mxu0 %v1439
    %2058 = vmatprep.subr.bf16.mxu0 %v1444
    %2059 = vmatpush1.bf16.msra.mxu0 %v1443
    %2060 = vmatprep.subr.bf16.mxu0 %v1448
    %2061 = vmatpush1.bf16.msra.mxu0 %v1447
    %2062 = vmatprep.subr.bf16.mxu0 %v1452
    %2063 = vmatpush1.bf16.msra.mxu0 %v1451
    %2064 = vmatprep.subr.bf16.mxu0 %v1456
    %2065 = vmatpush1.bf16.msra.mxu0 %v1455
    %2066 = vmatprep.subr.bf16.mxu0 %v1460
    %2067 = vmatpush1.bf16.msra.mxu0 %v1459
    %2068 = vmatprep.subr.bf16.mxu0 %v1464
    %2069 = vmatpush1.bf16.msra.mxu0 %v1463
    %2070 = vmatprep.subr.bf16.mxu0 %v1468
    %2071 = vmatpush1.bf16.msra.mxu0 %v1467
    %2072 = vmatprep.subr.bf16.mxu0 0
    %2073 = vmatpush1.bf16.msra.mxu0 0
    %2074 = vmatprep.subr.bf16.mxu0 0
    %2075 = vmatpush1.bf16.msra.mxu0 0
    %2076 = vmatprep.subr.bf16.mxu0 0
    %2077 = vmatpush1.bf16.msra.mxu0 0
    %2078 = vmatprep.subr.bf16.mxu0 0
    %2079 = vmatpush1.bf16.msra.mxu0 0
    %2080 = vmatprep.subr.bf16.mxu0 0
    %2081 = vmatpush1.bf16.msra.mxu0 0
    %2082 = vmatprep.subr.bf16.mxu0 0
    %2083 = vmatpush1.bf16.msra.mxu0 0
    %2084 = vmatprep.subr.bf16.mxu0 0
    %2085 = vmatpush1.bf16.msra.mxu0 0
    %2086 = vmatprep.subr.bf16.mxu0 0
    %2087 = vmatpush1.bf16.msra.mxu0 0
    %2088 = vmatprep.mubr.bf16.mxu0 0
    %2089 = vmatmul.mubr.bf16.gmra.mrb[0].mxu0 %v2012
    %v2090 = vpop.f32.mrb[0].mxu0
    %v2091 = vadd.f32 0.0, %v2090
    %v2092 = vpop.f32.mrb[0].mxu0
    %v2093 = vadd.f32 0.0, %v2092
    %v2094 = vpop.f32.mrb[0].mxu0
    %v2095 = vadd.f32 0.0, %v2094
    %v2096 = vpop.f32.mrb[0].mxu0
    %v2097 = vadd.f32 0.0, %v2096
    %2098 = vdwg.mxu0
    %v2099 = vadd.f32 %v2004, %v2048
    %v2100 = vadd.f32 %v2005, %v2050
    %v2101 = vadd.f32 %v2006, %v2091
    %v2102 = vadd.f32 %v2007, %v2093
    %v2103 = vadd.f32 %v2008, %v2052
    %v2104 = vadd.f32 %v2009, %v2054
    %v2105 = vadd.f32 %v2010, %v2095
    %v2106 = vadd.f32 %v2011, %v2097
    %v2107 = vxor.u32 %v2099, 2147483648
    %v2108 = vxor.u32 %v2103, 2147483648
    %v2109 = vmul.f32 %v2107, 1.442695
    %v2110 = vpow.pop %v2109
    %v2111 = vmul.f32 %v2108, 1.442695
    %v2112 = vpow.pop %v2111
    %v2113 = vadd.f32 %v2110, 1.0
    %v2114 = vadd.f32 %v2112, 1.0
    %v2115 = vrcp.pop %v2113
    %v2116 = vmul.f32 1.0, %v2115
    %v2117 = vrcp.pop %v2114
    %v2118 = vmul.f32 1.0, %v2117
    %v2119 = vxor.u32 %v2100, 2147483648
    %v2120 = vxor.u32 %v2104, 2147483648
    %v2121 = vmul.f32 %v2119, 1.442695
    %v2122 = vpow.pop %v2121
    %v2123 = vmul.f32 %v2120, 1.442695
    %v2124 = vpow.pop %v2123
    %v2125 = vadd.f32 %v2122, 1.0
    %v2126 = vadd.f32 %v2124, 1.0
    %v2127 = vrcp.pop %v2125
    %v2128 = vmul.f32 1.0, %v2127
    %v2129 = vrcp.pop %v2126
    %v2130 = vmul.f32 1.0, %v2129
    %v2131 = vtanh.pop %v2101
    %v2132 = vtanh.pop %v2105
    %v2133 = vxor.u32 %v2102, 2147483648
    %v2134 = vxor.u32 %v2106, 2147483648
    %v2135 = vmul.f32 %v2133, 1.442695
    %v2136 = vpow.pop %v2135
    %v2137 = vmul.f32 %v2134, 1.442695
    %v2138 = vpow.pop %v2137
    %v2139 = vadd.f32 %v2136, 1.0
    %v2140 = vadd.f32 %v2138, 1.0
    %v2141 = vrcp.pop %v2139
    %v2142 = vmul.f32 1.0, %v2141
    %v2143 = vrcp.pop %v2140
    %v2144 = vmul.f32 1.0, %v2143
    %v2145 = vmul.f32 %v2128, %v1637
    %v2146 = vmul.f32 %v2130, %v1638
    %v2147 = vmul.f32 %v2116, %v2131
    %v2148 = vmul.f32 %v2118, %v2132
    %v2149 = vadd.f32 %v2145, %v2147
    %v2150 = vadd.f32 %v2146, %v2148
    %v2151 = vtanh.pop %v2149
    %v2152 = vtanh.pop %v2150
    %v2153 = vmul.f32 %v2142, %v2151
    %v2154 = vmul.f32 %v2144, %v2152
    %2156 = vset.pattern.permute.xlu0 0
    %2157 = vperm.xlu0 %2156, %v1302
    %v2158 = vpop.permute.xlu0 %2157
    %2161 = vset.pattern.permute.xlu0 0
    %2162 = vperm.xlu0 %2161, %v1303
    %v2163 = vpop.permute.xlu0 %2162
    %v2165 = vmul.f32 %v2153, %v2158
    %v2166 = vmul.f32 %v2154, %v2163
    %v2167 = vpack.c.bf16 %v2166, %v2165
    %v2169 = vunpack.c.l.b16 %v2167
    %v2170 = vunpack.c.h.b16 %v2167
    %v2171 = vpack.c.b16 %v2169, %v2169
    %v2172 = vpack.c.b16 %v2170, %v2170
    %2175 = vst [vmem:[#allocation19 + $0x10] sm:$0xf] %v2171
    %2176 = vst [vmem:[#allocation19 + $0x18] sm:$0xf] %v2172
    %v2177 = vld [vmem:[#allocation7 + $0x40] sm:$0xff]
    %v2178 = vld [vmem:[#allocation7 + $0x48] sm:$0xff]
    %v2179 = vld [vmem:[#allocation7 + $0x50] sm:$0xff]
    %v2180 = vld [vmem:[#allocation7 + $0x58] sm:$0xff]
    %v2181 = vld [vmem:[#allocation7 + $0x60] sm:$0xff]
    %v2182 = vld [vmem:[#allocation7 + $0x68] sm:$0xff]
    %v2183 = vld [vmem:[#allocation7 + $0x70] sm:$0xff]
    %v2184 = vld [vmem:[#allocation7 + $0x78] sm:$0xff]
    %v2185 = vadd.f32 %v2177, %v1292
    %v2186 = vadd.f32 %v2178, %v1293
    %v2187 = vadd.f32 %v2179, %v1294
    %v2188 = vadd.f32 %v2180, %v1295
    %v2189 = vadd.f32 %v2181, %v1296
    %v2190 = vadd.f32 %v2182, %v1297
    %v2191 = vadd.f32 %v2183, %v1298
    %v2192 = vadd.f32 %v2184, %v1299
    %v2193 = vpack.c.bf16 %v1983, %v1982
    %2194 = vmatprep.subr.bf16.mxu0 %v1779
    %2195 = vmatpush1.bf16.msra.mxu0 %v1778
    %2196 = vmatprep.subr.bf16.mxu0 %v1783
    %2197 = vmatpush1.bf16.msra.mxu0 %v1782
    %2198 = vmatprep.subr.bf16.mxu0 %v1787
    %2199 = vmatpush1.bf16.msra.mxu0 %v1786
    %2200 = vmatprep.subr.bf16.mxu0 %v1791
    %2201 = vmatpush1.bf16.msra.mxu0 %v1790
    %2202 = vmatprep.subr.bf16.mxu0 %v1795
    %2203 = vmatpush1.bf16.msra.mxu0 %v1794
    %2204 = vmatprep.subr.bf16.mxu0 %v1799
    %2205 = vmatpush1.bf16.msra.mxu0 %v1798
    %2206 = vmatprep.subr.bf16.mxu0 %v1803
    %2207 = vmatpush1.bf16.msra.mxu0 %v1802
    %2208 = vmatprep.subr.bf16.mxu0 %v1807
    %2209 = vmatpush1.bf16.msra.mxu0 %v1806
    %2210 = vmatprep.subr.bf16.mxu0 0
    %2211 = vmatpush1.bf16.msra.mxu0 0
    %2212 = vmatprep.subr.bf16.mxu0 0
    %2213 = vmatpush1.bf16.msra.mxu0 0
    %2214 = vmatprep.subr.bf16.mxu0 0
    %2215 = vmatpush1.bf16.msra.mxu0 0
    %2216 = vmatprep.subr.bf16.mxu0 0
    %2217 = vmatpush1.bf16.msra.mxu0 0
    %2218 = vmatprep.subr.bf16.mxu0 0
    %2219 = vmatpush1.bf16.msra.mxu0 0
    %2220 = vmatprep.subr.bf16.mxu0 0
    %2221 = vmatpush1.bf16.msra.mxu0 0
    %2222 = vmatprep.subr.bf16.mxu0 0
    %2223 = vmatpush1.bf16.msra.mxu0 0
    %2224 = vmatprep.subr.bf16.mxu0 0
    %2225 = vmatpush1.bf16.msra.mxu0 0
    %2226 = vmatprep.mubr.bf16.mxu0 0
    %2227 = vmatmul.mubr.bf16.gmra.mrb[0].mxu0 %v2193
    %v2228 = vpop.f32.mrb[0].mxu0
    %v2229 = vadd.f32 0.0, %v2228
    %v2230 = vpop.f32.mrb[0].mxu0
    %v2231 = vadd.f32 0.0, %v2230
    %v2232 = vpop.f32.mrb[0].mxu0
    %v2233 = vadd.f32 0.0, %v2232
    %v2234 = vpop.f32.mrb[0].mxu0
    %v2235 = vadd.f32 0.0, %v2234
    %2236 = vdwg.mxu0
    %2237 = vmatprep.subr.bf16.mxu0 %v1781
    %2238 = vmatpush1.bf16.msra.mxu0 %v1780
    %2239 = vmatprep.subr.bf16.mxu0 %v1785
    %2240 = vmatpush1.bf16.msra.mxu0 %v1784
    %2241 = vmatprep.subr.bf16.mxu0 %v1789
    %2242 = vmatpush1.bf16.msra.mxu0 %v1788
    %2243 = vmatprep.subr.bf16.mxu0 %v1793
    %2244 = vmatpush1.bf16.msra.mxu0 %v1792
    %2245 = vmatprep.subr.bf16.mxu0 %v1797
    %2246 = vmatpush1.bf16.msra.mxu0 %v1796
    %2247 = vmatprep.subr.bf16.mxu0 %v1801
    %2248 = vmatpush1.bf16.msra.mxu0 %v1800
    %2249 = vmatprep.subr.bf16.mxu0 %v1805
    %2250 = vmatpush1.bf16.msra.mxu0 %v1804
    %2251 = vmatprep.subr.bf16.mxu0 %v1809
    %2252 = vmatpush1.bf16.msra.mxu0 %v1808
    %2253 = vmatprep.subr.bf16.mxu0 0
    %2254 = vmatpush1.bf16.msra.mxu0 0
    %2255 = vmatprep.subr.bf16.mxu0 0
    %2256 = vmatpush1.bf16.msra.mxu0 0
    %2257 = vmatprep.subr.bf16.mxu0 0
    %2258 = vmatpush1.bf16.msra.mxu0 0
    %2259 = vmatprep.subr.bf16.mxu0 0
    %2260 = vmatpush1.bf16.msra.mxu0 0
    %2261 = vmatprep.subr.bf16.mxu0 0
    %2262 = vmatpush1.bf16.msra.mxu0 0
    %2263 = vmatprep.subr.bf16.mxu0 0
    %2264 = vmatpush1.bf16.msra.mxu0 0
    %2265 = vmatprep.subr.bf16.mxu0 0
    %2266 = vmatpush1.bf16.msra.mxu0 0
    %2267 = vmatprep.subr.bf16.mxu0 0
    %2268 = vmatpush1.bf16.msra.mxu0 0
    %2269 = vmatprep.mubr.bf16.mxu0 0
    %2270 = vmatmul.mubr.bf16.gmra.mrb[0].mxu0 %v2193
    %v2271 = vpop.f32.mrb[0].mxu0
    %v2272 = vadd.f32 0.0, %v2271
    %v2273 = vpop.f32.mrb[0].mxu0
    %v2274 = vadd.f32 0.0, %v2273
    %v2275 = vpop.f32.mrb[0].mxu0
    %v2276 = vadd.f32 0.0, %v2275
    %v2277 = vpop.f32.mrb[0].mxu0
    %v2278 = vadd.f32 0.0, %v2277
    %2279 = vdwg.mxu0
    %v2280 = vadd.f32 %v2185, %v2229
    %v2281 = vadd.f32 %v2186, %v2231
    %v2282 = vadd.f32 %v2187, %v2272
    %v2283 = vadd.f32 %v2188, %v2274
    %v2284 = vadd.f32 %v2189, %v2233
    %v2285 = vadd.f32 %v2190, %v2235
    %v2286 = vadd.f32 %v2191, %v2276
    %v2287 = vadd.f32 %v2192, %v2278
    %v2288 = vxor.u32 %v2280, 2147483648
    %v2289 = vxor.u32 %v2284, 2147483648
    %v2290 = vmul.f32 %v2288, 1.442695
    %v2291 = vpow.pop %v2290
    %v2292 = vmul.f32 %v2289, 1.442695
    %v2293 = vpow.pop %v2292
    %v2294 = vadd.f32 %v2291, 1.0
    %v2295 = vadd.f32 %v2293, 1.0
    %v2296 = vrcp.pop %v2294
    %v2297 = vmul.f32 1.0, %v2296
    %v2298 = vrcp.pop %v2295
    %v2299 = vmul.f32 1.0, %v2298
    %v2300 = vxor.u32 %v2281, 2147483648
    %v2301 = vxor.u32 %v2285, 2147483648
    %v2302 = vmul.f32 %v2300, 1.442695
    %v2303 = vpow.pop %v2302
    %v2304 = vmul.f32 %v2301, 1.442695
    %v2305 = vpow.pop %v2304
    %v2306 = vadd.f32 %v2303, 1.0
    %v2307 = vadd.f32 %v2305, 1.0
    %v2308 = vrcp.pop %v2306
    %v2309 = vmul.f32 1.0, %v2308
    %v2310 = vrcp.pop %v2307
    %v2311 = vmul.f32 1.0, %v2310
    %v2312 = vtanh.pop %v2282
    %v2313 = vtanh.pop %v2286
    %v2314 = vxor.u32 %v2283, 2147483648
    %v2315 = vxor.u32 %v2287, 2147483648
    %v2316 = vmul.f32 %v2314, 1.442695
    %v2317 = vpow.pop %v2316
    %v2318 = vmul.f32 %v2315, 1.442695
    %v2319 = vpow.pop %v2318
    %v2320 = vadd.f32 %v2317, 1.0
    %v2321 = vadd.f32 %v2319, 1.0
    %v2322 = vrcp.pop %v2320
    %v2323 = vmul.f32 1.0, %v2322
    %v2324 = vrcp.pop %v2321
    %v2325 = vmul.f32 1.0, %v2324
    %v2326 = vmul.f32 %v2309, %v1978
    %v2327 = vmul.f32 %v2311, %v1979
    %v2328 = vmul.f32 %v2297, %v2312
    %v2329 = vmul.f32 %v2299, %v2313
    %v2330 = vadd.f32 %v2326, %v2328
    %v2331 = vadd.f32 %v2327, %v2329
    %v2332 = vtanh.pop %v2330
    %v2333 = vtanh.pop %v2331
    %v2334 = vmul.f32 %v2323, %v2332
    %v2335 = vmul.f32 %v2325, %v2333
    %v2336 = vmul.f32 %v2334, %v2158
    %v2337 = vmul.f32 %v2335, %v2163
    %v2338 = vpack.c.bf16 %v2337, %v2336
    %v2340 = vunpack.c.l.b16 %v2338
    %v2341 = vunpack.c.h.b16 %v2338
    %v2342 = vpack.c.b16 %v2340, %v2340
    %v2343 = vpack.c.b16 %v2341, %v2341
    %2346 = vst [vmem:[#allocation19 + $0x14] sm:$0xf] %v2342
    %2347 = vst [vmem:[#allocation19 + $0x1c] sm:$0xf] %v2343
    %v2348 = vld [vmem:[#allocation6 + $0x80] sm:$0xff]
    %v2349 = vld [vmem:[#allocation6 + $0x88] sm:$0xff]
    %v2350 = vld [vmem:[#allocation6 + $0x90] sm:$0xff]
    %v2351 = vld [vmem:[#allocation6 + $0x98] sm:$0xff]
    %v2352 = vld [vmem:[#allocation6 + $0xa0] sm:$0xff]
    %v2353 = vld [vmem:[#allocation6 + $0xa8] sm:$0xff]
    %v2354 = vld [vmem:[#allocation6 + $0xb0] sm:$0xff]
    %v2355 = vld [vmem:[#allocation6 + $0xb8] sm:$0xff]
    %v2356 = vadd.f32 %v2348, %v1284
    %v2357 = vadd.f32 %v2349, %v1285
    %v2358 = vadd.f32 %v2350, %v1286
    %v2359 = vadd.f32 %v2351, %v1287
    %v2360 = vadd.f32 %v2352, %v1288
    %v2361 = vadd.f32 %v2353, %v1289
    %v2362 = vadd.f32 %v2354, %v1290
    %v2363 = vadd.f32 %v2355, %v1291
    %v2364 = vpack.c.bf16 %v2154, %v2153
    %2365 = vmatprep.subr.bf16.mxu0 %v1438
    %2366 = vmatpush1.bf16.msra.mxu0 %v1437
    %2367 = vmatprep.subr.bf16.mxu0 %v1442
    %2368 = vmatpush1.bf16.msra.mxu0 %v1441
    %2369 = vmatprep.subr.bf16.mxu0 %v1446
    %2370 = vmatpush1.bf16.msra.mxu0 %v1445
    %2371 = vmatprep.subr.bf16.mxu0 %v1450
    %2372 = vmatpush1.bf16.msra.mxu0 %v1449
    %2373 = vmatprep.subr.bf16.mxu0 %v1454
    %2374 = vmatpush1.bf16.msra.mxu0 %v1453
    %2375 = vmatprep.subr.bf16.mxu0 %v1458
    %2376 = vmatpush1.bf16.msra.mxu0 %v1457
    %2377 = vmatprep.subr.bf16.mxu0 %v1462
    %2378 = vmatpush1.bf16.msra.mxu0 %v1461
    %2379 = vmatprep.subr.bf16.mxu0 %v1466
    %2380 = vmatpush1.bf16.msra.mxu0 %v1465
    %2381 = vmatprep.subr.bf16.mxu0 0
    %2382 = vmatpush1.bf16.msra.mxu0 0
    %2383 = vmatprep.subr.bf16.mxu0 0
    %2384 = vmatpush1.bf16.msra.mxu0 0
    %2385 = vmatprep.subr.bf16.mxu0 0
    %2386 = vmatpush1.bf16.msra.mxu0 0
    %2387 = vmatprep.subr.bf16.mxu0 0
    %2388 = vmatpush1.bf16.msra.mxu0 0
    %2389 = vmatprep.subr.bf16.mxu0 0
    %2390 = vmatpush1.bf16.msra.mxu0 0
    %2391 = vmatprep.subr.bf16.mxu0 0
    %2392 = vmatpush1.bf16.msra.mxu0 0
    %2393 = vmatprep.subr.bf16.mxu0 0
    %2394 = vmatpush1.bf16.msra.mxu0 0
    %2395 = vmatprep.subr.bf16.mxu0 0
    %2396 = vmatpush1.bf16.msra.mxu0 0
    %2397 = vmatprep.mubr.bf16.mxu0 0
    %2398 = vmatmul.mubr.bf16.gmra.mrb[0].mxu0 %v2364
    %v2399 = vpop.f32.mrb[0].mxu0
    %v2400 = vadd.f32 0.0, %v2399
    %v2401 = vpop.f32.mrb[0].mxu0
    %v2402 = vadd.f32 0.0, %v2401
    %v2403 = vpop.f32.mrb[0].mxu0
    %v2404 = vadd.f32 0.0, %v2403
    %v2405 = vpop.f32.mrb[0].mxu0
    %v2406 = vadd.f32 0.0, %v2405
    %2407 = vdwg.mxu0
    %2408 = vmatprep.subr.bf16.mxu0 %v1440
    %2409 = vmatpush1.bf16.msra.mxu0 %v1439
    %2410 = vmatprep.subr.bf16.mxu0 %v1444
    %2411 = vmatpush1.bf16.msra.mxu0 %v1443
    %2412 = vmatprep.subr.bf16.mxu0 %v1448
    %2413 = vmatpush1.bf16.msra.mxu0 %v1447
    %2414 = vmatprep.subr.bf16.mxu0 %v1452
    %2415 = vmatpush1.bf16.msra.mxu0 %v1451
    %2416 = vmatprep.subr.bf16.mxu0 %v1456
    %2417 = vmatpush1.bf16.msra.mxu0 %v1455
    %2418 = vmatprep.subr.bf16.mxu0 %v1460
    %2419 = vmatpush1.bf16.msra.mxu0 %v1459
    %2420 = vmatprep.subr.bf16.mxu0 %v1464
    %2421 = vmatpush1.bf16.msra.mxu0 %v1463
    %2422 = vmatprep.subr.bf16.mxu0 %v1468
    %2423 = vmatpush1.bf16.msra.mxu0 %v1467
    %2424 = vmatprep.subr.bf16.mxu0 0
    %2425 = vmatpush1.bf16.msra.mxu0 0
    %2426 = vmatprep.subr.bf16.mxu0 0
    %2427 = vmatpush1.bf16.msra.mxu0 0
    %2428 = vmatprep.subr.bf16.mxu0 0
    %2429 = vmatpush1.bf16.msra.mxu0 0
    %2430 = vmatprep.subr.bf16.mxu0 0
    %2431 = vmatpush1.bf16.msra.mxu0 0
    %2432 = vmatprep.subr.bf16.mxu0 0
    %2433 = vmatpush1.bf16.msra.mxu0 0
    %2434 = vmatprep.subr.bf16.mxu0 0
    %2435 = vmatpush1.bf16.msra.mxu0 0
    %2436 = vmatprep.subr.bf16.mxu0 0
    %2437 = vmatpush1.bf16.msra.mxu0 0
    %2438 = vmatprep.subr.bf16.mxu0 0
    %2439 = vmatpush1.bf16.msra.mxu0 0
    %2440 = vmatprep.mubr.bf16.mxu0 0
    %2441 = vmatmul.mubr.bf16.gmra.mrb[0].mxu0 %v2364
    %v2442 = vpop.f32.mrb[0].mxu0
    %v2443 = vadd.f32 0.0, %v2442
    %v2444 = vpop.f32.mrb[0].mxu0
    %v2445 = vadd.f32 0.0, %v2444
    %v2446 = vpop.f32.mrb[0].mxu0
    %v2447 = vadd.f32 0.0, %v2446
    %v2448 = vpop.f32.mrb[0].mxu0
    %v2449 = vadd.f32 0.0, %v2448
    %2450 = vdwg.mxu0
    %v2451 = vadd.f32 %v2356, %v2400
    %v2452 = vadd.f32 %v2357, %v2402
    %v2453 = vadd.f32 %v2358, %v2443
    %v2454 = vadd.f32 %v2359, %v2445
    %v2455 = vadd.f32 %v2360, %v2404
    %v2456 = vadd.f32 %v2361, %v2406
    %v2457 = vadd.f32 %v2362, %v2447
    %v2458 = vadd.f32 %v2363, %v2449
    %v2459 = vxor.u32 %v2451, 2147483648
    %v2460 = vxor.u32 %v2455, 2147483648
    %v2461 = vmul.f32 %v2459, 1.442695
    %v2462 = vpow.pop %v2461
    %v2463 = vmul.f32 %v2460, 1.442695
    %v2464 = vpow.pop %v2463
    %v2465 = vadd.f32 %v2462, 1.0
    %v2466 = vadd.f32 %v2464, 1.0
    %v2467 = vrcp.pop %v2465
    %v2468 = vmul.f32 1.0, %v2467
    %v2469 = vrcp.pop %v2466
    %v2470 = vmul.f32 1.0, %v2469
    %v2471 = vxor.u32 %v2452, 2147483648
    %v2472 = vxor.u32 %v2456, 2147483648
    %v2473 = vmul.f32 %v2471, 1.442695
    %v2474 = vpow.pop %v2473
    %v2475 = vmul.f32 %v2472, 1.442695
    %v2476 = vpow.pop %v2475
    %v2477 = vadd.f32 %v2474, 1.0
    %v2478 = vadd.f32 %v2476, 1.0
    %v2479 = vrcp.pop %v2477
    %v2480 = vmul.f32 1.0, %v2479
    %v2481 = vrcp.pop %v2478
    %v2482 = vmul.f32 1.0, %v2481
    %v2483 = vtanh.pop %v2453
    %v2484 = vtanh.pop %v2457
    %v2485 = vxor.u32 %v2454, 2147483648
    %v2486 = vxor.u32 %v2458, 2147483648
    %v2487 = vmul.f32 %v2485, 1.442695
    %v2488 = vpow.pop %v2487
    %v2489 = vmul.f32 %v2486, 1.442695
    %v2490 = vpow.pop %v2489
    %v2491 = vadd.f32 %v2488, 1.0
    %v2492 = vadd.f32 %v2490, 1.0
    %v2493 = vrcp.pop %v2491
    %v2494 = vmul.f32 1.0, %v2493
    %v2495 = vrcp.pop %v2492
    %v2496 = vmul.f32 1.0, %v2495
    %v2497 = vmul.f32 %v2480, %v2149
    %v2498 = vmul.f32 %v2482, %v2150
    %v2499 = vmul.f32 %v2468, %v2483
    %v2500 = vmul.f32 %v2470, %v2484
    %v2501 = vadd.f32 %v2497, %v2499
    %v2502 = vadd.f32 %v2498, %v2500
    %v2503 = vtanh.pop %v2501
    %v2504 = vtanh.pop %v2502
    %v2505 = vmul.f32 %v2494, %v2503
    %v2506 = vmul.f32 %v2496, %v2504
    %2508 = vset.pattern.permute.xlu0 0
    %2509 = vperm.xlu0 %2508, %v1304
    %v2510 = vpop.permute.xlu0 %2509
    %2513 = vset.pattern.permute.xlu0 0
    %2514 = vperm.xlu0 %2513, %v1305
    %v2515 = vpop.permute.xlu0 %2514
    %v2517 = vmul.f32 %v2505, %v2510
    %v2518 = vmul.f32 %v2506, %v2515
    %v2519 = vpack.c.bf16 %v2518, %v2517
    %v2521 = vunpack.c.l.b16 %v2519
    %v2522 = vunpack.c.h.b16 %v2519
    %v2523 = vpack.c.b16 %v2521, %v2521
    %v2524 = vpack.c.b16 %v2522, %v2522
    %2527 = vst [vmem:[#allocation19 + $0x20] sm:$0xf] %v2523
    %2528 = vst [vmem:[#allocation19 + $0x28] sm:$0xf] %v2524
    %v2529 = vld [vmem:[#allocation7 + $0x80] sm:$0xff]
    %v2530 = vld [vmem:[#allocation7 + $0x88] sm:$0xff]
    %v2531 = vld [vmem:[#allocation7 + $0x90] sm:$0xff]
    %v2532 = vld [vmem:[#allocation7 + $0x98] sm:$0xff]
    %v2533 = vld [vmem:[#allocation7 + $0xa0] sm:$0xff]
    %v2534 = vld [vmem:[#allocation7 + $0xa8] sm:$0xff]
    %v2535 = vld [vmem:[#allocation7 + $0xb0] sm:$0xff]
    %v2536 = vld [vmem:[#allocation7 + $0xb8] sm:$0xff]
    %v2537 = vadd.f32 %v2529, %v1292
    %v2538 = vadd.f32 %v2530, %v1293
    %v2539 = vadd.f32 %v2531, %v1294
    %v2540 = vadd.f32 %v2532, %v1295
    %v2541 = vadd.f32 %v2533, %v1296
    %v2542 = vadd.f32 %v2534, %v1297
    %v2543 = vadd.f32 %v2535, %v1298
    %v2544 = vadd.f32 %v2536, %v1299
    %v2545 = vpack.c.bf16 %v2335, %v2334
    %2546 = vmatprep.subr.bf16.mxu0 %v1779
    %2547 = vmatpush1.bf16.msra.mxu0 %v1778
    %2548 = vmatprep.subr.bf16.mxu0 %v1783
    %2549 = vmatpush1.bf16.msra.mxu0 %v1782
    %2550 = vmatprep.subr.bf16.mxu0 %v1787
    %2551 = vmatpush1.bf16.msra.mxu0 %v1786
    %2552 = vmatprep.subr.bf16.mxu0 %v1791
    %2553 = vmatpush1.bf16.msra.mxu0 %v1790
    %2554 = vmatprep.subr.bf16.mxu0 %v1795
    %2555 = vmatpush1.bf16.msra.mxu0 %v1794
    %2556 = vmatprep.subr.bf16.mxu0 %v1799
    %2557 = vmatpush1.bf16.msra.mxu0 %v1798
    %2558 = vmatprep.subr.bf16.mxu0 %v1803
    %2559 = vmatpush1.bf16.msra.mxu0 %v1802
    %2560 = vmatprep.subr.bf16.mxu0 %v1807
    %2561 = vmatpush1.bf16.msra.mxu0 %v1806
    %2562 = vmatprep.subr.bf16.mxu0 0
    %2563 = vmatpush1.bf16.msra.mxu0 0
    %2564 = vmatprep.subr.bf16.mxu0 0
    %2565 = vmatpush1.bf16.msra.mxu0 0
    %2566 = vmatprep.subr.bf16.mxu0 0
    %2567 = vmatpush1.bf16.msra.mxu0 0
    %2568 = vmatprep.subr.bf16.mxu0 0
    %2569 = vmatpush1.bf16.msra.mxu0 0
    %2570 = vmatprep.subr.bf16.mxu0 0
    %2571 = vmatpush1.bf16.msra.mxu0 0
    %2572 = vmatprep.subr.bf16.mxu0 0
    %2573 = vmatpush1.bf16.msra.mxu0 0
    %2574 = vmatprep.subr.bf16.mxu0 0
    %2575 = vmatpush1.bf16.msra.mxu0 0
    %2576 = vmatprep.subr.bf16.mxu0 0
    %2577 = vmatpush1.bf16.msra.mxu0 0
    %2578 = vmatprep.mubr.bf16.mxu0 0
    %2579 = vmatmul.mubr.bf16.gmra.mrb[0].mxu0 %v2545
    %v2580 = vpop.f32.mrb[0].mxu0
    %v2581 = vadd.f32 0.0, %v2580
    %v2582 = vpop.f32.mrb[0].mxu0
    %v2583 = vadd.f32 0.0, %v2582
    %v2584 = vpop.f32.mrb[0].mxu0
    %v2585 = vadd.f32 0.0, %v2584
    %v2586 = vpop.f32.mrb[0].mxu0
    %v2587 = vadd.f32 0.0, %v2586
    %2588 = vdwg.mxu0
    %2589 = vmatprep.subr.bf16.mxu0 %v1781
    %2590 = vmatpush1.bf16.msra.mxu0 %v1780
    %2591 = vmatprep.subr.bf16.mxu0 %v1785
    %2592 = vmatpush1.bf16.msra.mxu0 %v1784
    %2593 = vmatprep.subr.bf16.mxu0 %v1789
    %2594 = vmatpush1.bf16.msra.mxu0 %v1788
    %2595 = vmatprep.subr.bf16.mxu0 %v1793
    %2596 = vmatpush1.bf16.msra.mxu0 %v1792
    %2597 = vmatprep.subr.bf16.mxu0 %v1797
    %2598 = vmatpush1.bf16.msra.mxu0 %v1796
    %2599 = vmatprep.subr.bf16.mxu0 %v1801
    %2600 = vmatpush1.bf16.msra.mxu0 %v1800
    %2601 = vmatprep.subr.bf16.mxu0 %v1805
    %2602 = vmatpush1.bf16.msra.mxu0 %v1804
    %2603 = vmatprep.subr.bf16.mxu0 %v1809
    %2604 = vmatpush1.bf16.msra.mxu0 %v1808
    %2605 = vmatprep.subr.bf16.mxu0 0
    %2606 = vmatpush1.bf16.msra.mxu0 0
    %2607 = vmatprep.subr.bf16.mxu0 0
    %2608 = vmatpush1.bf16.msra.mxu0 0
    %2609 = vmatprep.subr.bf16.mxu0 0
    %2610 = vmatpush1.bf16.msra.mxu0 0
    %2611 = vmatprep.subr.bf16.mxu0 0
    %2612 = vmatpush1.bf16.msra.mxu0 0
    %2613 = vmatprep.subr.bf16.mxu0 0
    %2614 = vmatpush1.bf16.msra.mxu0 0
    %2615 = vmatprep.subr.bf16.mxu0 0
    %2616 = vmatpush1.bf16.msra.mxu0 0
    %2617 = vmatprep.subr.bf16.mxu0 0
    %2618 = vmatpush1.bf16.msra.mxu0 0
    %2619 = vmatprep.subr.bf16.mxu0 0
    %2620 = vmatpush1.bf16.msra.mxu0 0
    %2621 = vmatprep.mubr.bf16.mxu0 0
    %2622 = vmatmul.mubr.bf16.gmra.mrb[0].mxu0 %v2545
    %v2623 = vpop.f32.mrb[0].mxu0
    %v2624 = vadd.f32 0.0, %v2623
    %v2625 = vpop.f32.mrb[0].mxu0
    %v2626 = vadd.f32 0.0, %v2625
    %v2627 = vpop.f32.mrb[0].mxu0
    %v2628 = vadd.f32 0.0, %v2627
    %v2629 = vpop.f32.mrb[0].mxu0
    %v2630 = vadd.f32 0.0, %v2629
    %2631 = vdwg.mxu0
    %v2632 = vadd.f32 %v2537, %v2581
    %v2633 = vadd.f32 %v2538, %v2583
    %v2634 = vadd.f32 %v2539, %v2624
    %v2635 = vadd.f32 %v2540, %v2626
    %v2636 = vadd.f32 %v2541, %v2585
    %v2637 = vadd.f32 %v2542, %v2587
    %v2638 = vadd.f32 %v2543, %v2628
    %v2639 = vadd.f32 %v2544, %v2630
    %v2640 = vxor.u32 %v2632, 2147483648
    %v2641 = vxor.u32 %v2636, 2147483648
    %v2642 = vmul.f32 %v2640, 1.442695
    %v2643 = vpow.pop %v2642
    %v2644 = vmul.f32 %v2641, 1.442695
    %v2645 = vpow.pop %v2644
    %v2646 = vadd.f32 %v2643, 1.0
    %v2647 = vadd.f32 %v2645, 1.0
    %v2648 = vrcp.pop %v2646
    %v2649 = vmul.f32 1.0, %v2648
    %v2650 = vrcp.pop %v2647
    %v2651 = vmul.f32 1.0, %v2650
    %v2652 = vxor.u32 %v2633, 2147483648
    %v2653 = vxor.u32 %v2637, 2147483648
    %v2654 = vmul.f32 %v2652, 1.442695
    %v2655 = vpow.pop %v2654
    %v2656 = vmul.f32 %v2653, 1.442695
    %v2657 = vpow.pop %v2656
    %v2658 = vadd.f32 %v2655, 1.0
    %v2659 = vadd.f32 %v2657, 1.0
    %v2660 = vrcp.pop %v2658
    %v2661 = vmul.f32 1.0, %v2660
    %v2662 = vrcp.pop %v2659
    %v2663 = vmul.f32 1.0, %v2662
    %v2664 = vtanh.pop %v2634
    %v2665 = vtanh.pop %v2638
    %v2666 = vxor.u32 %v2635, 2147483648
    %v2667 = vxor.u32 %v2639, 2147483648
    %v2668 = vmul.f32 %v2666, 1.442695
    %v2669 = vpow.pop %v2668
    %v2670 = vmul.f32 %v2667, 1.442695
    %v2671 = vpow.pop %v2670
    %v2672 = vadd.f32 %v2669, 1.0
    %v2673 = vadd.f32 %v2671, 1.0
    %v2674 = vrcp.pop %v2672
    %v2675 = vmul.f32 1.0, %v2674
    %v2676 = vrcp.pop %v2673
    %v2677 = vmul.f32 1.0, %v2676
    %v2678 = vmul.f32 %v2661, %v2330
    %v2679 = vmul.f32 %v2663, %v2331
    %v2680 = vmul.f32 %v2649, %v2664
    %v2681 = vmul.f32 %v2651, %v2665
    %v2682 = vadd.f32 %v2678, %v2680
    %v2683 = vadd.f32 %v2679, %v2681
    %v2684 = vtanh.pop %v2682
    %v2685 = vtanh.pop %v2683
    %v2686 = vmul.f32 %v2675, %v2684
    %v2687 = vmul.f32 %v2677, %v2685
    %v2688 = vmul.f32 %v2686, %v2510
    %v2689 = vmul.f32 %v2687, %v2515
    %v2690 = vpack.c.bf16 %v2689, %v2688
    %v2692 = vunpack.c.l.b16 %v2690
    %v2693 = vunpack.c.h.b16 %v2690
    %v2694 = vpack.c.b16 %v2692, %v2692
    %v2695 = vpack.c.b16 %v2693, %v2693
    %2698 = vst [vmem:[#allocation19 + $0x24] sm:$0xf] %v2694
    %2699 = vst [vmem:[#allocation19 + $0x2c] sm:$0xf] %v2695
    %v2700 = vld [vmem:[#allocation6 + $0xc0] sm:$0xff]
    %v2701 = vld [vmem:[#allocation6 + $0xc8] sm:$0xff]
    %v2702 = vld [vmem:[#allocation6 + $0xd0] sm:$0xff]
    %v2703 = vld [vmem:[#allocation6 + $0xd8] sm:$0xff]
    %v2704 = vld [vmem:[#allocation6 + $0xe0] sm:$0xff]
    %v2705 = vld [vmem:[#allocation6 + $0xe8] sm:$0xff]
    %v2706 = vld [vmem:[#allocation6 + $0xf0] sm:$0xff]
    %v2707 = vld [vmem:[#allocation6 + $0xf8] sm:$0xff]
    %v2708 = vadd.f32 %v2700, %v1284
    %v2709 = vadd.f32 %v2701, %v1285
    %v2710 = vadd.f32 %v2702, %v1286
    %v2711 = vadd.f32 %v2703, %v1287
    %v2712 = vadd.f32 %v2704, %v1288
    %v2713 = vadd.f32 %v2705, %v1289
    %v2714 = vadd.f32 %v2706, %v1290
    %v2715 = vadd.f32 %v2707, %v1291
    %v2716 = vpack.c.bf16 %v2506, %v2505
    %2717 = vmatprep.subr.bf16.mxu0 %v1438
    %2718 = vmatpush1.bf16.msra.mxu0 %v1437
    %2719 = vmatprep.subr.bf16.mxu0 %v1442
    %2720 = vmatpush1.bf16.msra.mxu0 %v1441
    %2721 = vmatprep.subr.bf16.mxu0 %v1446
    %2722 = vmatpush1.bf16.msra.mxu0 %v1445
    %2723 = vmatprep.subr.bf16.mxu0 %v1450
    %2724 = vmatpush1.bf16.msra.mxu0 %v1449
    %2725 = vmatprep.subr.bf16.mxu0 %v1454
    %2726 = vmatpush1.bf16.msra.mxu0 %v1453
    %2727 = vmatprep.subr.bf16.mxu0 %v1458
    %2728 = vmatpush1.bf16.msra.mxu0 %v1457
    %2729 = vmatprep.subr.bf16.mxu0 %v1462
    %2730 = vmatpush1.bf16.msra.mxu0 %v1461
    %2731 = vmatprep.subr.bf16.mxu0 %v1466
    %2732 = vmatpush1.bf16.msra.mxu0 %v1465
    %2733 = vmatprep.subr.bf16.mxu0 0
    %2734 = vmatpush1.bf16.msra.mxu0 0
    %2735 = vmatprep.subr.bf16.mxu0 0
    %2736 = vmatpush1.bf16.msra.mxu0 0
    %2737 = vmatprep.subr.bf16.mxu0 0
    %2738 = vmatpush1.bf16.msra.mxu0 0
    %2739 = vmatprep.subr.bf16.mxu0 0
    %2740 = vmatpush1.bf16.msra.mxu0 0
    %2741 = vmatprep.subr.bf16.mxu0 0
    %2742 = vmatpush1.bf16.msra.mxu0 0
    %2743 = vmatprep.subr.bf16.mxu0 0
    %2744 = vmatpush1.bf16.msra.mxu0 0
    %2745 = vmatprep.subr.bf16.mxu0 0
    %2746 = vmatpush1.bf16.msra.mxu0 0
    %2747 = vmatprep.subr.bf16.mxu0 0
    %2748 = vmatpush1.bf16.msra.mxu0 0
    %2749 = vmatprep.mubr.bf16.mxu0 0
    %2750 = vmatmul.mubr.bf16.gmra.mrb[0].mxu0 %v2716
    %v2751 = vpop.f32.mrb[0].mxu0
    %v2752 = vadd.f32 0.0, %v2751
    %v2753 = vpop.f32.mrb[0].mxu0
    %v2754 = vadd.f32 0.0, %v2753
    %v2755 = vpop.f32.mrb[0].mxu0
    %v2756 = vadd.f32 0.0, %v2755
    %v2757 = vpop.f32.mrb[0].mxu0
    %v2758 = vadd.f32 0.0, %v2757
    %2759 = vdwg.mxu0
    %2760 = vmatprep.subr.bf16.mxu0 %v1440
    %2761 = vmatpush1.bf16.msra.mxu0 %v1439
    %2762 = vmatprep.subr.bf16.mxu0 %v1444
    %2763 = vmatpush1.bf16.msra.mxu0 %v1443
    %2764 = vmatprep.subr.bf16.mxu0 %v1448
    %2765 = vmatpush1.bf16.msra.mxu0 %v1447
    %2766 = vmatprep.subr.bf16.mxu0 %v1452
    %2767 = vmatpush1.bf16.msra.mxu0 %v1451
    %2768 = vmatprep.subr.bf16.mxu0 %v1456
    %2769 = vmatpush1.bf16.msra.mxu0 %v1455
    %2770 = vmatprep.subr.bf16.mxu0 %v1460
    %2771 = vmatpush1.bf16.msra.mxu0 %v1459
    %2772 = vmatprep.subr.bf16.mxu0 %v1464
    %2773 = vmatpush1.bf16.msra.mxu0 %v1463
    %2774 = vmatprep.subr.bf16.mxu0 %v1468
    %2775 = vmatpush1.bf16.msra.mxu0 %v1467
    %2776 = vmatprep.subr.bf16.mxu0 0
    %2777 = vmatpush1.bf16.msra.mxu0 0
    %2778 = vmatprep.subr.bf16.mxu0 0
    %2779 = vmatpush1.bf16.msra.mxu0 0
    %2780 = vmatprep.subr.bf16.mxu0 0
    %2781 = vmatpush1.bf16.msra.mxu0 0
    %2782 = vmatprep.subr.bf16.mxu0 0
    %2783 = vmatpush1.bf16.msra.mxu0 0
    %2784 = vmatprep.subr.bf16.mxu0 0
    %2785 = vmatpush1.bf16.msra.mxu0 0
    %2786 = vmatprep.subr.bf16.mxu0 0
    %2787 = vmatpush1.bf16.msra.mxu0 0
    %2788 = vmatprep.subr.bf16.mxu0 0
    %2789 = vmatpush1.bf16.msra.mxu0 0
    %2790 = vmatprep.subr.bf16.mxu0 0
    %2791 = vmatpush1.bf16.msra.mxu0 0
    %2792 = vmatprep.mubr.bf16.mxu0 0
    %2793 = vmatmul.mubr.bf16.gmra.mrb[0].mxu0 %v2716
    %v2794 = vpop.f32.mrb[0].mxu0
    %v2795 = vadd.f32 0.0, %v2794
    %v2796 = vpop.f32.mrb[0].mxu0
    %v2797 = vadd.f32 0.0, %v2796
    %v2798 = vpop.f32.mrb[0].mxu0
    %v2799 = vadd.f32 0.0, %v2798
    %v2800 = vpop.f32.mrb[0].mxu0
    %v2801 = vadd.f32 0.0, %v2800
    %2802 = vdwg.mxu0
    %v2803 = vadd.f32 %v2708, %v2752
    %v2804 = vadd.f32 %v2709, %v2754
    %v2805 = vadd.f32 %v2710, %v2795
    %v2806 = vadd.f32 %v2711, %v2797
    %v2807 = vadd.f32 %v2712, %v2756
    %v2808 = vadd.f32 %v2713, %v2758
    %v2809 = vadd.f32 %v2714, %v2799
    %v2810 = vadd.f32 %v2715, %v2801
    %v2811 = vxor.u32 %v2803, 2147483648
    %v2812 = vxor.u32 %v2807, 2147483648
    %v2813 = vmul.f32 %v2811, 1.442695
    %v2814 = vpow.pop %v2813
    %v2815 = vmul.f32 %v2812, 1.442695
    %v2816 = vpow.pop %v2815
    %v2817 = vadd.f32 %v2814, 1.0
    %v2818 = vadd.f32 %v2816, 1.0
    %v2819 = vrcp.pop %v2817
    %v2820 = vmul.f32 1.0, %v2819
    %v2821 = vrcp.pop %v2818
    %v2822 = vmul.f32 1.0, %v2821
    %v2823 = vxor.u32 %v2804, 2147483648
    %v2824 = vxor.u32 %v2808, 2147483648
    %v2825 = vmul.f32 %v2823, 1.442695
    %v2826 = vpow.pop %v2825
    %v2827 = vmul.f32 %v2824, 1.442695
    %v2828 = vpow.pop %v2827
    %v2829 = vadd.f32 %v2826, 1.0
    %v2830 = vadd.f32 %v2828, 1.0
    %v2831 = vrcp.pop %v2829
    %v2832 = vmul.f32 1.0, %v2831
    %v2833 = vrcp.pop %v2830
    %v2834 = vmul.f32 1.0, %v2833
    %v2835 = vtanh.pop %v2805
    %v2836 = vtanh.pop %v2809
    %v2837 = vxor.u32 %v2806, 2147483648
    %v2838 = vxor.u32 %v2810, 2147483648
    %v2839 = vmul.f32 %v2837, 1.442695
    %v2840 = vpow.pop %v2839
    %v2841 = vmul.f32 %v2838, 1.442695
    %v2842 = vpow.pop %v2841
    %v2843 = vadd.f32 %v2840, 1.0
    %v2844 = vadd.f32 %v2842, 1.0
    %v2845 = vrcp.pop %v2843
    %v2846 = vmul.f32 1.0, %v2845
    %v2847 = vrcp.pop %v2844
    %v2848 = vmul.f32 1.0, %v2847
    %v2849 = vmul.f32 %v2832, %v2501
    %v2850 = vmul.f32 %v2834, %v2502
    %v2851 = vmul.f32 %v2820, %v2835
    %v2852 = vmul.f32 %v2822, %v2836
    %v2853 = vadd.f32 %v2849, %v2851
    %v2854 = vadd.f32 %v2850, %v2852
    %v2855 = vtanh.pop %v2853
    %v2856 = vtanh.pop %v2854
    %v2857 = vmul.f32 %v2846, %v2855
    %v2858 = vmul.f32 %v2848, %v2856
    %2860 = vset.pattern.permute.xlu0 0
    %2861 = vperm.xlu0 %2860, %v1306
    %v2862 = vpop.permute.xlu0 %2861
    %2865 = vset.pattern.permute.xlu0 0
    %2866 = vperm.xlu0 %2865, %v1307
    %v2867 = vpop.permute.xlu0 %2866
    %v2869 = vmul.f32 %v2857, %v2862
    %v2870 = vmul.f32 %v2858, %v2867
    %v2871 = vpack.c.bf16 %v2870, %v2869
    %v2873 = vunpack.c.l.b16 %v2871
    %v2874 = vunpack.c.h.b16 %v2871
    %v2875 = vpack.c.b16 %v2873, %v2873
    %v2876 = vpack.c.b16 %v2874, %v2874
    %2879 = vst [vmem:[#allocation19 + $0x30] sm:$0xf] %v2875
    %2880 = vst [vmem:[#allocation19 + $0x38] sm:$0xf] %v2876
    %v2881 = vld [vmem:[#allocation7 + $0xc0] sm:$0xff]
    %v2882 = vld [vmem:[#allocation7 + $0xc8] sm:$0xff]
    %v2883 = vld [vmem:[#allocation7 + $0xd0] sm:$0xff]
    %v2884 = vld [vmem:[#allocation7 + $0xd8] sm:$0xff]
    %v2885 = vld [vmem:[#allocation7 + $0xe0] sm:$0xff]
    %v2886 = vld [vmem:[#allocation7 + $0xe8] sm:$0xff]
    %v2887 = vld [vmem:[#allocation7 + $0xf0] sm:$0xff]
    %v2888 = vld [vmem:[#allocation7 + $0xf8] sm:$0xff]
    %v2889 = vadd.f32 %v2881, %v1292
    %v2890 = vadd.f32 %v2882, %v1293
    %v2891 = vadd.f32 %v2883, %v1294
    %v2892 = vadd.f32 %v2884, %v1295
    %v2893 = vadd.f32 %v2885, %v1296
    %v2894 = vadd.f32 %v2886, %v1297
    %v2895 = vadd.f32 %v2887, %v1298
    %v2896 = vadd.f32 %v2888, %v1299
    %v2897 = vpack.c.bf16 %v2687, %v2686
    %2898 = vmatprep.subr.bf16.mxu0 %v1779
    %2899 = vmatpush1.bf16.msra.mxu0 %v1778
    %2900 = vmatprep.subr.bf16.mxu0 %v1783
    %2901 = vmatpush1.bf16.msra.mxu0 %v1782
    %2902 = vmatprep.subr.bf16.mxu0 %v1787
    %2903 = vmatpush1.bf16.msra.mxu0 %v1786
    %2904 = vmatprep.subr.bf16.mxu0 %v1791
    %2905 = vmatpush1.bf16.msra.mxu0 %v1790
    %2906 = vmatprep.subr.bf16.mxu0 %v1795
    %2907 = vmatpush1.bf16.msra.mxu0 %v1794
    %2908 = vmatprep.subr.bf16.mxu0 %v1799
    %2909 = vmatpush1.bf16.msra.mxu0 %v1798
    %2910 = vmatprep.subr.bf16.mxu0 %v1803
    %2911 = vmatpush1.bf16.msra.mxu0 %v1802
    %2912 = vmatprep.subr.bf16.mxu0 %v1807
    %2913 = vmatpush1.bf16.msra.mxu0 %v1806
    %2914 = vmatprep.subr.bf16.mxu0 0
    %2915 = vmatpush1.bf16.msra.mxu0 0
    %2916 = vmatprep.subr.bf16.mxu0 0
    %2917 = vmatpush1.bf16.msra.mxu0 0
    %2918 = vmatprep.subr.bf16.mxu0 0
    %2919 = vmatpush1.bf16.msra.mxu0 0
    %2920 = vmatprep.subr.bf16.mxu0 0
    %2921 = vmatpush1.bf16.msra.mxu0 0
    %2922 = vmatprep.subr.bf16.mxu0 0
    %2923 = vmatpush1.bf16.msra.mxu0 0
    %2924 = vmatprep.subr.bf16.mxu0 0
    %2925 = vmatpush1.bf16.msra.mxu0 0
    %2926 = vmatprep.subr.bf16.mxu0 0
    %2927 = vmatpush1.bf16.msra.mxu0 0
    %2928 = vmatprep.subr.bf16.mxu0 0
    %2929 = vmatpush1.bf16.msra.mxu0 0
    %2930 = vmatprep.mubr.bf16.mxu0 0
    %2931 = vmatmul.mubr.bf16.gmra.mrb[0].mxu0 %v2897
    %v2932 = vpop.f32.mrb[0].mxu0
    %v2933 = vadd.f32 0.0, %v2932
    %v2934 = vpop.f32.mrb[0].mxu0
    %v2935 = vadd.f32 0.0, %v2934
    %v2936 = vpop.f32.mrb[0].mxu0
    %v2937 = vadd.f32 0.0, %v2936
    %v2938 = vpop.f32.mrb[0].mxu0
    %v2939 = vadd.f32 0.0, %v2938
    %2940 = vdwg.mxu0
    %2941 = vmatprep.subr.bf16.mxu0 %v1781
    %2942 = vmatpush1.bf16.msra.mxu0 %v1780
    %2943 = vmatprep.subr.bf16.mxu0 %v1785
    %2944 = vmatpush1.bf16.msra.mxu0 %v1784
    %2945 = vmatprep.subr.bf16.mxu0 %v1789
    %2946 = vmatpush1.bf16.msra.mxu0 %v1788
    %2947 = vmatprep.subr.bf16.mxu0 %v1793
    %2948 = vmatpush1.bf16.msra.mxu0 %v1792
    %2949 = vmatprep.subr.bf16.mxu0 %v1797
    %2950 = vmatpush1.bf16.msra.mxu0 %v1796
    %2951 = vmatprep.subr.bf16.mxu0 %v1801
    %2952 = vmatpush1.bf16.msra.mxu0 %v1800
    %2953 = vmatprep.subr.bf16.mxu0 %v1805
    %2954 = vmatpush1.bf16.msra.mxu0 %v1804
    %2955 = vmatprep.subr.bf16.mxu0 %v1809
    %2956 = vmatpush1.bf16.msra.mxu0 %v1808
    %2957 = vmatprep.subr.bf16.mxu0 0
    %2958 = vmatpush1.bf16.msra.mxu0 0
    %2959 = vmatprep.subr.bf16.mxu0 0
    %2960 = vmatpush1.bf16.msra.mxu0 0
    %2961 = vmatprep.subr.bf16.mxu0 0
    %2962 = vmatpush1.bf16.msra.mxu0 0
    %2963 = vmatprep.subr.bf16.mxu0 0
    %2964 = vmatpush1.bf16.msra.mxu0 0
    %2965 = vmatprep.subr.bf16.mxu0 0
    %2966 = vmatpush1.bf16.msra.mxu0 0
    %2967 = vmatprep.subr.bf16.mxu0 0
    %2968 = vmatpush1.bf16.msra.mxu0 0
    %2969 = vmatprep.subr.bf16.mxu0 0
    %2970 = vmatpush1.bf16.msra.mxu0 0
    %2971 = vmatprep.subr.bf16.mxu0 0
    %2972 = vmatpush1.bf16.msra.mxu0 0
    %2973 = vmatprep.mubr.bf16.mxu0 0
    %2974 = vmatmul.mubr.bf16.gmra.mrb[0].mxu0 %v2897
    %v2975 = vpop.f32.mrb[0].mxu0
    %v2976 = vadd.f32 0.0, %v2975
    %v2977 = vpop.f32.mrb[0].mxu0
    %v2978 = vadd.f32 0.0, %v2977
    %v2979 = vpop.f32.mrb[0].mxu0
    %v2980 = vadd.f32 0.0, %v2979
    %v2981 = vpop.f32.mrb[0].mxu0
    %v2982 = vadd.f32 0.0, %v2981
    %2983 = vdwg.mxu0
    %v2984 = vadd.f32 %v2889, %v2933
    %v2985 = vadd.f32 %v2890, %v2935
    %v2986 = vadd.f32 %v2891, %v2976
    %v2987 = vadd.f32 %v2892, %v2978
    %v2988 = vadd.f32 %v2893, %v2937
    %v2989 = vadd.f32 %v2894, %v2939
    %v2990 = vadd.f32 %v2895, %v2980
    %v2991 = vadd.f32 %v2896, %v2982
    %v2992 = vxor.u32 %v2984, 2147483648
    %v2993 = vxor.u32 %v2988, 2147483648
    %v2994 = vmul.f32 %v2992, 1.442695
    %v2995 = vpow.pop %v2994
    %v2996 = vmul.f32 %v2993, 1.442695
    %v2997 = vpow.pop %v2996
    %v2998 = vadd.f32 %v2995, 1.0
    %v2999 = vadd.f32 %v2997, 1.0
    %v3000 = vrcp.pop %v2998
    %v3001 = vmul.f32 1.0, %v3000
    %v3002 = vrcp.pop %v2999
    %v3003 = vmul.f32 1.0, %v3002
    %v3004 = vxor.u32 %v2985, 2147483648
    %v3005 = vxor.u32 %v2989, 2147483648
    %v3006 = vmul.f32 %v3004, 1.442695
    %v3007 = vpow.pop %v3006
    %v3008 = vmul.f32 %v3005, 1.442695
    %v3009 = vpow.pop %v3008
    %v3010 = vadd.f32 %v3007, 1.0
    %v3011 = vadd.f32 %v3009, 1.0
    %v3012 = vrcp.pop %v3010
    %v3013 = vmul.f32 1.0, %v3012
    %v3014 = vrcp.pop %v3011
    %v3015 = vmul.f32 1.0, %v3014
    %v3016 = vtanh.pop %v2986
    %v3017 = vtanh.pop %v2990
    %v3018 = vxor.u32 %v2987, 2147483648
    %v3019 = vxor.u32 %v2991, 2147483648
    %v3020 = vmul.f32 %v3018, 1.442695
    %v3021 = vpow.pop %v3020
    %v3022 = vmul.f32 %v3019, 1.442695
    %v3023 = vpow.pop %v3022
    %v3024 = vadd.f32 %v3021, 1.0
    %v3025 = vadd.f32 %v3023, 1.0
    %v3026 = vrcp.pop %v3024
    %v3027 = vmul.f32 1.0, %v3026
    %v3028 = vrcp.pop %v3025
    %v3029 = vmul.f32 1.0, %v3028
    %v3030 = vmul.f32 %v3013, %v2682
    %v3031 = vmul.f32 %v3015, %v2683
    %v3032 = vmul.f32 %v3001, %v3016
    %v3033 = vmul.f32 %v3003, %v3017
    %v3034 = vadd.f32 %v3030, %v3032
    %v3035 = vadd.f32 %v3031, %v3033
    %v3036 = vtanh.pop %v3034
    %v3037 = vtanh.pop %v3035
    %v3038 = vmul.f32 %v3027, %v3036
    %v3039 = vmul.f32 %v3029, %v3037
    %v3040 = vmul.f32 %v3038, %v2862
    %v3041 = vmul.f32 %v3039, %v2867
    %v3042 = vpack.c.bf16 %v3041, %v3040
    %v3044 = vunpack.c.l.b16 %v3042
    %v3045 = vunpack.c.h.b16 %v3042
    %v3046 = vpack.c.b16 %v3044, %v3044
    %v3047 = vpack.c.b16 %v3045, %v3045
    %3050 = vst [vmem:[#allocation19 + $0x34] sm:$0xf] %v3046
    %3051 = vst [vmem:[#allocation19 + $0x3c] sm:$0xf] %v3047
    %v3052 = vld [vmem:[#allocation6 + $0x100] sm:$0xff]
    %v3053 = vld [vmem:[#allocation6 + $0x108] sm:$0xff]
    %v3054 = vld [vmem:[#allocation6 + $0x110] sm:$0xff]
    %v3055 = vld [vmem:[#allocation6 + $0x118] sm:$0xff]
    %v3056 = vld [vmem:[#allocation6 + $0x120] sm:$0xff]
    %v3057 = vld [vmem:[#allocation6 + $0x128] sm:$0xff]
    %v3058 = vld [vmem:[#allocation6 + $0x130] sm:$0xff]
    %v3059 = vld [vmem:[#allocation6 + $0x138] sm:$0xff]
    %v3060 = vadd.f32 %v3052, %v1284
    %v3061 = vadd.f32 %v3053, %v1285
    %v3062 = vadd.f32 %v3054, %v1286
    %v3063 = vadd.f32 %v3055, %v1287
    %v3064 = vadd.f32 %v3056, %v1288
    %v3065 = vadd.f32 %v3057, %v1289
    %v3066 = vadd.f32 %v3058, %v1290
    %v3067 = vadd.f32 %v3059, %v1291
    %v3068 = vpack.c.bf16 %v2858, %v2857
    %3069 = vmatprep.subr.bf16.mxu0 %v1438
    %3070 = vmatpush1.bf16.msra.mxu0 %v1437
    %3071 = vmatprep.subr.bf16.mxu0 %v1442
    %3072 = vmatpush1.bf16.msra.mxu0 %v1441
    %3073 = vmatprep.subr.bf16.mxu0 %v1446
    %3074 = vmatpush1.bf16.msra.mxu0 %v1445
    %3075 = vmatprep.subr.bf16.mxu0 %v1450
    %3076 = vmatpush1.bf16.msra.mxu0 %v1449
    %3077 = vmatprep.subr.bf16.mxu0 %v1454
    %3078 = vmatpush1.bf16.msra.mxu0 %v1453
    %3079 = vmatprep.subr.bf16.mxu0 %v1458
    %3080 = vmatpush1.bf16.msra.mxu0 %v1457
    %3081 = vmatprep.subr.bf16.mxu0 %v1462
    %3082 = vmatpush1.bf16.msra.mxu0 %v1461
    %3083 = vmatprep.subr.bf16.mxu0 %v1466
    %3084 = vmatpush1.bf16.msra.mxu0 %v1465
    %3085 = vmatprep.subr.bf16.mxu0 0
    %3086 = vmatpush1.bf16.msra.mxu0 0
    %3087 = vmatprep.subr.bf16.mxu0 0
    %3088 = vmatpush1.bf16.msra.mxu0 0
    %3089 = vmatprep.subr.bf16.mxu0 0
    %3090 = vmatpush1.bf16.msra.mxu0 0
    %3091 = vmatprep.subr.bf16.mxu0 0
    %3092 = vmatpush1.bf16.msra.mxu0 0
    %3093 = vmatprep.subr.bf16.mxu0 0
    %3094 = vmatpush1.bf16.msra.mxu0 0
    %3095 = vmatprep.subr.bf16.mxu0 0
    %3096 = vmatpush1.bf16.msra.mxu0 0
    %3097 = vmatprep.subr.bf16.mxu0 0
    %3098 = vmatpush1.bf16.msra.mxu0 0
    %3099 = vmatprep.subr.bf16.mxu0 0
    %3100 = vmatpush1.bf16.msra.mxu0 0
    %3101 = vmatprep.mubr.bf16.mxu0 0
    %3102 = vmatmul.mubr.bf16.gmra.mrb[0].mxu0 %v3068
    %v3103 = vpop.f32.mrb[0].mxu0
    %v3104 = vadd.f32 0.0, %v3103
    %v3105 = vpop.f32.mrb[0].mxu0
    %v3106 = vadd.f32 0.0, %v3105
    %v3107 = vpop.f32.mrb[0].mxu0
    %v3108 = vadd.f32 0.0, %v3107
    %v3109 = vpop.f32.mrb[0].mxu0
    %v3110 = vadd.f32 0.0, %v3109
    %3111 = vdwg.mxu0
    %3112 = vmatprep.subr.bf16.mxu0 %v1440
    %3113 = vmatpush1.bf16.msra.mxu0 %v1439
    %3114 = vmatprep.subr.bf16.mxu0 %v1444
    %3115 = vmatpush1.bf16.msra.mxu0 %v1443
    %3116 = vmatprep.subr.bf16.mxu0 %v1448
    %3117 = vmatpush1.bf16.msra.mxu0 %v1447
    %3118 = vmatprep.subr.bf16.mxu0 %v1452
    %3119 = vmatpush1.bf16.msra.mxu0 %v1451
    %3120 = vmatprep.subr.bf16.mxu0 %v1456
    %3121 = vmatpush1.bf16.msra.mxu0 %v1455
    %3122 = vmatprep.subr.bf16.mxu0 %v1460
    %3123 = vmatpush1.bf16.msra.mxu0 %v1459
    %3124 = vmatprep.subr.bf16.mxu0 %v1464
    %3125 = vmatpush1.bf16.msra.mxu0 %v1463
    %3126 = vmatprep.subr.bf16.mxu0 %v1468
    %3127 = vmatpush1.bf16.msra.mxu0 %v1467
    %3128 = vmatprep.subr.bf16.mxu0 0
    %3129 = vmatpush1.bf16.msra.mxu0 0
    %3130 = vmatprep.subr.bf16.mxu0 0
    %3131 = vmatpush1.bf16.msra.mxu0 0
    %3132 = vmatprep.subr.bf16.mxu0 0
    %3133 = vmatpush1.bf16.msra.mxu0 0
    %3134 = vmatprep.subr.bf16.mxu0 0
    %3135 = vmatpush1.bf16.msra.mxu0 0
    %3136 = vmatprep.subr.bf16.mxu0 0
    %3137 = vmatpush1.bf16.msra.mxu0 0
    %3138 = vmatprep.subr.bf16.mxu0 0
    %3139 = vmatpush1.bf16.msra.mxu0 0
    %3140 = vmatprep.subr.bf16.mxu0 0
    %3141 = vmatpush1.bf16.msra.mxu0 0
    %3142 = vmatprep.subr.bf16.mxu0 0
    %3143 = vmatpush1.bf16.msra.mxu0 0
    %3144 = vmatprep.mubr.bf16.mxu0 0
    %3145 = vmatmul.mubr.bf16.gmra.mrb[0].mxu0 %v3068
    %v3146 = vpop.f32.mrb[0].mxu0
    %v3147 = vadd.f32 0.0, %v3146
    %v3148 = vpop.f32.mrb[0].mxu0
    %v3149 = vadd.f32 0.0, %v3148
    %v3150 = vpop.f32.mrb[0].mxu0
    %v3151 = vadd.f32 0.0, %v3150
    %v3152 = vpop.f32.mrb[0].mxu0
    %v3153 = vadd.f32 0.0, %v3152
    %3154 = vdwg.mxu0
    %v3155 = vadd.f32 %v3060, %v3104
    %v3156 = vadd.f32 %v3061, %v3106
    %v3157 = vadd.f32 %v3062, %v3147
    %v3158 = vadd.f32 %v3063, %v3149
    %v3159 = vadd.f32 %v3064, %v3108
    %v3160 = vadd.f32 %v3065, %v3110
    %v3161 = vadd.f32 %v3066, %v3151
    %v3162 = vadd.f32 %v3067, %v3153
    %v3163 = vxor.u32 %v3155, 2147483648
    %v3164 = vxor.u32 %v3159, 2147483648
    %v3165 = vmul.f32 %v3163, 1.442695
    %v3166 = vpow.pop %v3165
    %v3167 = vmul.f32 %v3164, 1.442695
    %v3168 = vpow.pop %v3167
    %v3169 = vadd.f32 %v3166, 1.0
    %v3170 = vadd.f32 %v3168, 1.0
    %v3171 = vrcp.pop %v3169
    %v3172 = vmul.f32 1.0, %v3171
    %v3173 = vrcp.pop %v3170
    %v3174 = vmul.f32 1.0, %v3173
    %v3175 = vxor.u32 %v3156, 2147483648
    %v3176 = vxor.u32 %v3160, 2147483648
    %v3177 = vmul.f32 %v3175, 1.442695
    %v3178 = vpow.pop %v3177
    %v3179 = vmul.f32 %v3176, 1.442695
    %v3180 = vpow.pop %v3179
    %v3181 = vadd.f32 %v3178, 1.0
    %v3182 = vadd.f32 %v3180, 1.0
    %v3183 = vrcp.pop %v3181
    %v3184 = vmul.f32 1.0, %v3183
    %v3185 = vrcp.pop %v3182
    %v3186 = vmul.f32 1.0, %v3185
    %v3187 = vtanh.pop %v3157
    %v3188 = vtanh.pop %v3161
    %v3189 = vxor.u32 %v3158, 2147483648
    %v3190 = vxor.u32 %v3162, 2147483648
    %v3191 = vmul.f32 %v3189, 1.442695
    %v3192 = vpow.pop %v3191
    %v3193 = vmul.f32 %v3190, 1.442695
    %v3194 = vpow.pop %v3193
    %v3195 = vadd.f32 %v3192, 1.0
    %v3196 = vadd.f32 %v3194, 1.0
    %v3197 = vrcp.pop %v3195
    %v3198 = vmul.f32 1.0, %v3197
    %v3199 = vrcp.pop %v3196
    %v3200 = vmul.f32 1.0, %v3199
    %v3201 = vmul.f32 %v3184, %v2853
    %v3202 = vmul.f32 %v3186, %v2854
    %v3203 = vmul.f32 %v3172, %v3187
    %v3204 = vmul.f32 %v3174, %v3188
    %v3205 = vadd.f32 %v3201, %v3203
    %v3206 = vadd.f32 %v3202, %v3204
    %v3207 = vtanh.pop %v3205
    %v3208 = vtanh.pop %v3206
    %v3209 = vmul.f32 %v3198, %v3207
    %v3210 = vmul.f32 %v3200, %v3208
    %3212 = vset.pattern.permute.xlu0 0
    %3213 = vperm.xlu0 %3212, %v1308
    %v3214 = vpop.permute.xlu0 %3213
    %3217 = vset.pattern.permute.xlu0 0
    %3218 = vperm.xlu0 %3217, %v1309
    %v3219 = vpop.permute.xlu0 %3218
    %v3221 = vmul.f32 %v3209, %v3214
    %v3222 = vmul.f32 %v3210, %v3219
    %v3223 = vpack.c.bf16 %v3222, %v3221
    %v3225 = vunpack.c.l.b16 %v3223
    %v3226 = vunpack.c.h.b16 %v3223
    %v3227 = vpack.c.b16 %v3225, %v3225
    %v3228 = vpack.c.b16 %v3226, %v3226
    %3231 = vst [vmem:[#allocation19 + $0x40] sm:$0xf] %v3227
    %3232 = vst [vmem:[#allocation19 + $0x48] sm:$0xf] %v3228
    %v3233 = vld [vmem:[#allocation7 + $0x100] sm:$0xff]
    %v3234 = vld [vmem:[#allocation7 + $0x108] sm:$0xff]
    %v3235 = vld [vmem:[#allocation7 + $0x110] sm:$0xff]
    %v3236 = vld [vmem:[#allocation7 + $0x118] sm:$0xff]
    %v3237 = vld [vmem:[#allocation7 + $0x120] sm:$0xff]
    %v3238 = vld [vmem:[#allocation7 + $0x128] sm:$0xff]
    %v3239 = vld [vmem:[#allocation7 + $0x130] sm:$0xff]
    %v3240 = vld [vmem:[#allocation7 + $0x138] sm:$0xff]
    %v3241 = vadd.f32 %v3233, %v1292
    %v3242 = vadd.f32 %v3234, %v1293
    %v3243 = vadd.f32 %v3235, %v1294
    %v3244 = vadd.f32 %v3236, %v1295
    %v3245 = vadd.f32 %v3237, %v1296
    %v3246 = vadd.f32 %v3238, %v1297
    %v3247 = vadd.f32 %v3239, %v1298
    %v3248 = vadd.f32 %v3240, %v1299
    %v3249 = vpack.c.bf16 %v3039, %v3038
    %3250 = vmatprep.subr.bf16.mxu0 %v1779
    %3251 = vmatpush1.bf16.msra.mxu0 %v1778
    %3252 = vmatprep.subr.bf16.mxu0 %v1783
    %3253 = vmatpush1.bf16.msra.mxu0 %v1782
    %3254 = vmatprep.subr.bf16.mxu0 %v1787
    %3255 = vmatpush1.bf16.msra.mxu0 %v1786
    %3256 = vmatprep.subr.bf16.mxu0 %v1791
    %3257 = vmatpush1.bf16.msra.mxu0 %v1790
    %3258 = vmatprep.subr.bf16.mxu0 %v1795
    %3259 = vmatpush1.bf16.msra.mxu0 %v1794
    %3260 = vmatprep.subr.bf16.mxu0 %v1799
    %3261 = vmatpush1.bf16.msra.mxu0 %v1798
    %3262 = vmatprep.subr.bf16.mxu0 %v1803
    %3263 = vmatpush1.bf16.msra.mxu0 %v1802
    %3264 = vmatprep.subr.bf16.mxu0 %v1807
    %3265 = vmatpush1.bf16.msra.mxu0 %v1806
    %3266 = vmatprep.subr.bf16.mxu0 0
    %3267 = vmatpush1.bf16.msra.mxu0 0
    %3268 = vmatprep.subr.bf16.mxu0 0
    %3269 = vmatpush1.bf16.msra.mxu0 0
    %3270 = vmatprep.subr.bf16.mxu0 0
    %3271 = vmatpush1.bf16.msra.mxu0 0
    %3272 = vmatprep.subr.bf16.mxu0 0
    %3273 = vmatpush1.bf16.msra.mxu0 0
    %3274 = vmatprep.subr.bf16.mxu0 0
    %3275 = vmatpush1.bf16.msra.mxu0 0
    %3276 = vmatprep.subr.bf16.mxu0 0
    %3277 = vmatpush1.bf16.msra.mxu0 0
    %3278 = vmatprep.subr.bf16.mxu0 0
    %3279 = vmatpush1.bf16.msra.mxu0 0
    %3280 = vmatprep.subr.bf16.mxu0 0
    %3281 = vmatpush1.bf16.msra.mxu0 0
    %3282 = vmatprep.mubr.bf16.mxu0 0
    %3283 = vmatmul.mubr.bf16.gmra.mrb[0].mxu0 %v3249
    %v3284 = vpop.f32.mrb[0].mxu0
    %v3285 = vadd.f32 0.0, %v3284
    %v3286 = vpop.f32.mrb[0].mxu0
    %v3287 = vadd.f32 0.0, %v3286
    %v3288 = vpop.f32.mrb[0].mxu0
    %v3289 = vadd.f32 0.0, %v3288
    %v3290 = vpop.f32.mrb[0].mxu0
    %v3291 = vadd.f32 0.0, %v3290
    %3292 = vdwg.mxu0
    %3293 = vmatprep.subr.bf16.mxu0 %v1781
    %3294 = vmatpush1.bf16.msra.mxu0 %v1780
    %3295 = vmatprep.subr.bf16.mxu0 %v1785
    %3296 = vmatpush1.bf16.msra.mxu0 %v1784
    %3297 = vmatprep.subr.bf16.mxu0 %v1789
    %3298 = vmatpush1.bf16.msra.mxu0 %v1788
    %3299 = vmatprep.subr.bf16.mxu0 %v1793
    %3300 = vmatpush1.bf16.msra.mxu0 %v1792
    %3301 = vmatprep.subr.bf16.mxu0 %v1797
    %3302 = vmatpush1.bf16.msra.mxu0 %v1796
    %3303 = vmatprep.subr.bf16.mxu0 %v1801
    %3304 = vmatpush1.bf16.msra.mxu0 %v1800
    %3305 = vmatprep.subr.bf16.mxu0 %v1805
    %3306 = vmatpush1.bf16.msra.mxu0 %v1804
    %3307 = vmatprep.subr.bf16.mxu0 %v1809
    %3308 = vmatpush1.bf16.msra.mxu0 %v1808
    %3309 = vmatprep.subr.bf16.mxu0 0
    %3310 = vmatpush1.bf16.msra.mxu0 0
    %3311 = vmatprep.subr.bf16.mxu0 0
    %3312 = vmatpush1.bf16.msra.mxu0 0
    %3313 = vmatprep.subr.bf16.mxu0 0
    %3314 = vmatpush1.bf16.msra.mxu0 0
    %3315 = vmatprep.subr.bf16.mxu0 0
    %3316 = vmatpush1.bf16.msra.mxu0 0
    %3317 = vmatprep.subr.bf16.mxu0 0
    %3318 = vmatpush1.bf16.msra.mxu0 0
    %3319 = vmatprep.subr.bf16.mxu0 0
    %3320 = vmatpush1.bf16.msra.mxu0 0
    %3321 = vmatprep.subr.bf16.mxu0 0
    %3322 = vmatpush1.bf16.msra.mxu0 0
    %3323 = vmatprep.subr.bf16.mxu0 0
    %3324 = vmatpush1.bf16.msra.mxu0 0
    %3325 = vmatprep.mubr.bf16.mxu0 0
    %3326 = vmatmul.mubr.bf16.gmra.mrb[0].mxu0 %v3249
    %v3327 = vpop.f32.mrb[0].mxu0
    %v3328 = vadd.f32 0.0, %v3327
    %v3329 = vpop.f32.mrb[0].mxu0
    %v3330 = vadd.f32 0.0, %v3329
    %v3331 = vpop.f32.mrb[0].mxu0
    %v3332 = vadd.f32 0.0, %v3331
    %v3333 = vpop.f32.mrb[0].mxu0
    %v3334 = vadd.f32 0.0, %v3333
    %3335 = vdwg.mxu0
    %v3336 = vadd.f32 %v3241, %v3285
    %v3337 = vadd.f32 %v3242, %v3287
    %v3338 = vadd.f32 %v3243, %v3328
    %v3339 = vadd.f32 %v3244, %v3330
    %v3340 = vadd.f32 %v3245, %v3289
    %v3341 = vadd.f32 %v3246, %v3291
    %v3342 = vadd.f32 %v3247, %v3332
    %v3343 = vadd.f32 %v3248, %v3334
    %v3344 = vxor.u32 %v3336, 2147483648
    %v3345 = vxor.u32 %v3340, 2147483648
    %v3346 = vmul.f32 %v3344, 1.442695
    %v3347 = vpow.pop %v3346
    %v3348 = vmul.f32 %v3345, 1.442695
    %v3349 = vpow.pop %v3348
    %v3350 = vadd.f32 %v3347, 1.0
    %v3351 = vadd.f32 %v3349, 1.0
    %v3352 = vrcp.pop %v3350
    %v3353 = vmul.f32 1.0, %v3352
    %v3354 = vrcp.pop %v3351
    %v3355 = vmul.f32 1.0, %v3354
    %v3356 = vxor.u32 %v3337, 2147483648
    %v3357 = vxor.u32 %v3341, 2147483648
    %v3358 = vmul.f32 %v3356, 1.442695
    %v3359 = vpow.pop %v3358
    %v3360 = vmul.f32 %v3357, 1.442695
    %v3361 = vpow.pop %v3360
    %v3362 = vadd.f32 %v3359, 1.0
    %v3363 = vadd.f32 %v3361, 1.0
    %v3364 = vrcp.pop %v3362
    %v3365 = vmul.f32 1.0, %v3364
    %v3366 = vrcp.pop %v3363
    %v3367 = vmul.f32 1.0, %v3366
    %v3368 = vtanh.pop %v3338
    %v3369 = vtanh.pop %v3342
    %v3370 = vxor.u32 %v3339, 2147483648
    %v3371 = vxor.u32 %v3343, 2147483648
    %v3372 = vmul.f32 %v3370, 1.442695
    %v3373 = vpow.pop %v3372
    %v3374 = vmul.f32 %v3371, 1.442695
    %v3375 = vpow.pop %v3374
    %v3376 = vadd.f32 %v3373, 1.0
    %v3377 = vadd.f32 %v3375, 1.0
    %v3378 = vrcp.pop %v3376
    %v3379 = vmul.f32 1.0, %v3378
    %v3380 = vrcp.pop %v3377
    %v3381 = vmul.f32 1.0, %v3380
    %v3382 = vmul.f32 %v3365, %v3034
    %v3383 = vmul.f32 %v3367, %v3035
    %v3384 = vmul.f32 %v3353, %v3368
    %v3385 = vmul.f32 %v3355, %v3369
    %v3386 = vadd.f32 %v3382, %v3384
    %v3387 = vadd.f32 %v3383, %v3385
    %v3388 = vtanh.pop %v3386
    %v3389 = vtanh.pop %v3387
    %v3390 = vmul.f32 %v3379, %v3388
    %v3391 = vmul.f32 %v3381, %v3389
    %v3392 = vmul.f32 %v3390, %v3214
    %v3393 = vmul.f32 %v3391, %v3219
    %v3394 = vpack.c.bf16 %v3393, %v3392
    %v3396 = vunpack.c.l.b16 %v3394
    %v3397 = vunpack.c.h.b16 %v3394
    %v3398 = vpack.c.b16 %v3396, %v3396
    %v3399 = vpack.c.b16 %v3397, %v3397
    %3402 = vst [vmem:[#allocation19 + $0x44] sm:$0xf] %v3398
    %3403 = vst [vmem:[#allocation19 + $0x4c] sm:$0xf] %v3399
    %v3404 = vld [vmem:[#allocation6 + $0x140] sm:$0xff]
    %v3405 = vld [vmem:[#allocation6 + $0x148] sm:$0xff]
    %v3406 = vld [vmem:[#allocation6 + $0x150] sm:$0xff]
    %v3407 = vld [vmem:[#allocation6 + $0x158] sm:$0xff]
    %v3408 = vld [vmem:[#allocation6 + $0x160] sm:$0xff]
    %v3409 = vld [vmem:[#allocation6 + $0x168] sm:$0xff]
    %v3410 = vld [vmem:[#allocation6 + $0x170] sm:$0xff]
    %v3411 = vld [vmem:[#allocation6 + $0x178] sm:$0xff]
    %v3412 = vadd.f32 %v3404, %v1284
    %v3413 = vadd.f32 %v3405, %v1285
    %v3414 = vadd.f32 %v3406, %v1286
    %v3415 = vadd.f32 %v3407, %v1287
    %v3416 = vadd.f32 %v3408, %v1288
    %v3417 = vadd.f32 %v3409, %v1289
    %v3418 = vadd.f32 %v3410, %v1290
    %v3419 = vadd.f32 %v3411, %v1291
    %v3420 = vpack.c.bf16 %v3210, %v3209
    %3421 = vmatprep.subr.bf16.mxu0 %v1438
    %3422 = vmatpush1.bf16.msra.mxu0 %v1437
    %3423 = vmatprep.subr.bf16.mxu0 %v1442
    %3424 = vmatpush1.bf16.msra.mxu0 %v1441
    %3425 = vmatprep.subr.bf16.mxu0 %v1446
    %3426 = vmatpush1.bf16.msra.mxu0 %v1445
    %3427 = vmatprep.subr.bf16.mxu0 %v1450
    %3428 = vmatpush1.bf16.msra.mxu0 %v1449
    %3429 = vmatprep.subr.bf16.mxu0 %v1454
    %3430 = vmatpush1.bf16.msra.mxu0 %v1453
    %3431 = vmatprep.subr.bf16.mxu0 %v1458
    %3432 = vmatpush1.bf16.msra.mxu0 %v1457
    %3433 = vmatprep.subr.bf16.mxu0 %v1462
    %3434 = vmatpush1.bf16.msra.mxu0 %v1461
    %3435 = vmatprep.subr.bf16.mxu0 %v1466
    %3436 = vmatpush1.bf16.msra.mxu0 %v1465
    %3437 = vmatprep.subr.bf16.mxu0 0
    %3438 = vmatpush1.bf16.msra.mxu0 0
    %3439 = vmatprep.subr.bf16.mxu0 0
    %3440 = vmatpush1.bf16.msra.mxu0 0
    %3441 = vmatprep.subr.bf16.mxu0 0
    %3442 = vmatpush1.bf16.msra.mxu0 0
    %3443 = vmatprep.subr.bf16.mxu0 0
    %3444 = vmatpush1.bf16.msra.mxu0 0
    %3445 = vmatprep.subr.bf16.mxu0 0
    %3446 = vmatpush1.bf16.msra.mxu0 0
    %3447 = vmatprep.subr.bf16.mxu0 0
    %3448 = vmatpush1.bf16.msra.mxu0 0
    %3449 = vmatprep.subr.bf16.mxu0 0
    %3450 = vmatpush1.bf16.msra.mxu0 0
    %3451 = vmatprep.subr.bf16.mxu0 0
    %3452 = vmatpush1.bf16.msra.mxu0 0
    %3453 = vmatprep.mubr.bf16.mxu0 0
    %3454 = vmatmul.mubr.bf16.gmra.mrb[0].mxu0 %v3420
    %v3455 = vpop.f32.mrb[0].mxu0
    %v3456 = vadd.f32 0.0, %v3455
    %v3457 = vpop.f32.mrb[0].mxu0
    %v3458 = vadd.f32 0.0, %v3457
    %v3459 = vpop.f32.mrb[0].mxu0
    %v3460 = vadd.f32 0.0, %v3459
    %v3461 = vpop.f32.mrb[0].mxu0
    %v3462 = vadd.f32 0.0, %v3461
    %3463 = vdwg.mxu0
    %3464 = vmatprep.subr.bf16.mxu0 %v1440
    %3465 = vmatpush1.bf16.msra.mxu0 %v1439
    %3466 = vmatprep.subr.bf16.mxu0 %v1444
    %3467 = vmatpush1.bf16.msra.mxu0 %v1443
    %3468 = vmatprep.subr.bf16.mxu0 %v1448
    %3469 = vmatpush1.bf16.msra.mxu0 %v1447
    %3470 = vmatprep.subr.bf16.mxu0 %v1452
    %3471 = vmatpush1.bf16.msra.mxu0 %v1451
    %3472 = vmatprep.subr.bf16.mxu0 %v1456
    %3473 = vmatpush1.bf16.msra.mxu0 %v1455
    %3474 = vmatprep.subr.bf16.mxu0 %v1460
    %3475 = vmatpush1.bf16.msra.mxu0 %v1459
    %3476 = vmatprep.subr.bf16.mxu0 %v1464
    %3477 = vmatpush1.bf16.msra.mxu0 %v1463
    %3478 = vmatprep.subr.bf16.mxu0 %v1468
    %3479 = vmatpush1.bf16.msra.mxu0 %v1467
    %3480 = vmatprep.subr.bf16.mxu0 0
    %3481 = vmatpush1.bf16.msra.mxu0 0
    %3482 = vmatprep.subr.bf16.mxu0 0
    %3483 = vmatpush1.bf16.msra.mxu0 0
    %3484 = vmatprep.subr.bf16.mxu0 0
    %3485 = vmatpush1.bf16.msra.mxu0 0
    %3486 = vmatprep.subr.bf16.mxu0 0
    %3487 = vmatpush1.bf16.msra.mxu0 0
    %3488 = vmatprep.subr.bf16.mxu0 0
    %3489 = vmatpush1.bf16.msra.mxu0 0
    %3490 = vmatprep.subr.bf16.mxu0 0
    %3491 = vmatpush1.bf16.msra.mxu0 0
    %3492 = vmatprep.subr.bf16.mxu0 0
    %3493 = vmatpush1.bf16.msra.mxu0 0
    %3494 = vmatprep.subr.bf16.mxu0 0
    %3495 = vmatpush1.bf16.msra.mxu0 0
    %3496 = vmatprep.mubr.bf16.mxu0 0
    %3497 = vmatmul.mubr.bf16.gmra.mrb[0].mxu0 %v3420
    %v3498 = vpop.f32.mrb[0].mxu0
    %v3499 = vadd.f32 0.0, %v3498
    %v3500 = vpop.f32.mrb[0].mxu0
    %v3501 = vadd.f32 0.0, %v3500
    %v3502 = vpop.f32.mrb[0].mxu0
    %v3503 = vadd.f32 0.0, %v3502
    %v3504 = vpop.f32.mrb[0].mxu0
    %v3505 = vadd.f32 0.0, %v3504
    %3506 = vdwg.mxu0
    %v3507 = vadd.f32 %v3412, %v3456
    %v3508 = vadd.f32 %v3413, %v3458
    %v3509 = vadd.f32 %v3414, %v3499
    %v3510 = vadd.f32 %v3415, %v3501
    %v3511 = vadd.f32 %v3416, %v3460
    %v3512 = vadd.f32 %v3417, %v3462
    %v3513 = vadd.f32 %v3418, %v3503
    %v3514 = vadd.f32 %v3419, %v3505
    %v3515 = vxor.u32 %v3507, 2147483648
    %v3516 = vxor.u32 %v3511, 2147483648
    %v3517 = vmul.f32 %v3515, 1.442695
    %v3518 = vpow.pop %v3517
    %v3519 = vmul.f32 %v3516, 1.442695
    %v3520 = vpow.pop %v3519
    %v3521 = vadd.f32 %v3518, 1.0
    %v3522 = vadd.f32 %v3520, 1.0
    %v3523 = vrcp.pop %v3521
    %v3524 = vmul.f32 1.0, %v3523
    %v3525 = vrcp.pop %v3522
    %v3526 = vmul.f32 1.0, %v3525
    %v3527 = vxor.u32 %v3508, 2147483648
    %v3528 = vxor.u32 %v3512, 2147483648
    %v3529 = vmul.f32 %v3527, 1.442695
    %v3530 = vpow.pop %v3529
    %v3531 = vmul.f32 %v3528, 1.442695
    %v3532 = vpow.pop %v3531
    %v3533 = vadd.f32 %v3530, 1.0
    %v3534 = vadd.f32 %v3532, 1.0
    %v3535 = vrcp.pop %v3533
    %v3536 = vmul.f32 1.0, %v3535
    %v3537 = vrcp.pop %v3534
    %v3538 = vmul.f32 1.0, %v3537
    %v3539 = vtanh.pop %v3509
    %v3540 = vtanh.pop %v3513
    %v3541 = vxor.u32 %v3510, 2147483648
    %v3542 = vxor.u32 %v3514, 2147483648
    %v3543 = vmul.f32 %v3541, 1.442695
    %v3544 = vpow.pop %v3543
    %v3545 = vmul.f32 %v3542, 1.442695
    %v3546 = vpow.pop %v3545
    %v3547 = vadd.f32 %v3544, 1.0
    %v3548 = vadd.f32 %v3546, 1.0
    %v3549 = vrcp.pop %v3547
    %v3550 = vmul.f32 1.0, %v3549
    %v3551 = vrcp.pop %v3548
    %v3552 = vmul.f32 1.0, %v3551
    %v3553 = vmul.f32 %v3536, %v3205
    %v3554 = vmul.f32 %v3538, %v3206
    %v3555 = vmul.f32 %v3524, %v3539
    %v3556 = vmul.f32 %v3526, %v3540
    %v3557 = vadd.f32 %v3553, %v3555
    %v3558 = vadd.f32 %v3554, %v3556
    %v3559 = vtanh.pop %v3557
    %v3560 = vtanh.pop %v3558
    %v3561 = vmul.f32 %v3550, %v3559
    %v3562 = vmul.f32 %v3552, %v3560
    %3564 = vset.pattern.permute.xlu0 0
    %3565 = vperm.xlu0 %3564, %v1310
    %v3566 = vpop.permute.xlu0 %3565
    %3569 = vset.pattern.permute.xlu0 0
    %3570 = vperm.xlu0 %3569, %v1311
    %v3571 = vpop.permute.xlu0 %3570
    %v3573 = vmul.f32 %v3561, %v3566
    %v3574 = vmul.f32 %v3562, %v3571
    %v3575 = vpack.c.bf16 %v3574, %v3573
    %v3577 = vunpack.c.l.b16 %v3575
    %v3578 = vunpack.c.h.b16 %v3575
    %v3579 = vpack.c.b16 %v3577, %v3577
    %v3580 = vpack.c.b16 %v3578, %v3578
    %3583 = vst [vmem:[#allocation19 + $0x50] sm:$0xf] %v3579
    %3584 = vst [vmem:[#allocation19 + $0x58] sm:$0xf] %v3580
    %v3585 = vld [vmem:[#allocation7 + $0x140] sm:$0xff]
    %v3586 = vld [vmem:[#allocation7 + $0x148] sm:$0xff]
    %v3587 = vld [vmem:[#allocation7 + $0x150] sm:$0xff]
    %v3588 = vld [vmem:[#allocation7 + $0x158] sm:$0xff]
    %v3589 = vld [vmem:[#allocation7 + $0x160] sm:$0xff]
    %v3590 = vld [vmem:[#allocation7 + $0x168] sm:$0xff]
    %v3591 = vld [vmem:[#allocation7 + $0x170] sm:$0xff]
    %v3592 = vld [vmem:[#allocation7 + $0x178] sm:$0xff]
    %v3593 = vadd.f32 %v3585, %v1292
    %v3594 = vadd.f32 %v3586, %v1293
    %v3595 = vadd.f32 %v3587, %v1294
    %v3596 = vadd.f32 %v3588, %v1295
    %v3597 = vadd.f32 %v3589, %v1296
    %v3598 = vadd.f32 %v3590, %v1297
    %v3599 = vadd.f32 %v3591, %v1298
    %v3600 = vadd.f32 %v3592, %v1299
    %v3601 = vpack.c.bf16 %v3391, %v3390
    %3602 = vmatprep.subr.bf16.mxu0 %v1779
    %3603 = vmatpush1.bf16.msra.mxu0 %v1778
    %3604 = vmatprep.subr.bf16.mxu0 %v1783
    %3605 = vmatpush1.bf16.msra.mxu0 %v1782
    %3606 = vmatprep.subr.bf16.mxu0 %v1787
    %3607 = vmatpush1.bf16.msra.mxu0 %v1786
    %3608 = vmatprep.subr.bf16.mxu0 %v1791
    %3609 = vmatpush1.bf16.msra.mxu0 %v1790
    %3610 = vmatprep.subr.bf16.mxu0 %v1795
    %3611 = vmatpush1.bf16.msra.mxu0 %v1794
    %3612 = vmatprep.subr.bf16.mxu0 %v1799
    %3613 = vmatpush1.bf16.msra.mxu0 %v1798
    %3614 = vmatprep.subr.bf16.mxu0 %v1803
    %3615 = vmatpush1.bf16.msra.mxu0 %v1802
    %3616 = vmatprep.subr.bf16.mxu0 %v1807
    %3617 = vmatpush1.bf16.msra.mxu0 %v1806
    %3618 = vmatprep.subr.bf16.mxu0 0
    %3619 = vmatpush1.bf16.msra.mxu0 0
    %3620 = vmatprep.subr.bf16.mxu0 0
    %3621 = vmatpush1.bf16.msra.mxu0 0
    %3622 = vmatprep.subr.bf16.mxu0 0
    %3623 = vmatpush1.bf16.msra.mxu0 0
    %3624 = vmatprep.subr.bf16.mxu0 0
    %3625 = vmatpush1.bf16.msra.mxu0 0
    %3626 = vmatprep.subr.bf16.mxu0 0
    %3627 = vmatpush1.bf16.msra.mxu0 0
    %3628 = vmatprep.subr.bf16.mxu0 0
    %3629 = vmatpush1.bf16.msra.mxu0 0
    %3630 = vmatprep.subr.bf16.mxu0 0
    %3631 = vmatpush1.bf16.msra.mxu0 0
    %3632 = vmatprep.subr.bf16.mxu0 0
    %3633 = vmatpush1.bf16.msra.mxu0 0
    %3634 = vmatprep.mubr.bf16.mxu0 0
    %3635 = vmatmul.mubr.bf16.gmra.mrb[0].mxu0 %v3601
    %v3636 = vpop.f32.mrb[0].mxu0
    %v3637 = vadd.f32 0.0, %v3636
    %v3638 = vpop.f32.mrb[0].mxu0
    %v3639 = vadd.f32 0.0, %v3638
    %v3640 = vpop.f32.mrb[0].mxu0
    %v3641 = vadd.f32 0.0, %v3640
    %v3642 = vpop.f32.mrb[0].mxu0
    %v3643 = vadd.f32 0.0, %v3642
    %3644 = vdwg.mxu0
    %3645 = vmatprep.subr.bf16.mxu0 %v1781
    %3646 = vmatpush1.bf16.msra.mxu0 %v1780
    %3647 = vmatprep.subr.bf16.mxu0 %v1785
    %3648 = vmatpush1.bf16.msra.mxu0 %v1784
    %3649 = vmatprep.subr.bf16.mxu0 %v1789
    %3650 = vmatpush1.bf16.msra.mxu0 %v1788
    %3651 = vmatprep.subr.bf16.mxu0 %v1793
    %3652 = vmatpush1.bf16.msra.mxu0 %v1792
    %3653 = vmatprep.subr.bf16.mxu0 %v1797
    %3654 = vmatpush1.bf16.msra.mxu0 %v1796
    %3655 = vmatprep.subr.bf16.mxu0 %v1801
    %3656 = vmatpush1.bf16.msra.mxu0 %v1800
    %3657 = vmatprep.subr.bf16.mxu0 %v1805
    %3658 = vmatpush1.bf16.msra.mxu0 %v1804
    %3659 = vmatprep.subr.bf16.mxu0 %v1809
    %3660 = vmatpush1.bf16.msra.mxu0 %v1808
    %3661 = vmatprep.subr.bf16.mxu0 0
    %3662 = vmatpush1.bf16.msra.mxu0 0
    %3663 = vmatprep.subr.bf16.mxu0 0
    %3664 = vmatpush1.bf16.msra.mxu0 0
    %3665 = vmatprep.subr.bf16.mxu0 0
    %3666 = vmatpush1.bf16.msra.mxu0 0
    %3667 = vmatprep.subr.bf16.mxu0 0
    %3668 = vmatpush1.bf16.msra.mxu0 0
    %3669 = vmatprep.subr.bf16.mxu0 0
    %3670 = vmatpush1.bf16.msra.mxu0 0
    %3671 = vmatprep.subr.bf16.mxu0 0
    %3672 = vmatpush1.bf16.msra.mxu0 0
    %3673 = vmatprep.subr.bf16.mxu0 0
    %3674 = vmatpush1.bf16.msra.mxu0 0
    %3675 = vmatprep.subr.bf16.mxu0 0
    %3676 = vmatpush1.bf16.msra.mxu0 0
    %3677 = vmatprep.mubr.bf16.mxu0 0
    %3678 = vmatmul.mubr.bf16.gmra.mrb[0].mxu0 %v3601
    %v3679 = vpop.f32.mrb[0].mxu0
    %v3680 = vadd.f32 0.0, %v3679
    %v3681 = vpop.f32.mrb[0].mxu0
    %v3682 = vadd.f32 0.0, %v3681
    %v3683 = vpop.f32.mrb[0].mxu0
    %v3684 = vadd.f32 0.0, %v3683
    %v3685 = vpop.f32.mrb[0].mxu0
    %v3686 = vadd.f32 0.0, %v3685
    %3687 = vdwg.mxu0
    %v3688 = vadd.f32 %v3593, %v3637
    %v3689 = vadd.f32 %v3594, %v3639
    %v3690 = vadd.f32 %v3595, %v3680
    %v3691 = vadd.f32 %v3596, %v3682
    %v3692 = vadd.f32 %v3597, %v3641
    %v3693 = vadd.f32 %v3598, %v3643
    %v3694 = vadd.f32 %v3599, %v3684
    %v3695 = vadd.f32 %v3600, %v3686
    %v3696 = vxor.u32 %v3688, 2147483648
    %v3697 = vxor.u32 %v3692, 2147483648
    %v3698 = vmul.f32 %v3696, 1.442695
    %v3699 = vpow.pop %v3698
    %v3700 = vmul.f32 %v3697, 1.442695
    %v3701 = vpow.pop %v3700
    %v3702 = vadd.f32 %v3699, 1.0
    %v3703 = vadd.f32 %v3701, 1.0
    %v3704 = vrcp.pop %v3702
    %v3705 = vmul.f32 1.0, %v3704
    %v3706 = vrcp.pop %v3703
    %v3707 = vmul.f32 1.0, %v3706
    %v3708 = vxor.u32 %v3689, 2147483648
    %v3709 = vxor.u32 %v3693, 2147483648
    %v3710 = vmul.f32 %v3708, 1.442695
    %v3711 = vpow.pop %v3710
    %v3712 = vmul.f32 %v3709, 1.442695
    %v3713 = vpow.pop %v3712
    %v3714 = vadd.f32 %v3711, 1.0
    %v3715 = vadd.f32 %v3713, 1.0
    %v3716 = vrcp.pop %v3714
    %v3717 = vmul.f32 1.0, %v3716
    %v3718 = vrcp.pop %v3715
    %v3719 = vmul.f32 1.0, %v3718
    %v3720 = vtanh.pop %v3690
    %v3721 = vtanh.pop %v3694
    %v3722 = vxor.u32 %v3691, 2147483648
    %v3723 = vxor.u32 %v3695, 2147483648
    %v3724 = vmul.f32 %v3722, 1.442695
    %v3725 = vpow.pop %v3724
    %v3726 = vmul.f32 %v3723, 1.442695
    %v3727 = vpow.pop %v3726
    %v3728 = vadd.f32 %v3725, 1.0
    %v3729 = vadd.f32 %v3727, 1.0
    %v3730 = vrcp.pop %v3728
    %v3731 = vmul.f32 1.0, %v3730
    %v3732 = vrcp.pop %v3729
    %v3733 = vmul.f32 1.0, %v3732
    %v3734 = vmul.f32 %v3717, %v3386
    %v3735 = vmul.f32 %v3719, %v3387
    %v3736 = vmul.f32 %v3705, %v3720
    %v3737 = vmul.f32 %v3707, %v3721
    %v3738 = vadd.f32 %v3734, %v3736
    %v3739 = vadd.f32 %v3735, %v3737
    %v3740 = vtanh.pop %v3738
    %v3741 = vtanh.pop %v3739
    %v3742 = vmul.f32 %v3731, %v3740
    %v3743 = vmul.f32 %v3733, %v3741
    %v3744 = vmul.f32 %v3742, %v3566
    %v3745 = vmul.f32 %v3743, %v3571
    %v3746 = vpack.c.bf16 %v3745, %v3744
    %v3748 = vunpack.c.l.b16 %v3746
    %v3749 = vunpack.c.h.b16 %v3746
    %v3750 = vpack.c.b16 %v3748, %v3748
    %v3751 = vpack.c.b16 %v3749, %v3749
    %3754 = vst [vmem:[#allocation19 + $0x54] sm:$0xf] %v3750
    %3755 = vst [vmem:[#allocation19 + $0x5c] sm:$0xf] %v3751
    %v3756 = vld [vmem:[#allocation6 + $0x180] sm:$0xff]
    %v3757 = vld [vmem:[#allocation6 + $0x188] sm:$0xff]
    %v3758 = vld [vmem:[#allocation6 + $0x190] sm:$0xff]
    %v3759 = vld [vmem:[#allocation6 + $0x198] sm:$0xff]
    %v3760 = vld [vmem:[#allocation6 + $0x1a0] sm:$0xff]
    %v3761 = vld [vmem:[#allocation6 + $0x1a8] sm:$0xff]
    %v3762 = vld [vmem:[#allocation6 + $0x1b0] sm:$0xff]
    %v3763 = vld [vmem:[#allocation6 + $0x1b8] sm:$0xff]
    %v3764 = vadd.f32 %v3756, %v1284
    %v3765 = vadd.f32 %v3757, %v1285
    %v3766 = vadd.f32 %v3758, %v1286
    %v3767 = vadd.f32 %v3759, %v1287
    %v3768 = vadd.f32 %v3760, %v1288
    %v3769 = vadd.f32 %v3761, %v1289
    %v3770 = vadd.f32 %v3762, %v1290
    %v3771 = vadd.f32 %v3763, %v1291
    %v3772 = vpack.c.bf16 %v3562, %v3561
    %3773 = vmatprep.subr.bf16.mxu0 %v1438
    %3774 = vmatpush1.bf16.msra.mxu0 %v1437
    %3775 = vmatprep.subr.bf16.mxu0 %v1442
    %3776 = vmatpush1.bf16.msra.mxu0 %v1441
    %3777 = vmatprep.subr.bf16.mxu0 %v1446
    %3778 = vmatpush1.bf16.msra.mxu0 %v1445
    %3779 = vmatprep.subr.bf16.mxu0 %v1450
    %3780 = vmatpush1.bf16.msra.mxu0 %v1449
    %3781 = vmatprep.subr.bf16.mxu0 %v1454
    %3782 = vmatpush1.bf16.msra.mxu0 %v1453
    %3783 = vmatprep.subr.bf16.mxu0 %v1458
    %3784 = vmatpush1.bf16.msra.mxu0 %v1457
    %3785 = vmatprep.subr.bf16.mxu0 %v1462
    %3786 = vmatpush1.bf16.msra.mxu0 %v1461
    %3787 = vmatprep.subr.bf16.mxu0 %v1466
    %3788 = vmatpush1.bf16.msra.mxu0 %v1465
    %3789 = vmatprep.subr.bf16.mxu0 0
    %3790 = vmatpush1.bf16.msra.mxu0 0
    %3791 = vmatprep.subr.bf16.mxu0 0
    %3792 = vmatpush1.bf16.msra.mxu0 0
    %3793 = vmatprep.subr.bf16.mxu0 0
    %3794 = vmatpush1.bf16.msra.mxu0 0
    %3795 = vmatprep.subr.bf16.mxu0 0
    %3796 = vmatpush1.bf16.msra.mxu0 0
    %3797 = vmatprep.subr.bf16.mxu0 0
    %3798 = vmatpush1.bf16.msra.mxu0 0
    %3799 = vmatprep.subr.bf16.mxu0 0
    %3800 = vmatpush1.bf16.msra.mxu0 0
    %3801 = vmatprep.subr.bf16.mxu0 0
    %3802 = vmatpush1.bf16.msra.mxu0 0
    %3803 = vmatprep.subr.bf16.mxu0 0
    %3804 = vmatpush1.bf16.msra.mxu0 0
    %3805 = vmatprep.mubr.bf16.mxu0 0
    %3806 = vmatmul.mubr.bf16.gmra.mrb[0].mxu0 %v3772
    %v3807 = vpop.f32.mrb[0].mxu0
    %v3808 = vadd.f32 0.0, %v3807
    %v3809 = vpop.f32.mrb[0].mxu0
    %v3810 = vadd.f32 0.0, %v3809
    %v3811 = vpop.f32.mrb[0].mxu0
    %v3812 = vadd.f32 0.0, %v3811
    %v3813 = vpop.f32.mrb[0].mxu0
    %v3814 = vadd.f32 0.0, %v3813
    %3815 = vdwg.mxu0
    %3816 = vmatprep.subr.bf16.mxu0 %v1440
    %3817 = vmatpush1.bf16.msra.mxu0 %v1439
    %3818 = vmatprep.subr.bf16.mxu0 %v1444
    %3819 = vmatpush1.bf16.msra.mxu0 %v1443
    %3820 = vmatprep.subr.bf16.mxu0 %v1448
    %3821 = vmatpush1.bf16.msra.mxu0 %v1447
    %3822 = vmatprep.subr.bf16.mxu0 %v1452
    %3823 = vmatpush1.bf16.msra.mxu0 %v1451
    %3824 = vmatprep.subr.bf16.mxu0 %v1456
    %3825 = vmatpush1.bf16.msra.mxu0 %v1455
    %3826 = vmatprep.subr.bf16.mxu0 %v1460
    %3827 = vmatpush1.bf16.msra.mxu0 %v1459
    %3828 = vmatprep.subr.bf16.mxu0 %v1464
    %3829 = vmatpush1.bf16.msra.mxu0 %v1463
    %3830 = vmatprep.subr.bf16.mxu0 %v1468
    %3831 = vmatpush1.bf16.msra.mxu0 %v1467
    %3832 = vmatprep.subr.bf16.mxu0 0
    %3833 = vmatpush1.bf16.msra.mxu0 0
    %3834 = vmatprep.subr.bf16.mxu0 0
    %3835 = vmatpush1.bf16.msra.mxu0 0
    %3836 = vmatprep.subr.bf16.mxu0 0
    %3837 = vmatpush1.bf16.msra.mxu0 0
    %3838 = vmatprep.subr.bf16.mxu0 0
    %3839 = vmatpush1.bf16.msra.mxu0 0
    %3840 = vmatprep.subr.bf16.mxu0 0
    %3841 = vmatpush1.bf16.msra.mxu0 0
    %3842 = vmatprep.subr.bf16.mxu0 0
    %3843 = vmatpush1.bf16.msra.mxu0 0
    %3844 = vmatprep.subr.bf16.mxu0 0
    %3845 = vmatpush1.bf16.msra.mxu0 0
    %3846 = vmatprep.subr.bf16.mxu0 0
    %3847 = vmatpush1.bf16.msra.mxu0 0
    %3848 = vmatprep.mubr.bf16.mxu0 0
    %3849 = vmatmul.mubr.bf16.gmra.mrb[0].mxu0 %v3772
    %v3850 = vpop.f32.mrb[0].mxu0
    %v3851 = vadd.f32 0.0, %v3850
    %v3852 = vpop.f32.mrb[0].mxu0
    %v3853 = vadd.f32 0.0, %v3852
    %v3854 = vpop.f32.mrb[0].mxu0
    %v3855 = vadd.f32 0.0, %v3854
    %v3856 = vpop.f32.mrb[0].mxu0
    %v3857 = vadd.f32 0.0, %v3856
    %3858 = vdwg.mxu0
    %v3859 = vadd.f32 %v3764, %v3808
    %v3860 = vadd.f32 %v3765, %v3810
    %v3861 = vadd.f32 %v3766, %v3851
    %v3862 = vadd.f32 %v3767, %v3853
    %v3863 = vadd.f32 %v3768, %v3812
    %v3864 = vadd.f32 %v3769, %v3814
    %v3865 = vadd.f32 %v3770, %v3855
    %v3866 = vadd.f32 %v3771, %v3857
    %v3867 = vxor.u32 %v3859, 2147483648
    %v3868 = vxor.u32 %v3863, 2147483648
    %v3869 = vmul.f32 %v3867, 1.442695
    %v3870 = vpow.pop %v3869
    %v3871 = vmul.f32 %v3868, 1.442695
    %v3872 = vpow.pop %v3871
    %v3873 = vadd.f32 %v3870, 1.0
    %v3874 = vadd.f32 %v3872, 1.0
    %v3875 = vrcp.pop %v3873
    %v3876 = vmul.f32 1.0, %v3875
    %v3877 = vrcp.pop %v3874
    %v3878 = vmul.f32 1.0, %v3877
    %v3879 = vxor.u32 %v3860, 2147483648
    %v3880 = vxor.u32 %v3864, 2147483648
    %v3881 = vmul.f32 %v3879, 1.442695
    %v3882 = vpow.pop %v3881
    %v3883 = vmul.f32 %v3880, 1.442695
    %v3884 = vpow.pop %v3883
    %v3885 = vadd.f32 %v3882, 1.0
    %v3886 = vadd.f32 %v3884, 1.0
    %v3887 = vrcp.pop %v3885
    %v3888 = vmul.f32 1.0, %v3887
    %v3889 = vrcp.pop %v3886
    %v3890 = vmul.f32 1.0, %v3889
    %v3891 = vtanh.pop %v3861
    %v3892 = vtanh.pop %v3865
    %v3893 = vxor.u32 %v3862, 2147483648
    %v3894 = vxor.u32 %v3866, 2147483648
    %v3895 = vmul.f32 %v3893, 1.442695
    %v3896 = vpow.pop %v3895
    %v3897 = vmul.f32 %v3894, 1.442695
    %v3898 = vpow.pop %v3897
    %v3899 = vadd.f32 %v3896, 1.0
    %v3900 = vadd.f32 %v3898, 1.0
    %v3901 = vrcp.pop %v3899
    %v3902 = vmul.f32 1.0, %v3901
    %v3903 = vrcp.pop %v3900
    %v3904 = vmul.f32 1.0, %v3903
    %v3905 = vmul.f32 %v3888, %v3557
    %v3906 = vmul.f32 %v3890, %v3558
    %v3907 = vmul.f32 %v3876, %v3891
    %v3908 = vmul.f32 %v3878, %v3892
    %v3909 = vadd.f32 %v3905, %v3907
    %v3910 = vadd.f32 %v3906, %v3908
    %v3911 = vtanh.pop %v3909
    %v3912 = vtanh.pop %v3910
    %v3913 = vmul.f32 %v3902, %v3911
    %v3914 = vmul.f32 %v3904, %v3912
    %3916 = vset.pattern.permute.xlu0 0
    %3917 = vperm.xlu0 %3916, %v1312
    %v3918 = vpop.permute.xlu0 %3917
    %3921 = vset.pattern.permute.xlu0 0
    %3922 = vperm.xlu0 %3921, %v1313
    %v3923 = vpop.permute.xlu0 %3922
    %v3925 = vmul.f32 %v3913, %v3918
    %v3926 = vmul.f32 %v3914, %v3923
    %v3927 = vpack.c.bf16 %v3926, %v3925
    %v3929 = vunpack.c.l.b16 %v3927
    %v3930 = vunpack.c.h.b16 %v3927
    %v3931 = vpack.c.b16 %v3929, %v3929
    %v3932 = vpack.c.b16 %v3930, %v3930
    %3935 = vst [vmem:[#allocation19 + $0x60] sm:$0xf] %v3931
    %3936 = vst [vmem:[#allocation19 + $0x68] sm:$0xf] %v3932
    %v3937 = vld [vmem:[#allocation7 + $0x180] sm:$0xff]
    %v3938 = vld [vmem:[#allocation7 + $0x188] sm:$0xff]
    %v3939 = vld [vmem:[#allocation7 + $0x190] sm:$0xff]
    %v3940 = vld [vmem:[#allocation7 + $0x198] sm:$0xff]
    %v3941 = vld [vmem:[#allocation7 + $0x1a0] sm:$0xff]
    %v3942 = vld [vmem:[#allocation7 + $0x1a8] sm:$0xff]
    %v3943 = vld [vmem:[#allocation7 + $0x1b0] sm:$0xff]
    %v3944 = vld [vmem:[#allocation7 + $0x1b8] sm:$0xff]
    %v3945 = vadd.f32 %v3937, %v1292
    %v3946 = vadd.f32 %v3938, %v1293
    %v3947 = vadd.f32 %v3939, %v1294
    %v3948 = vadd.f32 %v3940, %v1295
    %v3949 = vadd.f32 %v3941, %v1296
    %v3950 = vadd.f32 %v3942, %v1297
    %v3951 = vadd.f32 %v3943, %v1298
    %v3952 = vadd.f32 %v3944, %v1299
    %v3953 = vpack.c.bf16 %v3743, %v3742
    %3954 = vmatprep.subr.bf16.mxu0 %v1779
    %3955 = vmatpush1.bf16.msra.mxu0 %v1778
    %3956 = vmatprep.subr.bf16.mxu0 %v1783
    %3957 = vmatpush1.bf16.msra.mxu0 %v1782
    %3958 = vmatprep.subr.bf16.mxu0 %v1787
    %3959 = vmatpush1.bf16.msra.mxu0 %v1786
    %3960 = vmatprep.subr.bf16.mxu0 %v1791
    %3961 = vmatpush1.bf16.msra.mxu0 %v1790
    %3962 = vmatprep.subr.bf16.mxu0 %v1795
    %3963 = vmatpush1.bf16.msra.mxu0 %v1794
    %3964 = vmatprep.subr.bf16.mxu0 %v1799
    %3965 = vmatpush1.bf16.msra.mxu0 %v1798
    %3966 = vmatprep.subr.bf16.mxu0 %v1803
    %3967 = vmatpush1.bf16.msra.mxu0 %v1802
    %3968 = vmatprep.subr.bf16.mxu0 %v1807
    %3969 = vmatpush1.bf16.msra.mxu0 %v1806
    %3970 = vmatprep.subr.bf16.mxu0 0
    %3971 = vmatpush1.bf16.msra.mxu0 0
    %3972 = vmatprep.subr.bf16.mxu0 0
    %3973 = vmatpush1.bf16.msra.mxu0 0
    %3974 = vmatprep.subr.bf16.mxu0 0
    %3975 = vmatpush1.bf16.msra.mxu0 0
    %3976 = vmatprep.subr.bf16.mxu0 0
    %3977 = vmatpush1.bf16.msra.mxu0 0
    %3978 = vmatprep.subr.bf16.mxu0 0
    %3979 = vmatpush1.bf16.msra.mxu0 0
    %3980 = vmatprep.subr.bf16.mxu0 0
    %3981 = vmatpush1.bf16.msra.mxu0 0
    %3982 = vmatprep.subr.bf16.mxu0 0
    %3983 = vmatpush1.bf16.msra.mxu0 0
    %3984 = vmatprep.subr.bf16.mxu0 0
    %3985 = vmatpush1.bf16.msra.mxu0 0
    %3986 = vmatprep.mubr.bf16.mxu0 0
    %3987 = vmatmul.mubr.bf16.gmra.mrb[0].mxu0 %v3953
    %v3988 = vpop.f32.mrb[0].mxu0
    %v3989 = vadd.f32 0.0, %v3988
    %v3990 = vpop.f32.mrb[0].mxu0
    %v3991 = vadd.f32 0.0, %v3990
    %v3992 = vpop.f32.mrb[0].mxu0
    %v3993 = vadd.f32 0.0, %v3992
    %v3994 = vpop.f32.mrb[0].mxu0
    %v3995 = vadd.f32 0.0, %v3994
    %3996 = vdwg.mxu0
    %3997 = vmatprep.subr.bf16.mxu0 %v1781
    %3998 = vmatpush1.bf16.msra.mxu0 %v1780
    %3999 = vmatprep.subr.bf16.mxu0 %v1785
    %4000 = vmatpush1.bf16.msra.mxu0 %v1784
    %4001 = vmatprep.subr.bf16.mxu0 %v1789
    %4002 = vmatpush1.bf16.msra.mxu0 %v1788
    %4003 = vmatprep.subr.bf16.mxu0 %v1793
    %4004 = vmatpush1.bf16.msra.mxu0 %v1792
    %4005 = vmatprep.subr.bf16.mxu0 %v1797
    %4006 = vmatpush1.bf16.msra.mxu0 %v1796
    %4007 = vmatprep.subr.bf16.mxu0 %v1801
    %4008 = vmatpush1.bf16.msra.mxu0 %v1800
    %4009 = vmatprep.subr.bf16.mxu0 %v1805
    %4010 = vmatpush1.bf16.msra.mxu0 %v1804
    %4011 = vmatprep.subr.bf16.mxu0 %v1809
    %4012 = vmatpush1.bf16.msra.mxu0 %v1808
    %4013 = vmatprep.subr.bf16.mxu0 0
    %4014 = vmatpush1.bf16.msra.mxu0 0
    %4015 = vmatprep.subr.bf16.mxu0 0
    %4016 = vmatpush1.bf16.msra.mxu0 0
    %4017 = vmatprep.subr.bf16.mxu0 0
    %4018 = vmatpush1.bf16.msra.mxu0 0
    %4019 = vmatprep.subr.bf16.mxu0 0
    %4020 = vmatpush1.bf16.msra.mxu0 0
    %4021 = vmatprep.subr.bf16.mxu0 0
    %4022 = vmatpush1.bf16.msra.mxu0 0
    %4023 = vmatprep.subr.bf16.mxu0 0
    %4024 = vmatpush1.bf16.msra.mxu0 0
    %4025 = vmatprep.subr.bf16.mxu0 0
    %4026 = vmatpush1.bf16.msra.mxu0 0
    %4027 = vmatprep.subr.bf16.mxu0 0
    %4028 = vmatpush1.bf16.msra.mxu0 0
    %4029 = vmatprep.mubr.bf16.mxu0 0
    %4030 = vmatmul.mubr.bf16.gmra.mrb[0].mxu0 %v3953
    %v4031 = vpop.f32.mrb[0].mxu0
    %v4032 = vadd.f32 0.0, %v4031
    %v4033 = vpop.f32.mrb[0].mxu0
    %v4034 = vadd.f32 0.0, %v4033
    %v4035 = vpop.f32.mrb[0].mxu0
    %v4036 = vadd.f32 0.0, %v4035
    %v4037 = vpop.f32.mrb[0].mxu0
    %v4038 = vadd.f32 0.0, %v4037
    %4039 = vdwg.mxu0
    %v4040 = vadd.f32 %v3945, %v3989
    %v4041 = vadd.f32 %v3946, %v3991
    %v4042 = vadd.f32 %v3947, %v4032
    %v4043 = vadd.f32 %v3948, %v4034
    %v4044 = vadd.f32 %v3949, %v3993
    %v4045 = vadd.f32 %v3950, %v3995
    %v4046 = vadd.f32 %v3951, %v4036
    %v4047 = vadd.f32 %v3952, %v4038
    %v4048 = vxor.u32 %v4040, 2147483648
    %v4049 = vxor.u32 %v4044, 2147483648
    %v4050 = vmul.f32 %v4048, 1.442695
    %v4051 = vpow.pop %v4050
    %v4052 = vmul.f32 %v4049, 1.442695
    %v4053 = vpow.pop %v4052
    %v4054 = vadd.f32 %v4051, 1.0
    %v4055 = vadd.f32 %v4053, 1.0
    %v4056 = vrcp.pop %v4054
    %v4057 = vmul.f32 1.0, %v4056
    %v4058 = vrcp.pop %v4055
    %v4059 = vmul.f32 1.0, %v4058
    %v4060 = vxor.u32 %v4041, 2147483648
    %v4061 = vxor.u32 %v4045, 2147483648
    %v4062 = vmul.f32 %v4060, 1.442695
    %v4063 = vpow.pop %v4062
    %v4064 = vmul.f32 %v4061, 1.442695
    %v4065 = vpow.pop %v4064
    %v4066 = vadd.f32 %v4063, 1.0
    %v4067 = vadd.f32 %v4065, 1.0
    %v4068 = vrcp.pop %v4066
    %v4069 = vmul.f32 1.0, %v4068
    %v4070 = vrcp.pop %v4067
    %v4071 = vmul.f32 1.0, %v4070
    %v4072 = vtanh.pop %v4042
    %v4073 = vtanh.pop %v4046
    %v4074 = vxor.u32 %v4043, 2147483648
    %v4075 = vxor.u32 %v4047, 2147483648
    %v4076 = vmul.f32 %v4074, 1.442695
    %v4077 = vpow.pop %v4076
    %v4078 = vmul.f32 %v4075, 1.442695
    %v4079 = vpow.pop %v4078
    %v4080 = vadd.f32 %v4077, 1.0
    %v4081 = vadd.f32 %v4079, 1.0
    %v4082 = vrcp.pop %v4080
    %v4083 = vmul.f32 1.0, %v4082
    %v4084 = vrcp.pop %v4081
    %v4085 = vmul.f32 1.0, %v4084
    %v4086 = vmul.f32 %v4069, %v3738
    %v4087 = vmul.f32 %v4071, %v3739
    %v4088 = vmul.f32 %v4057, %v4072
    %v4089 = vmul.f32 %v4059, %v4073
    %v4090 = vadd.f32 %v4086, %v4088
    %v4091 = vadd.f32 %v4087, %v4089
    %v4092 = vtanh.pop %v4090
    %v4093 = vtanh.pop %v4091
    %v4094 = vmul.f32 %v4083, %v4092
    %v4095 = vmul.f32 %v4085, %v4093
    %v4096 = vmul.f32 %v4094, %v3918
    %v4097 = vmul.f32 %v4095, %v3923
    %v4098 = vpack.c.bf16 %v4097, %v4096
    %v4100 = vunpack.c.l.b16 %v4098
    %v4101 = vunpack.c.h.b16 %v4098
    %v4102 = vpack.c.b16 %v4100, %v4100
    %v4103 = vpack.c.b16 %v4101, %v4101
    %4106 = vst [vmem:[#allocation19 + $0x64] sm:$0xf] %v4102
    %4107 = vst [vmem:[#allocation19 + $0x6c] sm:$0xf] %v4103
    %v4108 = vld [vmem:[#allocation6 + $0x1c0] sm:$0xff]
    %v4109 = vld [vmem:[#allocation6 + $0x1c8] sm:$0xff]
    %v4110 = vld [vmem:[#allocation6 + $0x1d0] sm:$0xff]
    %v4111 = vld [vmem:[#allocation6 + $0x1d8] sm:$0xff]
    %v4112 = vld [vmem:[#allocation6 + $0x1e0] sm:$0xff]
    %v4113 = vld [vmem:[#allocation6 + $0x1e8] sm:$0xff]
    %v4114 = vld [vmem:[#allocation6 + $0x1f0] sm:$0xff]
    %v4115 = vld [vmem:[#allocation6 + $0x1f8] sm:$0xff]
    %v4116 = vadd.f32 %v4108, %v1284
    %v4117 = vadd.f32 %v4109, %v1285
    %v4118 = vadd.f32 %v4110, %v1286
    %v4119 = vadd.f32 %v4111, %v1287
    %v4120 = vadd.f32 %v4112, %v1288
    %v4121 = vadd.f32 %v4113, %v1289
    %v4122 = vadd.f32 %v4114, %v1290
    %v4123 = vadd.f32 %v4115, %v1291
    %v4124 = vpack.c.bf16 %v3914, %v3913
    %4125 = vmatprep.subr.bf16.mxu0 %v1438
    %4126 = vmatpush1.bf16.msra.mxu0 %v1437
    %4127 = vmatprep.subr.bf16.mxu0 %v1442
    %4128 = vmatpush1.bf16.msra.mxu0 %v1441
    %4129 = vmatprep.subr.bf16.mxu0 %v1446
    %4130 = vmatpush1.bf16.msra.mxu0 %v1445
    %4131 = vmatprep.subr.bf16.mxu0 %v1450
    %4132 = vmatpush1.bf16.msra.mxu0 %v1449
    %4133 = vmatprep.subr.bf16.mxu0 %v1454
    %4134 = vmatpush1.bf16.msra.mxu0 %v1453
    %4135 = vmatprep.subr.bf16.mxu0 %v1458
    %4136 = vmatpush1.bf16.msra.mxu0 %v1457
    %4137 = vmatprep.subr.bf16.mxu0 %v1462
    %4138 = vmatpush1.bf16.msra.mxu0 %v1461
    %4139 = vmatprep.subr.bf16.mxu0 %v1466
    %4140 = vmatpush1.bf16.msra.mxu0 %v1465
    %4141 = vmatprep.subr.bf16.mxu0 0
    %4142 = vmatpush1.bf16.msra.mxu0 0
    %4143 = vmatprep.subr.bf16.mxu0 0
    %4144 = vmatpush1.bf16.msra.mxu0 0
    %4145 = vmatprep.subr.bf16.mxu0 0
    %4146 = vmatpush1.bf16.msra.mxu0 0
    %4147 = vmatprep.subr.bf16.mxu0 0
    %4148 = vmatpush1.bf16.msra.mxu0 0
    %4149 = vmatprep.subr.bf16.mxu0 0
    %4150 = vmatpush1.bf16.msra.mxu0 0
    %4151 = vmatprep.subr.bf16.mxu0 0
    %4152 = vmatpush1.bf16.msra.mxu0 0
    %4153 = vmatprep.subr.bf16.mxu0 0
    %4154 = vmatpush1.bf16.msra.mxu0 0
    %4155 = vmatprep.subr.bf16.mxu0 0
    %4156 = vmatpush1.bf16.msra.mxu0 0
    %4157 = vmatprep.mubr.bf16.mxu0 0
    %4158 = vmatmul.mubr.bf16.gmra.mrb[0].mxu0 %v4124
    %v4159 = vpop.f32.mrb[0].mxu0
    %v4160 = vadd.f32 0.0, %v4159
    %v4161 = vpop.f32.mrb[0].mxu0
    %v4162 = vadd.f32 0.0, %v4161
    %v4163 = vpop.f32.mrb[0].mxu0
    %v4164 = vadd.f32 0.0, %v4163
    %v4165 = vpop.f32.mrb[0].mxu0
    %v4166 = vadd.f32 0.0, %v4165
    %4167 = vdwg.mxu0
    %4168 = vmatprep.subr.bf16.mxu0 %v1440
    %4169 = vmatpush1.bf16.msra.mxu0 %v1439
    %4170 = vmatprep.subr.bf16.mxu0 %v1444
    %4171 = vmatpush1.bf16.msra.mxu0 %v1443
    %4172 = vmatprep.subr.bf16.mxu0 %v1448
    %4173 = vmatpush1.bf16.msra.mxu0 %v1447
    %4174 = vmatprep.subr.bf16.mxu0 %v1452
    %4175 = vmatpush1.bf16.msra.mxu0 %v1451
    %4176 = vmatprep.subr.bf16.mxu0 %v1456
    %4177 = vmatpush1.bf16.msra.mxu0 %v1455
    %4178 = vmatprep.subr.bf16.mxu0 %v1460
    %4179 = vmatpush1.bf16.msra.mxu0 %v1459
    %4180 = vmatprep.subr.bf16.mxu0 %v1464
    %4181 = vmatpush1.bf16.msra.mxu0 %v1463
    %4182 = vmatprep.subr.bf16.mxu0 %v1468
    %4183 = vmatpush1.bf16.msra.mxu0 %v1467
    %4184 = vmatprep.subr.bf16.mxu0 0
    %4185 = vmatpush1.bf16.msra.mxu0 0
    %4186 = vmatprep.subr.bf16.mxu0 0
    %4187 = vmatpush1.bf16.msra.mxu0 0
    %4188 = vmatprep.subr.bf16.mxu0 0
    %4189 = vmatpush1.bf16.msra.mxu0 0
    %4190 = vmatprep.subr.bf16.mxu0 0
    %4191 = vmatpush1.bf16.msra.mxu0 0
    %4192 = vmatprep.subr.bf16.mxu0 0
    %4193 = vmatpush1.bf16.msra.mxu0 0
    %4194 = vmatprep.subr.bf16.mxu0 0
    %4195 = vmatpush1.bf16.msra.mxu0 0
    %4196 = vmatprep.subr.bf16.mxu0 0
    %4197 = vmatpush1.bf16.msra.mxu0 0
    %4198 = vmatprep.subr.bf16.mxu0 0
    %4199 = vmatpush1.bf16.msra.mxu0 0
    %4200 = vmatprep.mubr.bf16.mxu0 0
    %4201 = vmatmul.mubr.bf16.gmra.mrb[0].mxu0 %v4124
    %v4202 = vpop.f32.mrb[0].mxu0
    %v4203 = vadd.f32 0.0, %v4202
    %v4204 = vpop.f32.mrb[0].mxu0
    %v4205 = vadd.f32 0.0, %v4204
    %v4206 = vpop.f32.mrb[0].mxu0
    %v4207 = vadd.f32 0.0, %v4206
    %v4208 = vpop.f32.mrb[0].mxu0
    %v4209 = vadd.f32 0.0, %v4208
    %4210 = vdwg.mxu0
    %v4211 = vadd.f32 %v4116, %v4160
    %v4212 = vadd.f32 %v4117, %v4162
    %v4213 = vadd.f32 %v4118, %v4203
    %v4214 = vadd.f32 %v4119, %v4205
    %v4215 = vadd.f32 %v4120, %v4164
    %v4216 = vadd.f32 %v4121, %v4166
    %v4217 = vadd.f32 %v4122, %v4207
    %v4218 = vadd.f32 %v4123, %v4209
    %v4219 = vxor.u32 %v4211, 2147483648
    %v4220 = vxor.u32 %v4215, 2147483648
    %v4221 = vmul.f32 %v4219, 1.442695
    %v4222 = vpow.pop %v4221
    %v4223 = vmul.f32 %v4220, 1.442695
    %v4224 = vpow.pop %v4223
    %v4225 = vadd.f32 %v4222, 1.0
    %v4226 = vadd.f32 %v4224, 1.0
    %v4227 = vrcp.pop %v4225
    %v4228 = vmul.f32 1.0, %v4227
    %v4229 = vrcp.pop %v4226
    %v4230 = vmul.f32 1.0, %v4229
    %v4231 = vxor.u32 %v4212, 2147483648
    %v4232 = vxor.u32 %v4216, 2147483648
    %v4233 = vmul.f32 %v4231, 1.442695
    %v4234 = vpow.pop %v4233
    %v4235 = vmul.f32 %v4232, 1.442695
    %v4236 = vpow.pop %v4235
    %v4237 = vadd.f32 %v4234, 1.0
    %v4238 = vadd.f32 %v4236, 1.0
    %v4239 = vrcp.pop %v4237
    %v4240 = vmul.f32 1.0, %v4239
    %v4241 = vrcp.pop %v4238
    %v4242 = vmul.f32 1.0, %v4241
    %v4243 = vtanh.pop %v4213
    %v4244 = vtanh.pop %v4217
    %v4245 = vxor.u32 %v4214, 2147483648
    %v4246 = vxor.u32 %v4218, 2147483648
    %v4247 = vmul.f32 %v4245, 1.442695
    %v4248 = vpow.pop %v4247
    %v4249 = vmul.f32 %v4246, 1.442695
    %v4250 = vpow.pop %v4249
    %v4251 = vadd.f32 %v4248, 1.0
    %v4252 = vadd.f32 %v4250, 1.0
    %v4253 = vrcp.pop %v4251
    %v4254 = vmul.f32 1.0, %v4253
    %v4255 = vrcp.pop %v4252
    %v4256 = vmul.f32 1.0, %v4255
    %v4257 = vmul.f32 %v4240, %v3909
    %v4258 = vmul.f32 %v4242, %v3910
    %v4259 = vmul.f32 %v4228, %v4243
    %v4260 = vmul.f32 %v4230, %v4244
    %v4261 = vadd.f32 %v4257, %v4259
    %v4262 = vadd.f32 %v4258, %v4260
    %v4263 = vtanh.pop %v4261
    %v4264 = vtanh.pop %v4262
    %v4265 = vmul.f32 %v4254, %v4263
    %v4266 = vmul.f32 %v4256, %v4264
    %4268 = vset.pattern.permute.xlu0 0
    %4269 = vperm.xlu0 %4268, %v1314
    %v4270 = vpop.permute.xlu0 %4269
    %4273 = vset.pattern.permute.xlu0 0
    %4274 = vperm.xlu0 %4273, %v1315
    %v4275 = vpop.permute.xlu0 %4274
    %v4277 = vmul.f32 %v4265, %v4270
    %v4278 = vmul.f32 %v4266, %v4275
    %v4279 = vpack.c.bf16 %v4278, %v4277
    %v4281 = vunpack.c.l.b16 %v4279
    %v4282 = vunpack.c.h.b16 %v4279
    %v4283 = vpack.c.b16 %v4281, %v4281
    %v4284 = vpack.c.b16 %v4282, %v4282
    %4287 = vst [vmem:[#allocation19 + $0x70] sm:$0xf] %v4283
    %4288 = vst [vmem:[#allocation19 + $0x78] sm:$0xf] %v4284
    %v4289 = vld [vmem:[#allocation7 + $0x1c0] sm:$0xff]
    %v4290 = vld [vmem:[#allocation7 + $0x1c8] sm:$0xff]
    %v4291 = vld [vmem:[#allocation7 + $0x1d0] sm:$0xff]
    %v4292 = vld [vmem:[#allocation7 + $0x1d8] sm:$0xff]
    %v4293 = vld [vmem:[#allocation7 + $0x1e0] sm:$0xff]
    %v4294 = vld [vmem:[#allocation7 + $0x1e8] sm:$0xff]
    %v4295 = vld [vmem:[#allocation7 + $0x1f0] sm:$0xff]
    %v4296 = vld [vmem:[#allocation7 + $0x1f8] sm:$0xff]
    %v4297 = vadd.f32 %v4289, %v1292
    %v4298 = vadd.f32 %v4290, %v1293
    %v4299 = vadd.f32 %v4291, %v1294
    %v4300 = vadd.f32 %v4292, %v1295
    %v4301 = vadd.f32 %v4293, %v1296
    %v4302 = vadd.f32 %v4294, %v1297
    %v4303 = vadd.f32 %v4295, %v1298
    %v4304 = vadd.f32 %v4296, %v1299
    %v4305 = vpack.c.bf16 %v4095, %v4094
    %4306 = vmatprep.subr.bf16.mxu0 %v1779
    %4307 = vmatpush1.bf16.msra.mxu0 %v1778
    %4308 = vmatprep.subr.bf16.mxu0 %v1783
    %4309 = vmatpush1.bf16.msra.mxu0 %v1782
    %4310 = vmatprep.subr.bf16.mxu0 %v1787
    %4311 = vmatpush1.bf16.msra.mxu0 %v1786
    %4312 = vmatprep.subr.bf16.mxu0 %v1791
    %4313 = vmatpush1.bf16.msra.mxu0 %v1790
    %4314 = vmatprep.subr.bf16.mxu0 %v1795
    %4315 = vmatpush1.bf16.msra.mxu0 %v1794
    %4316 = vmatprep.subr.bf16.mxu0 %v1799
    %4317 = vmatpush1.bf16.msra.mxu0 %v1798
    %4318 = vmatprep.subr.bf16.mxu0 %v1803
    %4319 = vmatpush1.bf16.msra.mxu0 %v1802
    %4320 = vmatprep.subr.bf16.mxu0 %v1807
    %4321 = vmatpush1.bf16.msra.mxu0 %v1806
    %4322 = vmatprep.subr.bf16.mxu0 0
    %4323 = vmatpush1.bf16.msra.mxu0 0
    %4324 = vmatprep.subr.bf16.mxu0 0
    %4325 = vmatpush1.bf16.msra.mxu0 0
    %4326 = vmatprep.subr.bf16.mxu0 0
    %4327 = vmatpush1.bf16.msra.mxu0 0
    %4328 = vmatprep.subr.bf16.mxu0 0
    %4329 = vmatpush1.bf16.msra.mxu0 0
    %4330 = vmatprep.subr.bf16.mxu0 0
    %4331 = vmatpush1.bf16.msra.mxu0 0
    %4332 = vmatprep.subr.bf16.mxu0 0
    %4333 = vmatpush1.bf16.msra.mxu0 0
    %4334 = vmatprep.subr.bf16.mxu0 0
    %4335 = vmatpush1.bf16.msra.mxu0 0
    %4336 = vmatprep.subr.bf16.mxu0 0
    %4337 = vmatpush1.bf16.msra.mxu0 0
    %4338 = vmatprep.mubr.bf16.mxu0 0
    %4339 = vmatmul.mubr.bf16.gmra.mrb[0].mxu0 %v4305
    %v4340 = vpop.f32.mrb[0].mxu0
    %v4341 = vadd.f32 0.0, %v4340
    %v4342 = vpop.f32.mrb[0].mxu0
    %v4343 = vadd.f32 0.0, %v4342
    %v4344 = vpop.f32.mrb[0].mxu0
    %v4345 = vadd.f32 0.0, %v4344
    %v4346 = vpop.f32.mrb[0].mxu0
    %v4347 = vadd.f32 0.0, %v4346
    %4348 = vdwg.mxu0
    %4349 = vmatprep.subr.bf16.mxu0 %v1781
    %4350 = vmatpush1.bf16.msra.mxu0 %v1780
    %4351 = vmatprep.subr.bf16.mxu0 %v1785
    %4352 = vmatpush1.bf16.msra.mxu0 %v1784
    %4353 = vmatprep.subr.bf16.mxu0 %v1789
    %4354 = vmatpush1.bf16.msra.mxu0 %v1788
    %4355 = vmatprep.subr.bf16.mxu0 %v1793
    %4356 = vmatpush1.bf16.msra.mxu0 %v1792
    %4357 = vmatprep.subr.bf16.mxu0 %v1797
    %4358 = vmatpush1.bf16.msra.mxu0 %v1796
    %4359 = vmatprep.subr.bf16.mxu0 %v1801
    %4360 = vmatpush1.bf16.msra.mxu0 %v1800
    %4361 = vmatprep.subr.bf16.mxu0 %v1805
    %4362 = vmatpush1.bf16.msra.mxu0 %v1804
    %4363 = vmatprep.subr.bf16.mxu0 %v1809
    %4364 = vmatpush1.bf16.msra.mxu0 %v1808
    %4365 = vmatprep.subr.bf16.mxu0 0
    %4366 = vmatpush1.bf16.msra.mxu0 0
    %4367 = vmatprep.subr.bf16.mxu0 0
    %4368 = vmatpush1.bf16.msra.mxu0 0
    %4369 = vmatprep.subr.bf16.mxu0 0
    %4370 = vmatpush1.bf16.msra.mxu0 0
    %4371 = vmatprep.subr.bf16.mxu0 0
    %4372 = vmatpush1.bf16.msra.mxu0 0
    %4373 = vmatprep.subr.bf16.mxu0 0
    %4374 = vmatpush1.bf16.msra.mxu0 0
    %4375 = vmatprep.subr.bf16.mxu0 0
    %4376 = vmatpush1.bf16.msra.mxu0 0
    %4377 = vmatprep.subr.bf16.mxu0 0
    %4378 = vmatpush1.bf16.msra.mxu0 0
    %4379 = vmatprep.subr.bf16.mxu0 0
    %4380 = vmatpush1.bf16.msra.mxu0 0
    %4381 = vmatprep.mubr.bf16.mxu0 0
    %4382 = vmatmul.mubr.bf16.gmra.mrb[0].mxu0 %v4305
    %v4383 = vpop.f32.mrb[0].mxu0
    %v4384 = vadd.f32 0.0, %v4383
    %v4385 = vpop.f32.mrb[0].mxu0
    %v4386 = vadd.f32 0.0, %v4385
    %v4387 = vpop.f32.mrb[0].mxu0
    %v4388 = vadd.f32 0.0, %v4387
    %v4389 = vpop.f32.mrb[0].mxu0
    %v4390 = vadd.f32 0.0, %v4389
    %4391 = vdwg.mxu0
    %v4392 = vadd.f32 %v4297, %v4341
    %v4393 = vadd.f32 %v4298, %v4343
    %v4394 = vadd.f32 %v4299, %v4384
    %v4395 = vadd.f32 %v4300, %v4386
    %v4396 = vadd.f32 %v4301, %v4345
    %v4397 = vadd.f32 %v4302, %v4347
    %v4398 = vadd.f32 %v4303, %v4388
    %v4399 = vadd.f32 %v4304, %v4390
    %v4400 = vxor.u32 %v4392, 2147483648
    %v4401 = vxor.u32 %v4396, 2147483648
    %v4402 = vmul.f32 %v4400, 1.442695
    %v4403 = vpow.pop %v4402
    %v4404 = vmul.f32 %v4401, 1.442695
    %v4405 = vpow.pop %v4404
    %v4406 = vadd.f32 %v4403, 1.0
    %v4407 = vadd.f32 %v4405, 1.0
    %v4408 = vrcp.pop %v4406
    %v4409 = vmul.f32 1.0, %v4408
    %v4410 = vrcp.pop %v4407
    %v4411 = vmul.f32 1.0, %v4410
    %v4412 = vxor.u32 %v4393, 2147483648
    %v4413 = vxor.u32 %v4397, 2147483648
    %v4414 = vmul.f32 %v4412, 1.442695
    %v4415 = vpow.pop %v4414
    %v4416 = vmul.f32 %v4413, 1.442695
    %v4417 = vpow.pop %v4416
    %v4418 = vadd.f32 %v4415, 1.0
    %v4419 = vadd.f32 %v4417, 1.0
    %v4420 = vrcp.pop %v4418
    %v4421 = vmul.f32 1.0, %v4420
    %v4422 = vrcp.pop %v4419
    %v4423 = vmul.f32 1.0, %v4422
    %v4424 = vtanh.pop %v4394
    %v4425 = vtanh.pop %v4398
    %v4426 = vxor.u32 %v4395, 2147483648
    %v4427 = vxor.u32 %v4399, 2147483648
    %v4428 = vmul.f32 %v4426, 1.442695
    %v4429 = vpow.pop %v4428
    %v4430 = vmul.f32 %v4427, 1.442695
    %v4431 = vpow.pop %v4430
    %v4432 = vadd.f32 %v4429, 1.0
    %v4433 = vadd.f32 %v4431, 1.0
    %v4434 = vrcp.pop %v4432
    %v4435 = vmul.f32 1.0, %v4434
    %v4436 = vrcp.pop %v4433
    %v4437 = vmul.f32 1.0, %v4436
    %v4438 = vmul.f32 %v4421, %v4090
    %v4439 = vmul.f32 %v4423, %v4091
    %v4440 = vmul.f32 %v4409, %v4424
    %v4441 = vmul.f32 %v4411, %v4425
    %v4442 = vadd.f32 %v4438, %v4440
    %v4443 = vadd.f32 %v4439, %v4441
    %v4444 = vtanh.pop %v4442
    %v4445 = vtanh.pop %v4443
    %v4446 = vmul.f32 %v4435, %v4444
    %v4447 = vmul.f32 %v4437, %v4445
    %v4448 = vmul.f32 %v4446, %v4270
    %v4449 = vmul.f32 %v4447, %v4275
    %v4450 = vpack.c.bf16 %v4449, %v4448
    %v4452 = vunpack.c.l.b16 %v4450
    %v4453 = vunpack.c.h.b16 %v4450
    %v4454 = vpack.c.b16 %v4452, %v4452
    %v4455 = vpack.c.b16 %v4453, %v4453
    %4458 = vst [vmem:[#allocation19 + $0x74] sm:$0xf] %v4454
    %4459 = vst [vmem:[#allocation19 + $0x7c] sm:$0xf] %v4455
    %4460 = vst [vmem:[#allocation2] sm:$0xff] %v4265
    %4461 = vst [vmem:[#allocation2 + $0x8] sm:$0xff] %v4266
    %4462 = vst [vmem:[#allocation4] sm:$0xff] %v4261
    %4463 = vst [vmem:[#allocation4 + $0x8] sm:$0xff] %v4262
    %4464 = vst [vmem:[#allocation3] sm:$0xff] %v4446
    %4465 = vst [vmem:[#allocation3 + $0x8] sm:$0xff] %v4447
    %4466 = vst [vmem:[#allocation5] sm:$0xff] %v4442
    %4467 = vst [vmem:[#allocation5 + $0x8] sm:$0xff] %v4443
    // Predicated region
    $region66: #{tpu_custom_call.1} parent=1 // pred_check
      _
    $region67: #{tpu_custom_call.1} parent=1 // pred_check_branch
      %4469 = sbr.rel (0) target = $region69
    $region68: #{tpu_custom_call.1} parent=1 // pred_region
      %s4471 = ssub.s32 2048, 2048
      %4472 = vsyncadd [#allocation10], %s4471
      %s4473 = sshll.u32 [#allocation19], 4
      %s4474 = int_to_ptr.vmem [resolvable:$true] %s4473
      %4479 = dma.vmem_to_hbm [thread:$0]  %s4474, 2048, %s9, [#allocation10], 128, 128, 8
    $region69: #{tpu_custom_call.1} parent=1 // pred_fallthru
      _
    // Predicated region
    $region70: #{tpu_custom_call.1} parent=1 // pred_check
      _
    $region71: #{tpu_custom_call.1} parent=1 // pred_check_branch
      %4481 = sbr.rel (0) target = $region73
    $region72: #{tpu_custom_call.1} parent=1 // pred_region
      %4482 = dma.done [#allocation10], 2048
    $region73: #{tpu_custom_call.1} parent=1 // pred_fallthru
      _
    %4483 = vsyncpa [#allocation9], 1
    %4484 = vsyncpa [#allocation12], 1
    %4485 = vsyncpa [#allocation15], 1
    %4486 = vsyncpa [#allocation18], 1
    %4487 = vsyncpa [#allocation10], 1

</llo_original>
